<compile_context>
chip_gen: v5e
topology: v5e:2x2
jax: 0.10.0
libtpu: 0.0.40
codegen_flags: <defaults>
</compile_context>

<pallas_src>
import functools

import jax
import jax.numpy as jnp
from jax import lax
from jax.experimental import pallas as pl
from jax.experimental.pallas import tpu as pltpu


def _basic_block_kernel(x_ref, w1_ref, b1_ref, w2_ref, b2_ref, o_ref,
                        xp_ref, mid_ref, *, th, H, W, Cin, Cmid, Cout):
    """One (image, row-tile) per grid step.  x_ref: (H, W, Cin) f32 (full image),
    w*_ref: (9, Cin, Cout) bf16 (BN scale folded), b*_ref: (1, Cout) f32,
    o_ref: (th, W*Cout) f32, xp_ref/mid_ref: VMEM bf16 scratch slabs."""
    i = pl.program_id(1)
    r0 = pl.multiple_of(i * th, th)          # first output row of this tile
    R1 = th + 2                              # conv1 rows needed by conv2 (incl. halo)

    # ---- stage x rows [r0-2, r0+th+2) into a zero-padded bf16 slab ----------
    # xp row j holds image row (r0 - 2 + j); zero outside the image / width pad.
    xp_ref[...] = jnp.zeros(xp_ref.shape, xp_ref.dtype)
    for j in range(th + 4):
        off = j - 2
        if 0 <= off < th:                    # always inside the image
            row = x_ref[pl.ds(r0 + off, 1)]                    # (1, W, Cin) f32
        else:                                # halo row: may fall outside -> zero
            src = r0 + off
            valid = jnp.logical_and(src >= 0, src < H)
            src_c = jnp.clip(src, 0, H - 1)
            row = jnp.where(valid, x_ref[pl.ds(src_c, 1)], 0.0)
        xp_ref[j:j + 1, 1:W + 1, :] = row.astype(xp_ref.dtype)

    # ---- conv1 + folded BN1 + ReLU for image rows [r0-1, r0+th+1) -----------
    xp = xp_ref[...]                                            # (th+4, W+2, Cin) bf16
    acc1 = jnp.zeros((R1 * W, Cmid), jnp.float32)
    for ky in range(3):
        for kx in range(3):
            slab = xp[ky:ky + R1, kx:kx + W, :].reshape(R1 * W, Cin)
            acc1 = acc1 + jnp.dot(slab, w1_ref[ky * 3 + kx],
                                  preferred_element_type=jnp.float32)
    mid = jnp.maximum(acc1 + b1_ref[...], 0.0).reshape(R1, W, Cmid)

    # mid rows that fall outside the image are conv2's *zero padding*, not conv1
    # outputs (the bias would otherwise make them nonzero) -> mask them.
    m_ids = lax.broadcasted_iota(jnp.int32, (R1, W, Cmid), 0) + (r0 - 1)
    mid = jnp.where(jnp.logical_and(m_ids >= 0, m_ids < H), mid, 0.0)

    mid_ref[...] = jnp.zeros(mid_ref.shape, mid_ref.dtype)      # zero width padding
    mid_ref[:, 1:W + 1, :] = mid.astype(mid_ref.dtype)

    # ---- conv2 + folded BN2 + residual for image rows [r0, r0+th) -----------
    midp = mid_ref[...]                                         # (th+2, W+2, Cmid) bf16
    acc2 = jnp.zeros((th * W, Cout), jnp.float32)
    for ky in range(3):
        for kx in range(3):
            slab = midp[ky:ky + th, kx:kx + W, :].reshape(th * W, Cmid)
            acc2 = acc2 + jnp.dot(slab, w2_ref[ky * 3 + kx],
                                  preferred_element_type=jnp.float32)
    out = (acc2 + b2_ref[...]).reshape(th, W, Cout)
    out = out + x_ref[pl.ds(r0, th)]                            # residual add (f32)
    o_ref[...] = out.reshape(th, W * Cout).astype(o_ref.dtype)  # lane-dense store


def fold_bn(gamma, beta, mean, var, eps=1e-5):
    scale = gamma / jnp.sqrt(var + eps)
    bias = beta - mean * scale
    return scale, bias


def basic_block_forward(x_nchw, params):
    """Pallas implementation of BasicBlock.forward (stride=1, downsample=None)."""
    x = jnp.transpose(x_nchw, (0, 2, 3, 1)).astype(jnp.float32)   # NCHW -> NHWC (once)
    N, H, W, Cin = x.shape
    w1, w2 = params["w1"], params["w2"]
    Cmid, Cout = w1.shape[-1], w2.shape[-1]
    assert Cin == Cout, "downsample=None requires inplanes == planes"

    s1, b1 = fold_bn(*params["bn1"])
    s2, b2 = fold_bn(*params["bn2"])
    # Fold BN scale into the conv weights (bf16 for the MXU); bias stays f32.
    w1f = (w1.astype(jnp.float32) * s1).reshape(9, Cin, Cmid).astype(jnp.bfloat16)
    w2f = (w2.astype(jnp.float32) * s2).reshape(9, Cmid, Cout).astype(jnp.bfloat16)
    b1r = b1.reshape(1, Cmid).astype(jnp.float32)
    b2r = b2.reshape(1, Cout).astype(jnp.float32)

    th = 8 if H % 8 == 0 else H                 # row tile (multiple of 8 when possible)
    nH = H // th

    kernel = functools.partial(_basic_block_kernel, th=th, H=H, W=W,
                               Cin=Cin, Cmid=Cmid, Cout=Cout)

    out = pl.pallas_call(
        kernel,
        out_shape=jax.ShapeDtypeStruct((N, H, W * Cout), jnp.float32),
        grid_spec=pltpu.PrefetchScalarGridSpec(
            num_scalar_prefetch=0,
            grid=(N, nH),
            in_specs=[
                # full image per batch; revisited across the row-tile axis (no re-DMA)
                pl.BlockSpec((None, H, W, Cin), lambda n, i: (n, 0, 0, 0)),
                pl.BlockSpec((9, Cin, Cmid), lambda n, i: (0, 0, 0)),
                pl.BlockSpec((1, Cmid), lambda n, i: (0, 0)),
                pl.BlockSpec((9, Cmid, Cout), lambda n, i: (0, 0, 0)),
                pl.BlockSpec((1, Cout), lambda n, i: (0, 0)),
            ],
            out_specs=pl.BlockSpec((None, th, W * Cout), lambda n, i: (n, i, 0)),
            scratch_shapes=[
                pltpu.VMEM((th + 4, W + 2, Cin), jnp.bfloat16),    # padded x slab
                pltpu.VMEM((th + 2, W + 2, Cmid), jnp.bfloat16),   # padded conv1 out
            ],
        ),
        compiler_params=pltpu.CompilerParams(
            dimension_semantics=("parallel", "parallel"),
            vmem_limit_bytes=32 * 1024 * 1024,
        ),
    )(x, w1f, b1r, w2f, b2r)

    out = out.reshape(N, H, W, Cout)            # pure metadata reshape
    return jnp.transpose(out, (0, 3, 1, 2))     # NHWC -> NCHW


def basic_block_reference(x_nchw, params):
    """Pure-JAX reference computing the same bf16-input / f32-accumulate math."""
    x = jnp.transpose(x_nchw, (0, 2, 3, 1)).astype(jnp.float32)
    s1, b1 = fold_bn(*params["bn1"])
    s2, b2 = fold_bn(*params["bn2"])
    w1f = (params["w1"].astype(jnp.float32) * s1).astype(jnp.bfloat16)
    w2f = (params["w2"].astype(jnp.float32) * s2).astype(jnp.bfloat16)
    dn = ("NHWC", "HWIO", "NHWC")

    y = lax.conv_general_dilated(x.astype(jnp.bfloat16), w1f, (1, 1),
                                 [(1, 1), (1, 1)], dimension_numbers=dn,
                                 preferred_element_type=jnp.float32)
    mid = jax.nn.relu(y + b1)
    z = lax.conv_general_dilated(mid.astype(jnp.bfloat16), w2f, (1, 1),
                                 [(1, 1), (1, 1)], dimension_numbers=dn,
                                 preferred_element_type=jnp.float32)
    out = z + b2 + x
    return jnp.transpose(out, (0, 3, 1, 2))


if __name__ == "__main__":
    # Small shapes implied by the module: inplanes = planes = 4 (downsample=None).
    N, C, H, W = 2, 4, 16, 16
    key = jax.random.PRNGKey(0)
    ks = jax.random.split(key, 8)

    x = jax.random.normal(ks[0], (N, C, H, W), jnp.float32)

    def bn_params(k):
        k1, k2, k3, k4 = jax.random.split(k, 4)
        gamma = 1.0 + 0.1 * jax.random.normal(k1, (C,), jnp.float32)
        beta = 0.1 * jax.random.normal(k2, (C,), jnp.float32)
        mean = 0.1 * jax.random.normal(k3, (C,), jnp.float32)
        var = jnp.abs(jax.random.normal(k4, (C,), jnp.float32)) + 0.5
        return (gamma, beta, mean, var)

    params = {
        "w1": 0.1 * jax.random.normal(ks[1], (3, 3, C, C), jnp.float32),  # conv1 (HWIO)
        "w2": 0.1 * jax.random.normal(ks[2], (3, 3, C, C), jnp.float32),  # conv2 (HWIO)
        "bn1": bn_params(ks[3]),
        "bn2": bn_params(ks[4]),
    }

    out = jax.block_until_ready(basic_block_forward(x, params))
    ref = jax.block_until_ready(basic_block_reference(x, params))

    assert out.shape == (N, C, H, W)
    assert out.dtype == jnp.float32
    # Both sides use bf16 conv inputs with f32 accumulation; tolerance only covers
    # accumulation-order and bf16 tie-rounding differences.
    assert jnp.allclose(out, ref, atol=5e-3, rtol=5e-3), (
        "Pallas output mismatch vs reference, max abs diff = "
        f"{jnp.max(jnp.abs(out - ref))}")
    print("KERNEL_OK")
</pallas_src>

<mosaic_0001>
module attributes {stable_mosaic.version = 11 : i64} {
  func.func @_basic_block_kernel(%arg0: i32, %arg1: i32, %arg2: memref<1x16x16x4xf32, #tpu.memory_space<vmem>>, %arg3: memref<9x4x4xbf16, #tpu.memory_space<vmem>>, %arg4: memref<1x4xf32, #tpu.memory_space<vmem>>, %arg5: memref<9x4x4xbf16, #tpu.memory_space<vmem>>, %arg6: memref<1x4xf32, #tpu.memory_space<vmem>>, %arg7: memref<1x8x64xf32, #tpu.memory_space<vmem>>, %arg8: memref<12x18x4xbf16, #tpu.memory_space<vmem>>, %arg9: memref<10x18x4xbf16, #tpu.memory_space<vmem>>) attributes {dimension_semantics = [#tpu.dimension_semantics<parallel>, #tpu.dimension_semantics<parallel>], iteration_bounds = array<i64: 2, 2>, scalar_prefetch = 0 : i64, scratch_operands = 2 : i64, tpu.core_type = #tpu.core_type<tc>, window_params = [{transform_indices = @transform_0, window_bounds = array<i64: 1, 16, 16, 4>}, {pipeline_mode = #tpu.pipeline_mode<synchronous>, transform_indices = @transform_1, window_bounds = array<i64: 9, 4, 4>}, {pipeline_mode = #tpu.pipeline_mode<synchronous>, transform_indices = @transform_2, window_bounds = array<i64: 1, 4>}, {pipeline_mode = #tpu.pipeline_mode<synchronous>, transform_indices = @transform_3, window_bounds = array<i64: 9, 4, 4>}, {pipeline_mode = #tpu.pipeline_mode<synchronous>, transform_indices = @transform_4, window_bounds = array<i64: 1, 4>}, {transform_indices = @transform_5, window_bounds = array<i64: 1, 8, 64>}]} {
    %c8_i32 = arith.constant 8 : i32
    %0 = arith.muli %arg1, %c8_i32 : i32
    %1 = tpu.assume_multiple %0, 8 : i32
    %cst = arith.constant 0.000000e+00 : bf16
    %2 = vector.broadcast %cst : bf16 to vector<12x18x4xbf16>
    %c0 = arith.constant 0 : index
    %c0_0 = arith.constant 0 : index
    %c0_1 = arith.constant 0 : index
    %3 = vector.load %arg8[%c0, %c0_0, %c0_1] : memref<12x18x4xbf16, #tpu.memory_space<vmem>>, vector<12x18x4xbf16>
    tpu.vector_store %arg8[%c0, %c0_0, %c0_1], %2 {strides = array<i32>} : memref<12x18x4xbf16, #tpu.memory_space<vmem>>, vector<12x18x4xbf16>,
    %c-2_i32 = arith.constant -2 : i32
    %4 = arith.addi %1, %c-2_i32 : i32
    %c0_i32 = arith.constant 0 : i32
    %5 = arith.cmpi sge, %4, %c0_i32 : i32
    %c16_i32 = arith.constant 16 : i32
    %6 = arith.cmpi slt, %4, %c16_i32 : i32
    %7 = arith.andi %5, %6 : i1
    %c0_i32_2 = arith.constant 0 : i32
    %c15_i32 = arith.constant 15 : i32
    %8 = arith.maxsi %c0_i32_2, %4 : i32
    %9 = arith.minsi %c15_i32, %8 : i32
    %c0_3 = arith.constant 0 : index
    %10 = arith.index_cast %9 : i32 to index
    %c0_4 = arith.constant 0 : index
    %c0_5 = arith.constant 0 : index
    %11 = vector.load %arg2[%c0_3, %10, %c0_4, %c0_5] : memref<1x16x16x4xf32, #tpu.memory_space<vmem>>, vector<1x1x16x4xf32>
    %12 = vector.shape_cast %11 : vector<1x1x16x4xf32> to vector<1x16x4xf32>
    %cst_6 = arith.constant 0.000000e+00 : f32
    %13 = vector.broadcast %cst_6 : f32 to vector<1x16x4xf32>
    %14 = arith.select %7, %12, %13 : vector<1x16x4xf32>
    %15 = arith.truncf %14 : vector<1x16x4xf32> to vector<1x16x4xbf16>
    %c0_7 = arith.constant 0 : index
    %c1 = arith.constant 1 : index
    %c0_8 = arith.constant 0 : index
    %16 = vector.load %arg8[%c0_7, %c1, %c0_8] : memref<12x18x4xbf16, #tpu.memory_space<vmem>>, vector<1x16x4xbf16>
    tpu.vector_store %arg8[%c0_7, %c1, %c0_8], %15 {strides = array<i32>} : memref<12x18x4xbf16, #tpu.memory_space<vmem>>, vector<1x16x4xbf16>,
    %c-1_i32 = arith.constant -1 : i32
    %17 = arith.addi %1, %c-1_i32 : i32
    %c0_i32_9 = arith.constant 0 : i32
    %18 = arith.cmpi sge, %17, %c0_i32_9 : i32
    %c16_i32_10 = arith.constant 16 : i32
    %19 = arith.cmpi slt, %17, %c16_i32_10 : i32
    %20 = arith.andi %18, %19 : i1
    %c0_i32_11 = arith.constant 0 : i32
    %c15_i32_12 = arith.constant 15 : i32
    %21 = arith.maxsi %c0_i32_11, %17 : i32
    %22 = arith.minsi %c15_i32_12, %21 : i32
    %c0_13 = arith.constant 0 : index
    %23 = arith.index_cast %22 : i32 to index
    %c0_14 = arith.constant 0 : index
    %c0_15 = arith.constant 0 : index
    %24 = vector.load %arg2[%c0_13, %23, %c0_14, %c0_15] : memref<1x16x16x4xf32, #tpu.memory_space<vmem>>, vector<1x1x16x4xf32>
    %25 = vector.shape_cast %24 : vector<1x1x16x4xf32> to vector<1x16x4xf32>
    %cst_16 = arith.constant 0.000000e+00 : f32
    %26 = vector.broadcast %cst_16 : f32 to vector<1x16x4xf32>
    %27 = arith.select %20, %25, %26 : vector<1x16x4xf32>
    %28 = arith.truncf %27 : vector<1x16x4xf32> to vector<1x16x4xbf16>
    %c1_17 = arith.constant 1 : index
    %c1_18 = arith.constant 1 : index
    %c0_19 = arith.constant 0 : index
    %29 = vector.load %arg8[%c1_17, %c1_18, %c0_19] : memref<12x18x4xbf16, #tpu.memory_space<vmem>>, vector<1x16x4xbf16>
    tpu.vector_store %arg8[%c1_17, %c1_18, %c0_19], %28 {strides = array<i32>} : memref<12x18x4xbf16, #tpu.memory_space<vmem>>, vector<1x16x4xbf16>,
    %c0_i32_20 = arith.constant 0 : i32
    %30 = arith.addi %1, %c0_i32_20 : i32
    %c0_21 = arith.constant 0 : index
    %31 = arith.index_cast %30 : i32 to index
    %c0_22 = arith.constant 0 : index
    %c0_23 = arith.constant 0 : index
    %32 = vector.load %arg2[%c0_21, %31, %c0_22, %c0_23] : memref<1x16x16x4xf32, #tpu.memory_space<vmem>>, vector<1x1x16x4xf32>
    %33 = vector.shape_cast %32 : vector<1x1x16x4xf32> to vector<1x16x4xf32>
    %34 = arith.truncf %33 : vector<1x16x4xf32> to vector<1x16x4xbf16>
    %c2 = arith.constant 2 : index
    %c1_24 = arith.constant 1 : index
    %c0_25 = arith.constant 0 : index
    %35 = vector.load %arg8[%c2, %c1_24, %c0_25] : memref<12x18x4xbf16, #tpu.memory_space<vmem>>, vector<1x16x4xbf16>
    tpu.vector_store %arg8[%c2, %c1_24, %c0_25], %34 {strides = array<i32>} : memref<12x18x4xbf16, #tpu.memory_space<vmem>>, vector<1x16x4xbf16>,
    %c1_i32 = arith.constant 1 : i32
    %36 = arith.addi %1, %c1_i32 : i32
    %c0_26 = arith.constant 0 : index
    %37 = arith.index_cast %36 : i32 to index
    %c0_27 = arith.constant 0 : index
    %c0_28 = arith.constant 0 : index
    %38 = vector.load %arg2[%c0_26, %37, %c0_27, %c0_28] : memref<1x16x16x4xf32, #tpu.memory_space<vmem>>, vector<1x1x16x4xf32>
    %39 = vector.shape_cast %38 : vector<1x1x16x4xf32> to vector<1x16x4xf32>
    %40 = arith.truncf %39 : vector<1x16x4xf32> to vector<1x16x4xbf16>
    %c3 = arith.constant 3 : index
    %c1_29 = arith.constant 1 : index
    %c0_30 = arith.constant 0 : index
    %41 = vector.load %arg8[%c3, %c1_29, %c0_30] : memref<12x18x4xbf16, #tpu.memory_space<vmem>>, vector<1x16x4xbf16>
    tpu.vector_store %arg8[%c3, %c1_29, %c0_30], %40 {strides = array<i32>} : memref<12x18x4xbf16, #tpu.memory_space<vmem>>, vector<1x16x4xbf16>,
    %c2_i32 = arith.constant 2 : i32
    %42 = arith.addi %1, %c2_i32 : i32
    %c0_31 = arith.constant 0 : index
    %43 = arith.index_cast %42 : i32 to index
    %c0_32 = arith.constant 0 : index
    %c0_33 = arith.constant 0 : index
    %44 = vector.load %arg2[%c0_31, %43, %c0_32, %c0_33] : memref<1x16x16x4xf32, #tpu.memory_space<vmem>>, vector<1x1x16x4xf32>
    %45 = vector.shape_cast %44 : vector<1x1x16x4xf32> to vector<1x16x4xf32>
    %46 = arith.truncf %45 : vector<1x16x4xf32> to vector<1x16x4xbf16>
    %c4 = arith.constant 4 : index
    %c1_34 = arith.constant 1 : index
    %c0_35 = arith.constant 0 : index
    %47 = vector.load %arg8[%c4, %c1_34, %c0_35] : memref<12x18x4xbf16, #tpu.memory_space<vmem>>, vector<1x16x4xbf16>
    tpu.vector_store %arg8[%c4, %c1_34, %c0_35], %46 {strides = array<i32>} : memref<12x18x4xbf16, #tpu.memory_space<vmem>>, vector<1x16x4xbf16>,
    %c3_i32 = arith.constant 3 : i32
    %48 = arith.addi %1, %c3_i32 : i32
    %c0_36 = arith.constant 0 : index
    %49 = arith.index_cast %48 : i32 to index
    %c0_37 = arith.constant 0 : index
    %c0_38 = arith.constant 0 : index
    %50 = vector.load %arg2[%c0_36, %49, %c0_37, %c0_38] : memref<1x16x16x4xf32, #tpu.memory_space<vmem>>, vector<1x1x16x4xf32>
    %51 = vector.shape_cast %50 : vector<1x1x16x4xf32> to vector<1x16x4xf32>
    %52 = arith.truncf %51 : vector<1x16x4xf32> to vector<1x16x4xbf16>
    %c5 = arith.constant 5 : index
    %c1_39 = arith.constant 1 : index
    %c0_40 = arith.constant 0 : index
    %53 = vector.load %arg8[%c5, %c1_39, %c0_40] : memref<12x18x4xbf16, #tpu.memory_space<vmem>>, vector<1x16x4xbf16>
    tpu.vector_store %arg8[%c5, %c1_39, %c0_40], %52 {strides = array<i32>} : memref<12x18x4xbf16, #tpu.memory_space<vmem>>, vector<1x16x4xbf16>,
    %c4_i32 = arith.constant 4 : i32
    %54 = arith.addi %1, %c4_i32 : i32
    %c0_41 = arith.constant 0 : index
    %55 = arith.index_cast %54 : i32 to index
    %c0_42 = arith.constant 0 : index
    %c0_43 = arith.constant 0 : index
    %56 = vector.load %arg2[%c0_41, %55, %c0_42, %c0_43] : memref<1x16x16x4xf32, #tpu.memory_space<vmem>>, vector<1x1x16x4xf32>
    %57 = vector.shape_cast %56 : vector<1x1x16x4xf32> to vector<1x16x4xf32>
    %58 = arith.truncf %57 : vector<1x16x4xf32> to vector<1x16x4xbf16>
    %c6 = arith.constant 6 : index
    %c1_44 = arith.constant 1 : index
    %c0_45 = arith.constant 0 : index
    %59 = vector.load %arg8[%c6, %c1_44, %c0_45] : memref<12x18x4xbf16, #tpu.memory_space<vmem>>, vector<1x16x4xbf16>
    tpu.vector_store %arg8[%c6, %c1_44, %c0_45], %58 {strides = array<i32>} : memref<12x18x4xbf16, #tpu.memory_space<vmem>>, vector<1x16x4xbf16>,
    %c5_i32 = arith.constant 5 : i32
    %60 = arith.addi %1, %c5_i32 : i32
    %c0_46 = arith.constant 0 : index
    %61 = arith.index_cast %60 : i32 to index
    %c0_47 = arith.constant 0 : index
    %c0_48 = arith.constant 0 : index
    %62 = vector.load %arg2[%c0_46, %61, %c0_47, %c0_48] : memref<1x16x16x4xf32, #tpu.memory_space<vmem>>, vector<1x1x16x4xf32>
    %63 = vector.shape_cast %62 : vector<1x1x16x4xf32> to vector<1x16x4xf32>
    %64 = arith.truncf %63 : vector<1x16x4xf32> to vector<1x16x4xbf16>
    %c7 = arith.constant 7 : index
    %c1_49 = arith.constant 1 : index
    %c0_50 = arith.constant 0 : index
    %65 = vector.load %arg8[%c7, %c1_49, %c0_50] : memref<12x18x4xbf16, #tpu.memory_space<vmem>>, vector<1x16x4xbf16>
    tpu.vector_store %arg8[%c7, %c1_49, %c0_50], %64 {strides = array<i32>} : memref<12x18x4xbf16, #tpu.memory_space<vmem>>, vector<1x16x4xbf16>,
    %c6_i32 = arith.constant 6 : i32
    %66 = arith.addi %1, %c6_i32 : i32
    %c0_51 = arith.constant 0 : index
    %67 = arith.index_cast %66 : i32 to index
    %c0_52 = arith.constant 0 : index
    %c0_53 = arith.constant 0 : index
    %68 = vector.load %arg2[%c0_51, %67, %c0_52, %c0_53] : memref<1x16x16x4xf32, #tpu.memory_space<vmem>>, vector<1x1x16x4xf32>
    %69 = vector.shape_cast %68 : vector<1x1x16x4xf32> to vector<1x16x4xf32>
    %70 = arith.truncf %69 : vector<1x16x4xf32> to vector<1x16x4xbf16>
    %c8 = arith.constant 8 : index
    %c1_54 = arith.constant 1 : index
    %c0_55 = arith.constant 0 : index
    %71 = vector.load %arg8[%c8, %c1_54, %c0_55] : memref<12x18x4xbf16, #tpu.memory_space<vmem>>, vector<1x16x4xbf16>
    tpu.vector_store %arg8[%c8, %c1_54, %c0_55], %70 {strides = array<i32>} : memref<12x18x4xbf16, #tpu.memory_space<vmem>>, vector<1x16x4xbf16>,
    %c7_i32 = arith.constant 7 : i32
    %72 = arith.addi %1, %c7_i32 : i32
    %c0_56 = arith.constant 0 : index
    %73 = arith.index_cast %72 : i32 to index
    %c0_57 = arith.constant 0 : index
    %c0_58 = arith.constant 0 : index
    %74 = vector.load %arg2[%c0_56, %73, %c0_57, %c0_58] : memref<1x16x16x4xf32, #tpu.memory_space<vmem>>, vector<1x1x16x4xf32>
    %75 = vector.shape_cast %74 : vector<1x1x16x4xf32> to vector<1x16x4xf32>
    %76 = arith.truncf %75 : vector<1x16x4xf32> to vector<1x16x4xbf16>
    %c9 = arith.constant 9 : index
    %c1_59 = arith.constant 1 : index
    %c0_60 = arith.constant 0 : index
    %77 = vector.load %arg8[%c9, %c1_59, %c0_60] : memref<12x18x4xbf16, #tpu.memory_space<vmem>>, vector<1x16x4xbf16>
    tpu.vector_store %arg8[%c9, %c1_59, %c0_60], %76 {strides = array<i32>} : memref<12x18x4xbf16, #tpu.memory_space<vmem>>, vector<1x16x4xbf16>,
    %c8_i32_61 = arith.constant 8 : i32
    %78 = arith.addi %1, %c8_i32_61 : i32
    %c0_i32_62 = arith.constant 0 : i32
    %79 = arith.cmpi sge, %78, %c0_i32_62 : i32
    %c16_i32_63 = arith.constant 16 : i32
    %80 = arith.cmpi slt, %78, %c16_i32_63 : i32
    %81 = arith.andi %79, %80 : i1
    %c0_i32_64 = arith.constant 0 : i32
    %c15_i32_65 = arith.constant 15 : i32
    %82 = arith.maxsi %c0_i32_64, %78 : i32
    %83 = arith.minsi %c15_i32_65, %82 : i32
    %c0_66 = arith.constant 0 : index
    %84 = arith.index_cast %83 : i32 to index
    %c0_67 = arith.constant 0 : index
    %c0_68 = arith.constant 0 : index
    %85 = vector.load %arg2[%c0_66, %84, %c0_67, %c0_68] : memref<1x16x16x4xf32, #tpu.memory_space<vmem>>, vector<1x1x16x4xf32>
    %86 = vector.shape_cast %85 : vector<1x1x16x4xf32> to vector<1x16x4xf32>
    %cst_69 = arith.constant 0.000000e+00 : f32
    %87 = vector.broadcast %cst_69 : f32 to vector<1x16x4xf32>
    %88 = arith.select %81, %86, %87 : vector<1x16x4xf32>
    %89 = arith.truncf %88 : vector<1x16x4xf32> to vector<1x16x4xbf16>
    %c10 = arith.constant 10 : index
    %c1_70 = arith.constant 1 : index
    %c0_71 = arith.constant 0 : index
    %90 = vector.load %arg8[%c10, %c1_70, %c0_71] : memref<12x18x4xbf16, #tpu.memory_space<vmem>>, vector<1x16x4xbf16>
    tpu.vector_store %arg8[%c10, %c1_70, %c0_71], %89 {strides = array<i32>} : memref<12x18x4xbf16, #tpu.memory_space<vmem>>, vector<1x16x4xbf16>,
    %c9_i32 = arith.constant 9 : i32
    %91 = arith.addi %1, %c9_i32 : i32
    %c0_i32_72 = arith.constant 0 : i32
    %92 = arith.cmpi sge, %91, %c0_i32_72 : i32
    %c16_i32_73 = arith.constant 16 : i32
    %93 = arith.cmpi slt, %91, %c16_i32_73 : i32
    %94 = arith.andi %92, %93 : i1
    %c0_i32_74 = arith.constant 0 : i32
    %c15_i32_75 = arith.constant 15 : i32
    %95 = arith.maxsi %c0_i32_74, %91 : i32
    %96 = arith.minsi %c15_i32_75, %95 : i32
    %c0_76 = arith.constant 0 : index
    %97 = arith.index_cast %96 : i32 to index
    %c0_77 = arith.constant 0 : index
    %c0_78 = arith.constant 0 : index
    %98 = vector.load %arg2[%c0_76, %97, %c0_77, %c0_78] : memref<1x16x16x4xf32, #tpu.memory_space<vmem>>, vector<1x1x16x4xf32>
    %99 = vector.shape_cast %98 : vector<1x1x16x4xf32> to vector<1x16x4xf32>
    %cst_79 = arith.constant 0.000000e+00 : f32
    %100 = vector.broadcast %cst_79 : f32 to vector<1x16x4xf32>
    %101 = arith.select %94, %99, %100 : vector<1x16x4xf32>
    %102 = arith.truncf %101 : vector<1x16x4xf32> to vector<1x16x4xbf16>
    %c11 = arith.constant 11 : index
    %c1_80 = arith.constant 1 : index
    %c0_81 = arith.constant 0 : index
    %103 = vector.load %arg8[%c11, %c1_80, %c0_81] : memref<12x18x4xbf16, #tpu.memory_space<vmem>>, vector<1x16x4xbf16>
    tpu.vector_store %arg8[%c11, %c1_80, %c0_81], %102 {strides = array<i32>} : memref<12x18x4xbf16, #tpu.memory_space<vmem>>, vector<1x16x4xbf16>,
    %c0_82 = arith.constant 0 : index
    %c0_83 = arith.constant 0 : index
    %c0_84 = arith.constant 0 : index
    %104 = vector.load %arg8[%c0_82, %c0_83, %c0_84] : memref<12x18x4xbf16, #tpu.memory_space<vmem>>, vector<12x18x4xbf16>
    %cst_85 = arith.constant 0.000000e+00 : f32
    %105 = vector.broadcast %cst_85 : f32 to vector<160x4xf32>
    %106 = vector.extract_strided_slice %104 {offsets = [0, 0, 0], sizes = [10, 16, 4], strides = [1, 1, 1]} : vector<12x18x4xbf16> to vector<10x16x4xbf16>
    %107 = vector.shape_cast %106 : vector<10x16x4xbf16> to vector<160x4xbf16>
    %c0_86 = arith.constant 0 : index
    %c0_87 = arith.constant 0 : index
    %c0_88 = arith.constant 0 : index
    %108 = vector.load %arg3[%c0_86, %c0_87, %c0_88] : memref<9x4x4xbf16, #tpu.memory_space<vmem>>, vector<1x4x4xbf16>
    %109 = vector.shape_cast %108 : vector<1x4x4xbf16> to vector<4x4xbf16>
    %cst_89 = arith.constant dense<0.000000e+00> : vector<160x4xf32>
    %110 = tpu.matmul %107, %109, %cst_89 {dimension_numbers = #tpu.dot_dimension_numbers<[1], [0], [0], [1], [0, 0, 1, 1], [], []>} : vector<160x4xbf16>, vector<4x4xbf16>, vector<160x4xf32> -> vector<160x4xf32>
    %111 = arith.addf %105, %110 : vector<160x4xf32>
    %112 = vector.extract_strided_slice %104 {offsets = [0, 1, 0], sizes = [10, 16, 4], strides = [1, 1, 1]} : vector<12x18x4xbf16> to vector<10x16x4xbf16>
    %113 = vector.shape_cast %112 : vector<10x16x4xbf16> to vector<160x4xbf16>
    %c1_90 = arith.constant 1 : index
    %c0_91 = arith.constant 0 : index
    %c0_92 = arith.constant 0 : index
    %114 = vector.load %arg3[%c1_90, %c0_91, %c0_92] : memref<9x4x4xbf16, #tpu.memory_space<vmem>>, vector<1x4x4xbf16>
    %115 = vector.shape_cast %114 : vector<1x4x4xbf16> to vector<4x4xbf16>
    %cst_93 = arith.constant dense<0.000000e+00> : vector<160x4xf32>
    %116 = tpu.matmul %113, %115, %cst_93 {dimension_numbers = #tpu.dot_dimension_numbers<[1], [0], [0], [1], [0, 0, 1, 1], [], []>} : vector<160x4xbf16>, vector<4x4xbf16>, vector<160x4xf32> -> vector<160x4xf32>
    %117 = arith.addf %111, %116 : vector<160x4xf32>
    %118 = vector.extract_strided_slice %104 {offsets = [0, 2, 0], sizes = [10, 16, 4], strides = [1, 1, 1]} : vector<12x18x4xbf16> to vector<10x16x4xbf16>
    %119 = vector.shape_cast %118 : vector<10x16x4xbf16> to vector<160x4xbf16>
    %c2_94 = arith.constant 2 : index
    %c0_95 = arith.constant 0 : index
    %c0_96 = arith.constant 0 : index
    %120 = vector.load %arg3[%c2_94, %c0_95, %c0_96] : memref<9x4x4xbf16, #tpu.memory_space<vmem>>, vector<1x4x4xbf16>
    %121 = vector.shape_cast %120 : vector<1x4x4xbf16> to vector<4x4xbf16>
    %cst_97 = arith.constant dense<0.000000e+00> : vector<160x4xf32>
    %122 = tpu.matmul %119, %121, %cst_97 {dimension_numbers = #tpu.dot_dimension_numbers<[1], [0], [0], [1], [0, 0, 1, 1], [], []>} : vector<160x4xbf16>, vector<4x4xbf16>, vector<160x4xf32> -> vector<160x4xf32>
    %123 = arith.addf %117, %122 : vector<160x4xf32>
    %124 = vector.extract_strided_slice %104 {offsets = [1, 0, 0], sizes = [10, 16, 4], strides = [1, 1, 1]} : vector<12x18x4xbf16> to vector<10x16x4xbf16>
    %125 = vector.shape_cast %124 : vector<10x16x4xbf16> to vector<160x4xbf16>
    %c3_98 = arith.constant 3 : index
    %c0_99 = arith.constant 0 : index
    %c0_100 = arith.constant 0 : index
    %126 = vector.load %arg3[%c3_98, %c0_99, %c0_100] : memref<9x4x4xbf16, #tpu.memory_space<vmem>>, vector<1x4x4xbf16>
    %127 = vector.shape_cast %126 : vector<1x4x4xbf16> to vector<4x4xbf16>
    %cst_101 = arith.constant dense<0.000000e+00> : vector<160x4xf32>
    %128 = tpu.matmul %125, %127, %cst_101 {dimension_numbers = #tpu.dot_dimension_numbers<[1], [0], [0], [1], [0, 0, 1, 1], [], []>} : vector<160x4xbf16>, vector<4x4xbf16>, vector<160x4xf32> -> vector<160x4xf32>
    %129 = arith.addf %123, %128 : vector<160x4xf32>
    %130 = vector.extract_strided_slice %104 {offsets = [1, 1, 0], sizes = [10, 16, 4], strides = [1, 1, 1]} : vector<12x18x4xbf16> to vector<10x16x4xbf16>
    %131 = vector.shape_cast %130 : vector<10x16x4xbf16> to vector<160x4xbf16>
    %c4_102 = arith.constant 4 : index
    %c0_103 = arith.constant 0 : index
    %c0_104 = arith.constant 0 : index
    %132 = vector.load %arg3[%c4_102, %c0_103, %c0_104] : memref<9x4x4xbf16, #tpu.memory_space<vmem>>, vector<1x4x4xbf16>
    %133 = vector.shape_cast %132 : vector<1x4x4xbf16> to vector<4x4xbf16>
    %cst_105 = arith.constant dense<0.000000e+00> : vector<160x4xf32>
    %134 = tpu.matmul %131, %133, %cst_105 {dimension_numbers = #tpu.dot_dimension_numbers<[1], [0], [0], [1], [0, 0, 1, 1], [], []>} : vector<160x4xbf16>, vector<4x4xbf16>, vector<160x4xf32> -> vector<160x4xf32>
    %135 = arith.addf %129, %134 : vector<160x4xf32>
    %136 = vector.extract_strided_slice %104 {offsets = [1, 2, 0], sizes = [10, 16, 4], strides = [1, 1, 1]} : vector<12x18x4xbf16> to vector<10x16x4xbf16>
    %137 = vector.shape_cast %136 : vector<10x16x4xbf16> to vector<160x4xbf16>
    %c5_106 = arith.constant 5 : index
    %c0_107 = arith.constant 0 : index
    %c0_108 = arith.constant 0 : index
    %138 = vector.load %arg3[%c5_106, %c0_107, %c0_108] : memref<9x4x4xbf16, #tpu.memory_space<vmem>>, vector<1x4x4xbf16>
    %139 = vector.shape_cast %138 : vector<1x4x4xbf16> to vector<4x4xbf16>
    %cst_109 = arith.constant dense<0.000000e+00> : vector<160x4xf32>
    %140 = tpu.matmul %137, %139, %cst_109 {dimension_numbers = #tpu.dot_dimension_numbers<[1], [0], [0], [1], [0, 0, 1, 1], [], []>} : vector<160x4xbf16>, vector<4x4xbf16>, vector<160x4xf32> -> vector<160x4xf32>
    %141 = arith.addf %135, %140 : vector<160x4xf32>
    %142 = vector.extract_strided_slice %104 {offsets = [2, 0, 0], sizes = [10, 16, 4], strides = [1, 1, 1]} : vector<12x18x4xbf16> to vector<10x16x4xbf16>
    %143 = vector.shape_cast %142 : vector<10x16x4xbf16> to vector<160x4xbf16>
    %c6_110 = arith.constant 6 : index
    %c0_111 = arith.constant 0 : index
    %c0_112 = arith.constant 0 : index
    %144 = vector.load %arg3[%c6_110, %c0_111, %c0_112] : memref<9x4x4xbf16, #tpu.memory_space<vmem>>, vector<1x4x4xbf16>
    %145 = vector.shape_cast %144 : vector<1x4x4xbf16> to vector<4x4xbf16>
    %cst_113 = arith.constant dense<0.000000e+00> : vector<160x4xf32>
    %146 = tpu.matmul %143, %145, %cst_113 {dimension_numbers = #tpu.dot_dimension_numbers<[1], [0], [0], [1], [0, 0, 1, 1], [], []>} : vector<160x4xbf16>, vector<4x4xbf16>, vector<160x4xf32> -> vector<160x4xf32>
    %147 = arith.addf %141, %146 : vector<160x4xf32>
    %148 = vector.extract_strided_slice %104 {offsets = [2, 1, 0], sizes = [10, 16, 4], strides = [1, 1, 1]} : vector<12x18x4xbf16> to vector<10x16x4xbf16>
    %149 = vector.shape_cast %148 : vector<10x16x4xbf16> to vector<160x4xbf16>
    %c7_114 = arith.constant 7 : index
    %c0_115 = arith.constant 0 : index
    %c0_116 = arith.constant 0 : index
    %150 = vector.load %arg3[%c7_114, %c0_115, %c0_116] : memref<9x4x4xbf16, #tpu.memory_space<vmem>>, vector<1x4x4xbf16>
    %151 = vector.shape_cast %150 : vector<1x4x4xbf16> to vector<4x4xbf16>
    %cst_117 = arith.constant dense<0.000000e+00> : vector<160x4xf32>
    %152 = tpu.matmul %149, %151, %cst_117 {dimension_numbers = #tpu.dot_dimension_numbers<[1], [0], [0], [1], [0, 0, 1, 1], [], []>} : vector<160x4xbf16>, vector<4x4xbf16>, vector<160x4xf32> -> vector<160x4xf32>
    %153 = arith.addf %147, %152 : vector<160x4xf32>
    %154 = vector.extract_strided_slice %104 {offsets = [2, 2, 0], sizes = [10, 16, 4], strides = [1, 1, 1]} : vector<12x18x4xbf16> to vector<10x16x4xbf16>
    %155 = vector.shape_cast %154 : vector<10x16x4xbf16> to vector<160x4xbf16>
    %c8_118 = arith.constant 8 : index
    %c0_119 = arith.constant 0 : index
    %c0_120 = arith.constant 0 : index
    %156 = vector.load %arg3[%c8_118, %c0_119, %c0_120] : memref<9x4x4xbf16, #tpu.memory_space<vmem>>, vector<1x4x4xbf16>
    %157 = vector.shape_cast %156 : vector<1x4x4xbf16> to vector<4x4xbf16>
    %cst_121 = arith.constant dense<0.000000e+00> : vector<160x4xf32>
    %158 = tpu.matmul %155, %157, %cst_121 {dimension_numbers = #tpu.dot_dimension_numbers<[1], [0], [0], [1], [0, 0, 1, 1], [], []>} : vector<160x4xbf16>, vector<4x4xbf16>, vector<160x4xf32> -> vector<160x4xf32>
    %159 = arith.addf %153, %158 : vector<160x4xf32>
    %c0_122 = arith.constant 0 : index
    %c0_123 = arith.constant 0 : index
    %160 = vector.load %arg4[%c0_122, %c0_123] : memref<1x4xf32, #tpu.memory_space<vmem>>, vector<1x4xf32>
    %161 = vector.broadcast %160 : vector<1x4xf32> to vector<160x4xf32>
    %162 = arith.addf %159, %161 : vector<160x4xf32>
    %cst_124 = arith.constant 0.000000e+00 : f32
    %163 = vector.broadcast %cst_124 : f32 to vector<160x4xf32>
    %164 = arith.maximumf %162, %163 : vector<160x4xf32>
    %165 = vector.shape_cast %164 : vector<160x4xf32> to vector<10x16x4xf32>
    %166 = tpu.iota {dimensions = array<i32: 0>} : vector<10x16x4xi32>
    %c1_i32_125 = arith.constant 1 : i32
    %167 = arith.subi %1, %c1_i32_125 : i32
    %168 = vector.broadcast %167 : i32 to vector<10x16x4xi32>
    %169 = arith.addi %166, %168 : vector<10x16x4xi32>
    %c0_i32_126 = arith.constant 0 : i32
    %170 = vector.broadcast %c0_i32_126 : i32 to vector<10x16x4xi32>
    %171 = arith.cmpi sge, %169, %170 : vector<10x16x4xi32>
    %c16_i32_127 = arith.constant 16 : i32
    %172 = vector.broadcast %c16_i32_127 : i32 to vector<10x16x4xi32>
    %173 = arith.cmpi slt, %169, %172 : vector<10x16x4xi32>
    %174 = arith.andi %171, %173 : vector<10x16x4xi1>
    %cst_128 = arith.constant 0.000000e+00 : f32
    %175 = vector.broadcast %cst_128 : f32 to vector<10x16x4xf32>
    %176 = arith.select %174, %165, %175 : vector<10x16x4xi1>, vector<10x16x4xf32>
    %cst_129 = arith.constant 0.000000e+00 : bf16
    %177 = vector.broadcast %cst_129 : bf16 to vector<10x18x4xbf16>
    %c0_130 = arith.constant 0 : index
    %c0_131 = arith.constant 0 : index
    %c0_132 = arith.constant 0 : index
    %178 = vector.load %arg9[%c0_130, %c0_131, %c0_132] : memref<10x18x4xbf16, #tpu.memory_space<vmem>>, vector<10x18x4xbf16>
    tpu.vector_store %arg9[%c0_130, %c0_131, %c0_132], %177 {strides = array<i32>} : memref<10x18x4xbf16, #tpu.memory_space<vmem>>, vector<10x18x4xbf16>,
    %179 = arith.truncf %176 : vector<10x16x4xf32> to vector<10x16x4xbf16>
    %c0_133 = arith.constant 0 : index
    %c1_134 = arith.constant 1 : index
    %c0_135 = arith.constant 0 : index
    %180 = vector.load %arg9[%c0_133, %c1_134, %c0_135] : memref<10x18x4xbf16, #tpu.memory_space<vmem>>, vector<10x16x4xbf16>
    tpu.vector_store %arg9[%c0_133, %c1_134, %c0_135], %179 {strides = array<i32>} : memref<10x18x4xbf16, #tpu.memory_space<vmem>>, vector<10x16x4xbf16>,
    %c0_136 = arith.constant 0 : index
    %c0_137 = arith.constant 0 : index
    %c0_138 = arith.constant 0 : index
    %181 = vector.load %arg9[%c0_136, %c0_137, %c0_138] : memref<10x18x4xbf16, #tpu.memory_space<vmem>>, vector<10x18x4xbf16>
    %cst_139 = arith.constant 0.000000e+00 : f32
    %182 = vector.broadcast %cst_139 : f32 to vector<128x4xf32>
    %183 = vector.extract_strided_slice %181 {offsets = [0, 0, 0], sizes = [8, 16, 4], strides = [1, 1, 1]} : vector<10x18x4xbf16> to vector<8x16x4xbf16>
    %184 = vector.shape_cast %183 : vector<8x16x4xbf16> to vector<128x4xbf16>
    %c0_140 = arith.constant 0 : index
    %c0_141 = arith.constant 0 : index
    %c0_142 = arith.constant 0 : index
    %185 = vector.load %arg5[%c0_140, %c0_141, %c0_142] : memref<9x4x4xbf16, #tpu.memory_space<vmem>>, vector<1x4x4xbf16>
    %186 = vector.shape_cast %185 : vector<1x4x4xbf16> to vector<4x4xbf16>
    %cst_143 = arith.constant dense<0.000000e+00> : vector<128x4xf32>
    %187 = tpu.matmul %184, %186, %cst_143 {dimension_numbers = #tpu.dot_dimension_numbers<[1], [0], [0], [1], [0, 0, 1, 1], [], []>} : vector<128x4xbf16>, vector<4x4xbf16>, vector<128x4xf32> -> vector<128x4xf32>
    %188 = arith.addf %182, %187 : vector<128x4xf32>
    %189 = vector.extract_strided_slice %181 {offsets = [0, 1, 0], sizes = [8, 16, 4], strides = [1, 1, 1]} : vector<10x18x4xbf16> to vector<8x16x4xbf16>
    %190 = vector.shape_cast %189 : vector<8x16x4xbf16> to vector<128x4xbf16>
    %c1_144 = arith.constant 1 : index
    %c0_145 = arith.constant 0 : index
    %c0_146 = arith.constant 0 : index
    %191 = vector.load %arg5[%c1_144, %c0_145, %c0_146] : memref<9x4x4xbf16, #tpu.memory_space<vmem>>, vector<1x4x4xbf16>
    %192 = vector.shape_cast %191 : vector<1x4x4xbf16> to vector<4x4xbf16>
    %cst_147 = arith.constant dense<0.000000e+00> : vector<128x4xf32>
    %193 = tpu.matmul %190, %192, %cst_147 {dimension_numbers = #tpu.dot_dimension_numbers<[1], [0], [0], [1], [0, 0, 1, 1], [], []>} : vector<128x4xbf16>, vector<4x4xbf16>, vector<128x4xf32> -> vector<128x4xf32>
    %194 = arith.addf %188, %193 : vector<128x4xf32>
    %195 = vector.extract_strided_slice %181 {offsets = [0, 2, 0], sizes = [8, 16, 4], strides = [1, 1, 1]} : vector<10x18x4xbf16> to vector<8x16x4xbf16>
    %196 = vector.shape_cast %195 : vector<8x16x4xbf16> to vector<128x4xbf16>
    %c2_148 = arith.constant 2 : index
    %c0_149 = arith.constant 0 : index
    %c0_150 = arith.constant 0 : index
    %197 = vector.load %arg5[%c2_148, %c0_149, %c0_150] : memref<9x4x4xbf16, #tpu.memory_space<vmem>>, vector<1x4x4xbf16>
    %198 = vector.shape_cast %197 : vector<1x4x4xbf16> to vector<4x4xbf16>
    %cst_151 = arith.constant dense<0.000000e+00> : vector<128x4xf32>
    %199 = tpu.matmul %196, %198, %cst_151 {dimension_numbers = #tpu.dot_dimension_numbers<[1], [0], [0], [1], [0, 0, 1, 1], [], []>} : vector<128x4xbf16>, vector<4x4xbf16>, vector<128x4xf32> -> vector<128x4xf32>
    %200 = arith.addf %194, %199 : vector<128x4xf32>
    %201 = vector.extract_strided_slice %181 {offsets = [1, 0, 0], sizes = [8, 16, 4], strides = [1, 1, 1]} : vector<10x18x4xbf16> to vector<8x16x4xbf16>
    %202 = vector.shape_cast %201 : vector<8x16x4xbf16> to vector<128x4xbf16>
    %c3_152 = arith.constant 3 : index
    %c0_153 = arith.constant 0 : index
    %c0_154 = arith.constant 0 : index
    %203 = vector.load %arg5[%c3_152, %c0_153, %c0_154] : memref<9x4x4xbf16, #tpu.memory_space<vmem>>, vector<1x4x4xbf16>
    %204 = vector.shape_cast %203 : vector<1x4x4xbf16> to vector<4x4xbf16>
    %cst_155 = arith.constant dense<0.000000e+00> : vector<128x4xf32>
    %205 = tpu.matmul %202, %204, %cst_155 {dimension_numbers = #tpu.dot_dimension_numbers<[1], [0], [0], [1], [0, 0, 1, 1], [], []>} : vector<128x4xbf16>, vector<4x4xbf16>, vector<128x4xf32> -> vector<128x4xf32>
    %206 = arith.addf %200, %205 : vector<128x4xf32>
    %207 = vector.extract_strided_slice %181 {offsets = [1, 1, 0], sizes = [8, 16, 4], strides = [1, 1, 1]} : vector<10x18x4xbf16> to vector<8x16x4xbf16>
    %208 = vector.shape_cast %207 : vector<8x16x4xbf16> to vector<128x4xbf16>
    %c4_156 = arith.constant 4 : index
    %c0_157 = arith.constant 0 : index
    %c0_158 = arith.constant 0 : index
    %209 = vector.load %arg5[%c4_156, %c0_157, %c0_158] : memref<9x4x4xbf16, #tpu.memory_space<vmem>>, vector<1x4x4xbf16>
    %210 = vector.shape_cast %209 : vector<1x4x4xbf16> to vector<4x4xbf16>
    %cst_159 = arith.constant dense<0.000000e+00> : vector<128x4xf32>
    %211 = tpu.matmul %208, %210, %cst_159 {dimension_numbers = #tpu.dot_dimension_numbers<[1], [0], [0], [1], [0, 0, 1, 1], [], []>} : vector<128x4xbf16>, vector<4x4xbf16>, vector<128x4xf32> -> vector<128x4xf32>
    %212 = arith.addf %206, %211 : vector<128x4xf32>
    %213 = vector.extract_strided_slice %181 {offsets = [1, 2, 0], sizes = [8, 16, 4], strides = [1, 1, 1]} : vector<10x18x4xbf16> to vector<8x16x4xbf16>
    %214 = vector.shape_cast %213 : vector<8x16x4xbf16> to vector<128x4xbf16>
    %c5_160 = arith.constant 5 : index
    %c0_161 = arith.constant 0 : index
    %c0_162 = arith.constant 0 : index
    %215 = vector.load %arg5[%c5_160, %c0_161, %c0_162] : memref<9x4x4xbf16, #tpu.memory_space<vmem>>, vector<1x4x4xbf16>
    %216 = vector.shape_cast %215 : vector<1x4x4xbf16> to vector<4x4xbf16>
    %cst_163 = arith.constant dense<0.000000e+00> : vector<128x4xf32>
    %217 = tpu.matmul %214, %216, %cst_163 {dimension_numbers = #tpu.dot_dimension_numbers<[1], [0], [0], [1], [0, 0, 1, 1], [], []>} : vector<128x4xbf16>, vector<4x4xbf16>, vector<128x4xf32> -> vector<128x4xf32>
    %218 = arith.addf %212, %217 : vector<128x4xf32>
    %219 = vector.extract_strided_slice %181 {offsets = [2, 0, 0], sizes = [8, 16, 4], strides = [1, 1, 1]} : vector<10x18x4xbf16> to vector<8x16x4xbf16>
    %220 = vector.shape_cast %219 : vector<8x16x4xbf16> to vector<128x4xbf16>
    %c6_164 = arith.constant 6 : index
    %c0_165 = arith.constant 0 : index
    %c0_166 = arith.constant 0 : index
    %221 = vector.load %arg5[%c6_164, %c0_165, %c0_166] : memref<9x4x4xbf16, #tpu.memory_space<vmem>>, vector<1x4x4xbf16>
    %222 = vector.shape_cast %221 : vector<1x4x4xbf16> to vector<4x4xbf16>
    %cst_167 = arith.constant dense<0.000000e+00> : vector<128x4xf32>
    %223 = tpu.matmul %220, %222, %cst_167 {dimension_numbers = #tpu.dot_dimension_numbers<[1], [0], [0], [1], [0, 0, 1, 1], [], []>} : vector<128x4xbf16>, vector<4x4xbf16>, vector<128x4xf32> -> vector<128x4xf32>
    %224 = arith.addf %218, %223 : vector<128x4xf32>
    %225 = vector.extract_strided_slice %181 {offsets = [2, 1, 0], sizes = [8, 16, 4], strides = [1, 1, 1]} : vector<10x18x4xbf16> to vector<8x16x4xbf16>
    %226 = vector.shape_cast %225 : vector<8x16x4xbf16> to vector<128x4xbf16>
    %c7_168 = arith.constant 7 : index
    %c0_169 = arith.constant 0 : index
    %c0_170 = arith.constant 0 : index
    %227 = vector.load %arg5[%c7_168, %c0_169, %c0_170] : memref<9x4x4xbf16, #tpu.memory_space<vmem>>, vector<1x4x4xbf16>
    %228 = vector.shape_cast %227 : vector<1x4x4xbf16> to vector<4x4xbf16>
    %cst_171 = arith.constant dense<0.000000e+00> : vector<128x4xf32>
    %229 = tpu.matmul %226, %228, %cst_171 {dimension_numbers = #tpu.dot_dimension_numbers<[1], [0], [0], [1], [0, 0, 1, 1], [], []>} : vector<128x4xbf16>, vector<4x4xbf16>, vector<128x4xf32> -> vector<128x4xf32>
    %230 = arith.addf %224, %229 : vector<128x4xf32>
    %231 = vector.extract_strided_slice %181 {offsets = [2, 2, 0], sizes = [8, 16, 4], strides = [1, 1, 1]} : vector<10x18x4xbf16> to vector<8x16x4xbf16>
    %232 = vector.shape_cast %231 : vector<8x16x4xbf16> to vector<128x4xbf16>
    %c8_172 = arith.constant 8 : index
    %c0_173 = arith.constant 0 : index
    %c0_174 = arith.constant 0 : index
    %233 = vector.load %arg5[%c8_172, %c0_173, %c0_174] : memref<9x4x4xbf16, #tpu.memory_space<vmem>>, vector<1x4x4xbf16>
    %234 = vector.shape_cast %233 : vector<1x4x4xbf16> to vector<4x4xbf16>
    %cst_175 = arith.constant dense<0.000000e+00> : vector<128x4xf32>
    %235 = tpu.matmul %232, %234, %cst_175 {dimension_numbers = #tpu.dot_dimension_numbers<[1], [0], [0], [1], [0, 0, 1, 1], [], []>} : vector<128x4xbf16>, vector<4x4xbf16>, vector<128x4xf32> -> vector<128x4xf32>
    %236 = arith.addf %230, %235 : vector<128x4xf32>
    %c0_176 = arith.constant 0 : index
    %c0_177 = arith.constant 0 : index
    %237 = vector.load %arg6[%c0_176, %c0_177] : memref<1x4xf32, #tpu.memory_space<vmem>>, vector<1x4xf32>
    %238 = vector.broadcast %237 : vector<1x4xf32> to vector<128x4xf32>
    %239 = arith.addf %236, %238 : vector<128x4xf32>
    %240 = vector.shape_cast %239 : vector<128x4xf32> to vector<8x16x4xf32>
    %c0_178 = arith.constant 0 : index
    %241 = arith.index_cast %1 : i32 to index
    %c0_179 = arith.constant 0 : index
    %c0_180 = arith.constant 0 : index
    %242 = vector.load %arg2[%c0_178, %241, %c0_179, %c0_180] : memref<1x16x16x4xf32, #tpu.memory_space<vmem>>, vector<1x8x16x4xf32>
    %243 = vector.shape_cast %242 : vector<1x8x16x4xf32> to vector<8x16x4xf32>
    %244 = arith.addf %240, %243 : vector<8x16x4xf32>
    %245 = vector.shape_cast %244 : vector<8x16x4xf32> to vector<8x64xf32>
    %c0_181 = arith.constant 0 : index
    %c0_182 = arith.constant 0 : index
    %c0_183 = arith.constant 0 : index
    %246 = vector.load %arg7[%c0_181, %c0_182, %c0_183] : memref<1x8x64xf32, #tpu.memory_space<vmem>>, vector<1x8x64xf32>
    %247 = vector.shape_cast %246 : vector<1x8x64xf32> to vector<8x64xf32>
    %248 = vector.shape_cast %245 : vector<8x64xf32> to vector<1x8x64xf32>
    tpu.vector_store %arg7[%c0_181, %c0_182, %c0_183], %248 {strides = array<i32>} : memref<1x8x64xf32, #tpu.memory_space<vmem>>, vector<1x8x64xf32>,
    return
  }
  func.func @transform_0(%arg0: i32, %arg1: i32) -> (i32, i32, i32, i32) {
    %c0_i32 = arith.constant 0 : i32
    %c0_i32_0 = arith.constant 0 : i32
    %c0_i32_1 = arith.constant 0 : i32
    %c0_i32_2 = arith.constant 0 : i32
    return %arg0, %c0_i32, %c0_i32_0, %c0_i32_1 : i32, i32, i32, i32
  }
  func.func @transform_1(%arg0: i32, %arg1: i32) -> (i32, i32, i32) {
    %c0_i32 = arith.constant 0 : i32
    %c0_i32_0 = arith.constant 0 : i32
    %c0_i32_1 = arith.constant 0 : i32
    %c0_i32_2 = arith.constant 0 : i32
    return %c0_i32, %c0_i32_0, %c0_i32_1 : i32, i32, i32
  }
  func.func @transform_2(%arg0: i32, %arg1: i32) -> (i32, i32) {
    %c0_i32 = arith.constant 0 : i32
    %c0_i32_0 = arith.constant 0 : i32
    %c0_i32_1 = arith.constant 0 : i32
    return %c0_i32, %c0_i32_0 : i32, i32
  }
  func.func @transform_3(%arg0: i32, %arg1: i32) -> (i32, i32, i32) {
    %c0_i32 = arith.constant 0 : i32
    %c0_i32_0 = arith.constant 0 : i32
    %c0_i32_1 = arith.constant 0 : i32
    %c0_i32_2 = arith.constant 0 : i32
    return %c0_i32, %c0_i32_0, %c0_i32_1 : i32, i32, i32
  }
  func.func @transform_4(%arg0: i32, %arg1: i32) -> (i32, i32) {
    %c0_i32 = arith.constant 0 : i32
    %c0_i32_0 = arith.constant 0 : i32
    %c0_i32_1 = arith.constant 0 : i32
    return %c0_i32, %c0_i32_0 : i32, i32
  }
  func.func @transform_5(%arg0: i32, %arg1: i32) -> (i32, i32, i32) {
    %c0_i32 = arith.constant 0 : i32
    %c0_i32_0 = arith.constant 0 : i32
    return %arg0, %arg1, %c0_i32 : i32, i32, i32
  }
}

</mosaic_0001>

<llo_original>
// kernel: tpu_custom_call.1
$region0: #{tpu_custom_call.1}
  #allocation0 [shape = 'u32[]', space=smem, size = 0x4, offset = 0x4, fixed_abs, tag = 'smem constant byte address 0x4 - core index']
  #allocation1 [shape = 'u32[72,128]{1,0:T(1,128)}', space=vmem, size = 0x9000, scoped, tag = 'internal scratch']
  #allocation2 [shape = 'bf16[12,18,4]{2,1,0:T(8,128)(2,1)}', space=vmem, size = 0x12000, scoped, tag = 'scratch operand']
  #allocation3 [shape = 'bf16[10,18,4]{2,1,0:T(8,128)(2,1)}', space=vmem, size = 0xf000, scoped, tag = 'scratch operand']
  %s0 = inlined_call_operand.vmem [shape: f32[2,16,16,4], index: 0, kind: input, shape index: {}]
  %s1 = inlined_call_operand.vmem [shape: bf16[9,4,4], index: 1, kind: input, shape index: {}]
  %s2 = inlined_call_operand.vmem [shape: f32[1,4], index: 2, kind: input, shape index: {}]
  %s3 = inlined_call_operand.vmem [shape: bf16[9,4,4], index: 3, kind: input, shape index: {}]
  %s4 = inlined_call_operand.vmem [shape: f32[1,4], index: 4, kind: input, shape index: {}]
  %s5 = inlined_call_operand.hbm [shape: f32[2,16,64], index: 5, kind: output, shape index: {}]
  %s6 = sld [smem:[#allocation0]]
  $region53: #{tpu_custom_call.1} parent=0
    _
  %s8 = ssub.s32 1, %s6
  %s9 = scalar_select 0, %s8, %s6
  $region1: #{tpu_custom_call.1} parent=0
    #allocation4 [shape = 'u8[8192]{0}', space=vmem, size = 0x2000, scoped, tag = 'output window, operand 0']
    #allocation5 [shape = 's32[2]{0}', space=sflag, size = 0x8, scoped, tag = 'scoped memory for tpu_custom_call.1']
    %10 = vsyncpa [#allocation5], 0
    %s11 = scalar_lea.sflag [#allocation5], 1
    %12 = vsyncpa %s11, 0
    loop: start=0, step=1, limit=6
    $region2: #{tpu_custom_call.1} parent=1 // loop_pre_header
      _
    $region3: #{tpu_custom_call.1} parent=1 // loop_header
      %s14 = sphi 0, %s18
      %p15 = scmp.ge.s32.totalorder %s14, 6
      %s21 = sphi 0, %s33
      %s22 = sphi 0, %s29
      %s23 = sphi 0, %s21
      %s24 = sphi 0, %s22
      %s25 = sphi 0, %s23
      %s26 = sphi 0, %s24
      %s36 = sphi 0, %s38
      %s39 = sphi 0, %s36
      %s40 = sphi 0, %s39
      %s56 = sphi 0, %s40
      %s60 = sphi 0, %s60
      %s62 = sphi 0, %s60
      %s63 = sphi 0, %s62
      %s77 = sphi 0, %s63
      %s81 = sphi 0, %s81
      %s83 = sphi 0, %s81
      %s84 = sphi 0, %s83
      %s98 = sphi 0, %s84
      %s102 = sphi 0, %s102
      %s104 = sphi 0, %s102
      %s105 = sphi 0, %s104
      %s119 = sphi 0, %s105
      %s123 = sphi 0, %s123
      %s125 = sphi 0, %s123
      %s126 = sphi 0, %s125
      %s140 = sphi 0, %s126
      %s148 = sphi 0, %s150
      %s151 = sphi 0, %s148
      %s152 = sphi 0, %s151
      %s168 = sphi 0, %s152
    $region4: #{tpu_custom_call.1} parent=1 // loop_header_branch
      %17 = sbr.rel (%p15) target = $region8
    $region5: #{tpu_custom_call.1} parent=1 // loop_body
      %s19 = ssub.s32 %s14, 1
      %s20 = ssub.s32 %s14, 2
      %s27 = sadd.s32 1, %s22
      %p28 = scmp.ge.s32.totalorder %s27, 2
      %s29 = scalar_select %p28, 0, %s27
      %s30 = sadd.s32 1, %s21
      %s31 = scalar_select %p28, %s30, %s21
      %p32 = scmp.ge.s32.totalorder %s31, 2
      %s33 = scalar_select %p32, 0, %s31
      %s34 = ssub.s32 %s21, %s33
      %p35 = scmp.eq.s32.totalorder %s34, 0
      %s37 = sadd.s32 %s36, 1
      %s38 = scalar_select %p35, %s36, %s37
      %p41 = pneg %p35
      %p42 = scmp.eq.s32.totalorder %s14, 3
      %p43 = por %p41, %p42
      %p44 = scmp.ne.s32.totalorder %s36, %s39
      %p45 = scmp.eq.s32.totalorder %s14, 0
      %p46 = por %p44, %p45
      %p47 = scmp.ne.s32.totalorder %s36, %s39
      %p48 = scmp.eq.s32.totalorder %s19, 3
      %p49 = por %p47, %p48
      %p50 = scmp.ne.s32.totalorder %s39, %s40
      %p51 = scmp.eq.s32.totalorder %s19, 0
      %p52 = por %p50, %p51
      %p53 = scmp.ne.s32.totalorder %s39, %s40
      %p54 = scmp.eq.s32.totalorder %s20, 3
      %p55 = por %p53, %p54
      %p57 = scmp.ne.s32.totalorder %s40, %s56
      %p58 = scmp.eq.s32.totalorder %s20, 0
      %p59 = por %p57, %p58
      %s61 = sadd.s32 %s60, 1
      %p64 = scmp.eq.s32.totalorder %s14, 3
      %p65 = scmp.ne.s32.totalorder %s60, %s62
      %p66 = scmp.eq.s32.totalorder %s14, 0
      %p67 = por %p65, %p66
      %p68 = scmp.ne.s32.totalorder %s60, %s62
      %p69 = scmp.eq.s32.totalorder %s19, 3
      %p70 = por %p68, %p69
      %p71 = scmp.ne.s32.totalorder %s62, %s63
      %p72 = scmp.eq.s32.totalorder %s19, 0
      %p73 = por %p71, %p72
      %p74 = scmp.ne.s32.totalorder %s62, %s63
      %p75 = scmp.eq.s32.totalorder %s20, 3
      %p76 = por %p74, %p75
      %p78 = scmp.ne.s32.totalorder %s63, %s77
      %p79 = scmp.eq.s32.totalorder %s20, 0
      %p80 = por %p78, %p79
      %s82 = sadd.s32 %s81, 1
      %p85 = scmp.eq.s32.totalorder %s14, 3
      %p86 = scmp.ne.s32.totalorder %s81, %s83
      %p87 = scmp.eq.s32.totalorder %s14, 0
      %p88 = por %p86, %p87
      %p89 = scmp.ne.s32.totalorder %s81, %s83
      %p90 = scmp.eq.s32.totalorder %s19, 3
      %p91 = por %p89, %p90
      %p92 = scmp.ne.s32.totalorder %s83, %s84
      %p93 = scmp.eq.s32.totalorder %s19, 0
      %p94 = por %p92, %p93
      %p95 = scmp.ne.s32.totalorder %s83, %s84
      %p96 = scmp.eq.s32.totalorder %s20, 3
      %p97 = por %p95, %p96
      %p99 = scmp.ne.s32.totalorder %s84, %s98
      %p100 = scmp.eq.s32.totalorder %s20, 0
      %p101 = por %p99, %p100
      %s103 = sadd.s32 %s102, 1
      %p106 = scmp.eq.s32.totalorder %s14, 3
      %p107 = scmp.ne.s32.totalorder %s102, %s104
      %p108 = scmp.eq.s32.totalorder %s14, 0
      %p109 = por %p107, %p108
      %p110 = scmp.ne.s32.totalorder %s102, %s104
      %p111 = scmp.eq.s32.totalorder %s19, 3
      %p112 = por %p110, %p111
      %p113 = scmp.ne.s32.totalorder %s104, %s105
      %p114 = scmp.eq.s32.totalorder %s19, 0
      %p115 = por %p113, %p114
      %p116 = scmp.ne.s32.totalorder %s104, %s105
      %p117 = scmp.eq.s32.totalorder %s20, 3
      %p118 = por %p116, %p117
      %p120 = scmp.ne.s32.totalorder %s105, %s119
      %p121 = scmp.eq.s32.totalorder %s20, 0
      %p122 = por %p120, %p121
      %s124 = sadd.s32 %s123, 1
      %p127 = scmp.eq.s32.totalorder %s14, 3
      %p128 = scmp.ne.s32.totalorder %s123, %s125
      %p129 = scmp.eq.s32.totalorder %s14, 0
      %p130 = por %p128, %p129
      %p131 = scmp.ne.s32.totalorder %s123, %s125
      %p132 = scmp.eq.s32.totalorder %s19, 3
      %p133 = por %p131, %p132
      %p134 = scmp.ne.s32.totalorder %s125, %s126
      %p135 = scmp.eq.s32.totalorder %s19, 0
      %p136 = por %p134, %p135
      %p137 = scmp.ne.s32.totalorder %s125, %s126
      %p138 = scmp.eq.s32.totalorder %s20, 3
      %p139 = por %p137, %p138
      %p141 = scmp.ne.s32.totalorder %s126, %s140
      %p142 = scmp.eq.s32.totalorder %s20, 0
      %p143 = por %p141, %p142
      %s144 = ssub.s32 %s21, %s33
      %s145 = ssub.s32 %s22, %s29
      %s146 = sor.u32 %s144, %s145
      %p147 = scmp.eq.s32.totalorder %s146, 0
      %s149 = sadd.s32 %s148, 1
      %s150 = scalar_select %p147, %s148, %s149
      %p153 = pneg %p147
      %p154 = scmp.eq.s32.totalorder %s14, 3
      %p155 = por %p153, %p154
      %p156 = scmp.ne.s32.totalorder %s148, %s151
      %p157 = scmp.eq.s32.totalorder %s14, 0
      %p158 = por %p156, %p157
      %p159 = scmp.ne.s32.totalorder %s148, %s151
      %p160 = scmp.eq.s32.totalorder %s19, 3
      %p161 = por %p159, %p160
      %p162 = scmp.ne.s32.totalorder %s151, %s152
      %p163 = scmp.eq.s32.totalorder %s19, 0
      %p164 = por %p162, %p163
      %p165 = scmp.ne.s32.totalorder %s151, %s152
      %p166 = scmp.eq.s32.totalorder %s20, 3
      %p167 = por %p165, %p166
      %p169 = scmp.ne.s32.totalorder %s152, %s168
      %p170 = scmp.eq.s32.totalorder %s20, 0
      %p171 = por %p169, %p170
      %p172 = scmp.le.s32.totalorder 1, %s14
      %p173 = scmp.lt.s32.totalorder %s14, 5
      %p174 = pnand %p172, %p173
      %p175 = pneg %p174
      // Predicated region
      $region9: #{tpu_custom_call.1} parent=5 // pred_check
        _
      $region10: #{tpu_custom_call.1} parent=5 // pred_check_branch
        %177 = sbr.rel (%p174) target = $region12
      $region11: #{tpu_custom_call.1} parent=5 // pred_region
        %s178 = ssub.s32 %s14, 1
        // Predicated region
        $region13: #{tpu_custom_call.1} parent=11 // pred_check
          %p179 = pneg %p73
        $region14: #{tpu_custom_call.1} parent=11 // pred_check_branch
          %181 = sbr.rel (%p179) target = $region16
        $region15: #{tpu_custom_call.1} parent=11 // pred_region
          _
        $region16: #{tpu_custom_call.1} parent=11 // pred_fallthru
          _
        // Predicated region
        $region17: #{tpu_custom_call.1} parent=11 // pred_check
          %p182 = pneg %p94
        $region18: #{tpu_custom_call.1} parent=11 // pred_check_branch
          %184 = sbr.rel (%p182) target = $region20
        $region19: #{tpu_custom_call.1} parent=11 // pred_region
          _
        $region20: #{tpu_custom_call.1} parent=11 // pred_fallthru
          _
        // Predicated region
        $region21: #{tpu_custom_call.1} parent=11 // pred_check
          %p185 = pneg %p115
        $region22: #{tpu_custom_call.1} parent=11 // pred_check_branch
          %187 = sbr.rel (%p185) target = $region24
        $region23: #{tpu_custom_call.1} parent=11 // pred_region
          _
        $region24: #{tpu_custom_call.1} parent=11 // pred_fallthru
          _
        // Predicated region
        $region25: #{tpu_custom_call.1} parent=11 // pred_check
          %p188 = pneg %p136
        $region26: #{tpu_custom_call.1} parent=11 // pred_check_branch
          %190 = sbr.rel (%p188) target = $region28
        $region27: #{tpu_custom_call.1} parent=11 // pred_region
          _
        $region28: #{tpu_custom_call.1} parent=11 // pred_fallthru
          _
      $region12: #{tpu_custom_call.1} parent=5 // pred_fallthru
        _
      %p191 = scmp.lt.s32.totalorder %s14, 4
      // Predicated region
      $region29: #{tpu_custom_call.1} parent=5 // pred_check
        %p192 = pneg %p191
      $region30: #{tpu_custom_call.1} parent=5 // pred_check_branch
        %194 = sbr.rel (%p192) target = $region32
      $region31: #{tpu_custom_call.1} parent=5 // pred_region
        // Predicated region
        $region33: #{tpu_custom_call.1} parent=31 // pred_check
          %p195 = pneg %p46
        $region34: #{tpu_custom_call.1} parent=31 // pred_check_branch
          %197 = sbr.rel (%p195) target = $region36
        $region35: #{tpu_custom_call.1} parent=31 // pred_region
          %p198 = scmp.lt.s32.totalorder %s21, 1
          %s199 = scalar_select %p198, %s21, 1
          %s200 = smul.addr %s199, 32
          %s201 = smul.addr %s200, 8
          %s202 = scalar_lea.vmem %s0, %s201
        $region36: #{tpu_custom_call.1} parent=31 // pred_fallthru
          _
      $region32: #{tpu_custom_call.1} parent=5 // pred_fallthru
        _
      %p203 = scmp.le.s32.totalorder 1, %s14
      %p204 = scmp.lt.s32.totalorder %s14, 5
      %p205 = pnand %p203, %p204
      %p206 = pneg %p205
      // Predicated region
      $region37: #{tpu_custom_call.1} parent=5 // pred_check
        _
      $region38: #{tpu_custom_call.1} parent=5 // pred_check_branch
        %208 = sbr.rel (%p205) target = $region40
      $region39: #{tpu_custom_call.1} parent=5 // pred_region
        %s209 = ssub.s32 %s14, 1
        %p210 = scmp.lt.s32.totalorder %s23, 1
        %s211 = scalar_select %p210, %s23, 1
        %s212 = smul.addr %s211, 32
        %s213 = smul.addr %s212, 8
        %s214 = scalar_lea.vmem %s0, %s213
        %p215 = pneg %p52
        %p216 = pneg %p49
        %p217 = pneg %p73
        %p218 = pneg %p70
        %p219 = pneg %p94
        %p220 = pneg %p91
        %p221 = pneg %p115
        %p222 = pneg %p112
        %p223 = pneg %p136
        %p224 = pneg %p133
        %p225 = pneg %p164
        %p226 = pneg %p161
        %s227 = sand.u32 %s151, 1
        %s228 = scalar_lea.sflag [#allocation5], %s227
        %s229 = sand.u32 %s151, 1
        %s230 = smul.addr %s229, 8
        %s231 = scalar_lea.vmem [#allocation4], %s230
        %p232 = scmp.lt.s32.totalorder %s23, 1
        %s233 = scalar_select %p232, %s23, 1
        %s234 = smul.addr %s233, 32
        %s235 = smul.addr %s234, 8
        %s236 = scalar_lea.vmem %s0, %s235
        %s238 = smul.u32 %s24, 8
        %vm239 = vcmask 27648
        %240 = vst.msk [vmem:[#allocation2] sm:$0xf] %vm239, 0
        %241 = vst.msk [vmem:[#allocation2 + $0x4] sm:$0xf] %vm239, 0
        %vm242 = vcmask 24576
        %243 = vst.msk [vmem:[#allocation2 + $0x8] sm:$0x1] %vm242, 0
        %244 = vst.msk [vmem:[#allocation2 + $0xc] sm:$0xf] %vm239, 0
        %245 = vst.msk [vmem:[#allocation2 + $0x10] sm:$0xf] %vm239, 0
        %246 = vst.msk [vmem:[#allocation2 + $0x14] sm:$0x1] %vm242, 0
        %247 = vst.msk [vmem:[#allocation2 + $0x18] sm:$0xf] %vm239, 0
        %248 = vst.msk [vmem:[#allocation2 + $0x1c] sm:$0xf] %vm239, 0
        %249 = vst.msk [vmem:[#allocation2 + $0x20] sm:$0x1] %vm242, 0
        %250 = vst.msk [vmem:[#allocation2 + $0x24] sm:$0xf] %vm239, 0
        %251 = vst.msk [vmem:[#allocation2 + $0x28] sm:$0xf] %vm239, 0
        %252 = vst.msk [vmem:[#allocation2 + $0x2c] sm:$0x1] %vm242, 0
        %253 = vst.msk [vmem:[#allocation2 + $0x30] sm:$0xf] %vm239, 0
        %254 = vst.msk [vmem:[#allocation2 + $0x34] sm:$0xf] %vm239, 0
        %255 = vst.msk [vmem:[#allocation2 + $0x38] sm:$0x1] %vm242, 0
        %256 = vst.msk [vmem:[#allocation2 + $0x3c] sm:$0xf] %vm239, 0
        %257 = vst.msk [vmem:[#allocation2 + $0x40] sm:$0xf] %vm239, 0
        %258 = vst.msk [vmem:[#allocation2 + $0x44] sm:$0x1] %vm242, 0
        %259 = vst.msk [vmem:[#allocation2 + $0x48] sm:$0xf] %vm239, 0
        %260 = vst.msk [vmem:[#allocation2 + $0x4c] sm:$0xf] %vm239, 0
        %261 = vst.msk [vmem:[#allocation2 + $0x50] sm:$0x1] %vm242, 0
        %262 = vst.msk [vmem:[#allocation2 + $0x54] sm:$0xf] %vm239, 0
        %263 = vst.msk [vmem:[#allocation2 + $0x58] sm:$0xf] %vm239, 0
        %264 = vst.msk [vmem:[#allocation2 + $0x5c] sm:$0x1] %vm242, 0
        %265 = vst.msk [vmem:[#allocation2 + $0x60] sm:$0xf] %vm239, 0
        %266 = vst.msk [vmem:[#allocation2 + $0x64] sm:$0xf] %vm239, 0
        %267 = vst.msk [vmem:[#allocation2 + $0x68] sm:$0x1] %vm242, 0
        %268 = vst.msk [vmem:[#allocation2 + $0x6c] sm:$0xf] %vm239, 0
        %269 = vst.msk [vmem:[#allocation2 + $0x70] sm:$0xf] %vm239, 0
        %270 = vst.msk [vmem:[#allocation2 + $0x74] sm:$0x1] %vm242, 0
        %271 = vst.msk [vmem:[#allocation2 + $0x78] sm:$0xf] %vm239, 0
        %272 = vst.msk [vmem:[#allocation2 + $0x7c] sm:$0xf] %vm239, 0
        %273 = vst.msk [vmem:[#allocation2 + $0x80] sm:$0x1] %vm242, 0
        %274 = vst.msk [vmem:[#allocation2 + $0x84] sm:$0xf] %vm239, 0
        %275 = vst.msk [vmem:[#allocation2 + $0x88] sm:$0xf] %vm239, 0
        %276 = vst.msk [vmem:[#allocation2 + $0x8c] sm:$0x1] %vm242, 0
        %s277 = sadd.s32 %s238, 4294967294
        %p278 = scmp.ge.s32.totalorder %s277, 0
        %p279 = scmp.lt.s32.totalorder %s277, 16
        %p280 = pnand %p278, %p279
        %p281 = pneg %p280
        %p282 = scmp.gt.s32.totalorder %s277, 0
        %s283 = scalar_select %p282, %s277, 0
        %p284 = scmp.lt.s32.totalorder %s283, 15
        %s285 = scalar_select %p284, %s283, 15
        %s286 = smul.u32 %s285, 16
        %s287 = scalar_lea.vmem %s236, %s286
        %v288 = vld [vmem:[%s287] sm:$0xff]
        %v289 = vld [vmem:[%s287 + $0x8] sm:$0xff]
        %s290 = scalar_select %p281, 1, 0
        %v291 = vstv %s290
        %vm292 = vcmp.eq.s32.totalorder %v291, 1
        %v293 = vsel %vm292, %v288, 0.0
        %v294 = vsel %vm292, %v289, 0.0
        %v295 = vpack.c.bf16 %v293, %v293
        %v296 = vpack.c.bf16 %v294, %v294
        %vm297 = vsmask.f32 256
        %vm298 = vsmask.f32 4368
        %vm299 = vmor %vm297, %vm298
        %v301 = vshrl.u32 %v295, 16
        %v303 = vrot.slane %v301, 7
        %v304 = vshll.u32 %v295, 16
        %v306 = vor.u32 %v303, %v304
        %v307 = vrot.slane %v303, 4
        %v309 = vshrl.u32 %v296, 16
        %v311 = vrot.slane %v309, 7
        %v312 = vshll.u32 %v296, 16
        %v314 = vor.u32 %v311, %v312
        %v315 = vsel %vm299, %v307, %v314
        %v316 = vrot.slane %v311, 4
        %vm320 = vcmask 27648
        %vm321 = vsmask.f32 7938
        %vm322 = vmand %vm320, %vm321
        %v323 = vld [vmem:[#allocation2] sm:$0xf]
        %v324 = vsel %vm322, %v306, %v323
        %325 = vst [vmem:[#allocation2] sm:$0xf] %v324
        %326 = vst.msk [vmem:[#allocation2 + $0x4] sm:$0xf] %vm239, %v315
        %vm327 = vcmask 24576
        %vm328 = vmand %vm327, %vm297
        %v329 = vld [vmem:[#allocation2 + $0x8] sm:$0x1]
        %v330 = vsel %vm328, %v316, %v329
        %331 = vst [vmem:[#allocation2 + $0x8] sm:$0x1] %v330
        %s332 = sadd.s32 %s238, 4294967295
        %p333 = scmp.ge.s32.totalorder %s332, 0
        %p334 = scmp.lt.s32.totalorder %s332, 16
        %p335 = pnand %p333, %p334
        %p336 = pneg %p335
        %p337 = scmp.gt.s32.totalorder %s332, 0
        %s338 = scalar_select %p337, %s332, 0
        %p339 = scmp.lt.s32.totalorder %s338, 15
        %s340 = scalar_select %p339, %s338, 15
        %s341 = smul.u32 %s340, 16
        %s342 = scalar_lea.vmem %s236, %s341
        %v343 = vld [vmem:[%s342] sm:$0xff]
        %v344 = vld [vmem:[%s342 + $0x8] sm:$0xff]
        %s345 = scalar_select %p336, 1, 0
        %v346 = vstv %s345
        %vm347 = vcmp.eq.s32.totalorder %v346, 1
        %v348 = vsel %vm347, %v343, 0.0
        %v349 = vsel %vm347, %v344, 0.0
        %v350 = vpack.c.bf16 %v348, %v348
        %v351 = vpack.c.bf16 %v349, %v349
        %v353 = vshrl.u32 %v350, 16
        %v355 = vrot.slane %v353, 7
        %v356 = vshll.u32 %v350, 16
        %v358 = vor.u32 %v355, %v356
        %v359 = vrot.slane %v355, 4
        %v361 = vshrl.u32 %v351, 16
        %v363 = vrot.slane %v361, 7
        %v364 = vshll.u32 %v351, 16
        %v366 = vor.u32 %v363, %v364
        %v367 = vsel %vm299, %v359, %v366
        %v368 = vrot.slane %v363, 4
        %s372 = scalar_lea.vmem [#allocation2], 12
        %v373 = vld [vmem:[%s372] sm:$0xf]
        %v374 = vsel %vm322, %v358, %v373
        %375 = vst [vmem:[%s372] sm:$0xf] %v374
        %376 = vst.msk [vmem:[%s372 + $0x4] sm:$0xf] %vm239, %v367
        %v377 = vld [vmem:[%s372 + $0x8] sm:$0x1]
        %v378 = vsel %vm328, %v368, %v377
        %379 = vst [vmem:[%s372 + $0x8] sm:$0x1] %v378
        %s380 = smul.u32 %s238, 16
        %s381 = scalar_lea.vmem %s236, %s380
        %v382 = vld [vmem:[%s381] sm:$0xff]
        %v383 = vld [vmem:[%s381 + $0x8] sm:$0xff]
        %v384 = vpack.c.bf16 %v382, %v382
        %v385 = vpack.c.bf16 %v383, %v383
        %v387 = vshrl.u32 %v384, 16
        %v389 = vrot.slane %v387, 7
        %v390 = vshll.u32 %v384, 16
        %v392 = vor.u32 %v389, %v390
        %v393 = vrot.slane %v389, 4
        %v395 = vshrl.u32 %v385, 16
        %v397 = vrot.slane %v395, 7
        %v398 = vshll.u32 %v385, 16
        %v400 = vor.u32 %v397, %v398
        %v401 = vsel %vm299, %v393, %v400
        %v402 = vrot.slane %v397, 4
        %s406 = scalar_lea.vmem [#allocation2], 24
        %v407 = vld [vmem:[%s406] sm:$0xf]
        %v408 = vsel %vm322, %v392, %v407
        %409 = vst [vmem:[%s406] sm:$0xf] %v408
        %410 = vst.msk [vmem:[%s406 + $0x4] sm:$0xf] %vm239, %v401
        %v411 = vld [vmem:[%s406 + $0x8] sm:$0x1]
        %v412 = vsel %vm328, %v402, %v411
        %413 = vst [vmem:[%s406 + $0x8] sm:$0x1] %v412
        %s414 = sadd.s32 %s238, 1
        %s415 = smul.u32 %s414, 16
        %s416 = scalar_lea.vmem %s236, %s415
        %v417 = vld [vmem:[%s416] sm:$0xff]
        %v418 = vld [vmem:[%s416 + $0x8] sm:$0xff]
        %v419 = vpack.c.bf16 %v417, %v417
        %v420 = vpack.c.bf16 %v418, %v418
        %v422 = vshrl.u32 %v419, 16
        %v424 = vrot.slane %v422, 7
        %v425 = vshll.u32 %v419, 16
        %v427 = vor.u32 %v424, %v425
        %v428 = vrot.slane %v424, 4
        %v430 = vshrl.u32 %v420, 16
        %v432 = vrot.slane %v430, 7
        %v433 = vshll.u32 %v420, 16
        %v435 = vor.u32 %v432, %v433
        %v436 = vsel %vm299, %v428, %v435
        %v437 = vrot.slane %v432, 4
        %s441 = scalar_lea.vmem [#allocation2], 36
        %v442 = vld [vmem:[%s441] sm:$0xf]
        %v443 = vsel %vm322, %v427, %v442
        %444 = vst [vmem:[%s441] sm:$0xf] %v443
        %445 = vst.msk [vmem:[%s441 + $0x4] sm:$0xf] %vm239, %v436
        %v446 = vld [vmem:[%s441 + $0x8] sm:$0x1]
        %v447 = vsel %vm328, %v437, %v446
        %448 = vst [vmem:[%s441 + $0x8] sm:$0x1] %v447
        %s449 = sadd.s32 %s238, 2
        %s450 = smul.u32 %s449, 16
        %s451 = scalar_lea.vmem %s236, %s450
        %v452 = vld [vmem:[%s451] sm:$0xff]
        %v453 = vld [vmem:[%s451 + $0x8] sm:$0xff]
        %v454 = vpack.c.bf16 %v452, %v452
        %v455 = vpack.c.bf16 %v453, %v453
        %v457 = vshrl.u32 %v454, 16
        %v459 = vrot.slane %v457, 7
        %v460 = vshll.u32 %v454, 16
        %v462 = vor.u32 %v459, %v460
        %v463 = vrot.slane %v459, 4
        %v465 = vshrl.u32 %v455, 16
        %v467 = vrot.slane %v465, 7
        %v468 = vshll.u32 %v455, 16
        %v470 = vor.u32 %v467, %v468
        %v471 = vsel %vm299, %v463, %v470
        %v472 = vrot.slane %v467, 4
        %s476 = scalar_lea.vmem [#allocation2], 48
        %v477 = vld [vmem:[%s476] sm:$0xf]
        %v478 = vsel %vm322, %v462, %v477
        %479 = vst [vmem:[%s476] sm:$0xf] %v478
        %480 = vst.msk [vmem:[%s476 + $0x4] sm:$0xf] %vm239, %v471
        %v481 = vld [vmem:[%s476 + $0x8] sm:$0x1]
        %v482 = vsel %vm328, %v472, %v481
        %483 = vst [vmem:[%s476 + $0x8] sm:$0x1] %v482
        %s484 = sadd.s32 %s238, 3
        %s485 = smul.u32 %s484, 16
        %s486 = scalar_lea.vmem %s236, %s485
        %v487 = vld [vmem:[%s486] sm:$0xff]
        %v488 = vld [vmem:[%s486 + $0x8] sm:$0xff]
        %v489 = vpack.c.bf16 %v487, %v487
        %v490 = vpack.c.bf16 %v488, %v488
        %v492 = vshrl.u32 %v489, 16
        %v494 = vrot.slane %v492, 7
        %v495 = vshll.u32 %v489, 16
        %v497 = vor.u32 %v494, %v495
        %v498 = vrot.slane %v494, 4
        %v500 = vshrl.u32 %v490, 16
        %v502 = vrot.slane %v500, 7
        %v503 = vshll.u32 %v490, 16
        %v505 = vor.u32 %v502, %v503
        %v506 = vsel %vm299, %v498, %v505
        %v507 = vrot.slane %v502, 4
        %s511 = scalar_lea.vmem [#allocation2], 60
        %v512 = vld [vmem:[%s511] sm:$0xf]
        %v513 = vsel %vm322, %v497, %v512
        %514 = vst [vmem:[%s511] sm:$0xf] %v513
        %515 = vst.msk [vmem:[%s511 + $0x4] sm:$0xf] %vm239, %v506
        %v516 = vld [vmem:[%s511 + $0x8] sm:$0x1]
        %v517 = vsel %vm328, %v507, %v516
        %518 = vst [vmem:[%s511 + $0x8] sm:$0x1] %v517
        %s519 = sadd.s32 %s238, 4
        %s520 = smul.u32 %s519, 16
        %s521 = scalar_lea.vmem %s236, %s520
        %v522 = vld [vmem:[%s521] sm:$0xff]
        %v523 = vld [vmem:[%s521 + $0x8] sm:$0xff]
        %v524 = vpack.c.bf16 %v522, %v522
        %v525 = vpack.c.bf16 %v523, %v523
        %v527 = vshrl.u32 %v524, 16
        %v529 = vrot.slane %v527, 7
        %v530 = vshll.u32 %v524, 16
        %v532 = vor.u32 %v529, %v530
        %v533 = vrot.slane %v529, 4
        %v535 = vshrl.u32 %v525, 16
        %v537 = vrot.slane %v535, 7
        %v538 = vshll.u32 %v525, 16
        %v540 = vor.u32 %v537, %v538
        %v541 = vsel %vm299, %v533, %v540
        %v542 = vrot.slane %v537, 4
        %s546 = scalar_lea.vmem [#allocation2], 72
        %v547 = vld [vmem:[%s546] sm:$0xf]
        %v548 = vsel %vm322, %v532, %v547
        %549 = vst [vmem:[%s546] sm:$0xf] %v548
        %550 = vst.msk [vmem:[%s546 + $0x4] sm:$0xf] %vm239, %v541
        %v551 = vld [vmem:[%s546 + $0x8] sm:$0x1]
        %v552 = vsel %vm328, %v542, %v551
        %553 = vst [vmem:[%s546 + $0x8] sm:$0x1] %v552
        %s554 = sadd.s32 %s238, 5
        %s555 = smul.u32 %s554, 16
        %s556 = scalar_lea.vmem %s236, %s555
        %v557 = vld [vmem:[%s556] sm:$0xff]
        %v558 = vld [vmem:[%s556 + $0x8] sm:$0xff]
        %v559 = vpack.c.bf16 %v557, %v557
        %v560 = vpack.c.bf16 %v558, %v558
        %v562 = vshrl.u32 %v559, 16
        %v564 = vrot.slane %v562, 7
        %v565 = vshll.u32 %v559, 16
        %v567 = vor.u32 %v564, %v565
        %v568 = vrot.slane %v564, 4
        %v570 = vshrl.u32 %v560, 16
        %v572 = vrot.slane %v570, 7
        %v573 = vshll.u32 %v560, 16
        %v575 = vor.u32 %v572, %v573
        %v576 = vsel %vm299, %v568, %v575
        %v577 = vrot.slane %v572, 4
        %s581 = scalar_lea.vmem [#allocation2], 84
        %v582 = vld [vmem:[%s581] sm:$0xf]
        %v583 = vsel %vm322, %v567, %v582
        %584 = vst [vmem:[%s581] sm:$0xf] %v583
        %585 = vst.msk [vmem:[%s581 + $0x4] sm:$0xf] %vm239, %v576
        %v586 = vld [vmem:[%s581 + $0x8] sm:$0x1]
        %v587 = vsel %vm328, %v577, %v586
        %588 = vst [vmem:[%s581 + $0x8] sm:$0x1] %v587
        %s589 = sadd.s32 %s238, 6
        %s590 = smul.u32 %s589, 16
        %s591 = scalar_lea.vmem %s236, %s590
        %v592 = vld [vmem:[%s591] sm:$0xff]
        %v593 = vld [vmem:[%s591 + $0x8] sm:$0xff]
        %v594 = vpack.c.bf16 %v592, %v592
        %v595 = vpack.c.bf16 %v593, %v593
        %v597 = vshrl.u32 %v594, 16
        %v599 = vrot.slane %v597, 7
        %v600 = vshll.u32 %v594, 16
        %v602 = vor.u32 %v599, %v600
        %v603 = vrot.slane %v599, 4
        %v605 = vshrl.u32 %v595, 16
        %v607 = vrot.slane %v605, 7
        %v608 = vshll.u32 %v595, 16
        %v610 = vor.u32 %v607, %v608
        %v611 = vsel %vm299, %v603, %v610
        %v612 = vrot.slane %v607, 4
        %s616 = scalar_lea.vmem [#allocation2], 96
        %v617 = vld [vmem:[%s616] sm:$0xf]
        %v618 = vsel %vm322, %v602, %v617
        %619 = vst [vmem:[%s616] sm:$0xf] %v618
        %620 = vst.msk [vmem:[%s616 + $0x4] sm:$0xf] %vm239, %v611
        %v621 = vld [vmem:[%s616 + $0x8] sm:$0x1]
        %v622 = vsel %vm328, %v612, %v621
        %623 = vst [vmem:[%s616 + $0x8] sm:$0x1] %v622
        %s624 = sadd.s32 %s238, 7
        %s625 = smul.u32 %s624, 16
        %s626 = scalar_lea.vmem %s236, %s625
        %v627 = vld [vmem:[%s626] sm:$0xff]
        %v628 = vld [vmem:[%s626 + $0x8] sm:$0xff]
        %v629 = vpack.c.bf16 %v627, %v627
        %v630 = vpack.c.bf16 %v628, %v628
        %v632 = vshrl.u32 %v629, 16
        %v634 = vrot.slane %v632, 7
        %v635 = vshll.u32 %v629, 16
        %v637 = vor.u32 %v634, %v635
        %v638 = vrot.slane %v634, 4
        %v640 = vshrl.u32 %v630, 16
        %v642 = vrot.slane %v640, 7
        %v643 = vshll.u32 %v630, 16
        %v645 = vor.u32 %v642, %v643
        %v646 = vsel %vm299, %v638, %v645
        %v647 = vrot.slane %v642, 4
        %s651 = scalar_lea.vmem [#allocation2], 108
        %v652 = vld [vmem:[%s651] sm:$0xf]
        %v653 = vsel %vm322, %v637, %v652
        %654 = vst [vmem:[%s651] sm:$0xf] %v653
        %655 = vst.msk [vmem:[%s651 + $0x4] sm:$0xf] %vm239, %v646
        %v656 = vld [vmem:[%s651 + $0x8] sm:$0x1]
        %v657 = vsel %vm328, %v647, %v656
        %658 = vst [vmem:[%s651 + $0x8] sm:$0x1] %v657
        %s659 = sadd.s32 %s238, 8
        %p660 = scmp.ge.s32.totalorder %s659, 0
        %p661 = scmp.lt.s32.totalorder %s659, 16
        %p662 = pnand %p660, %p661
        %p663 = pneg %p662
        %p664 = scmp.gt.s32.totalorder %s659, 0
        %s665 = scalar_select %p664, %s659, 0
        %p666 = scmp.lt.s32.totalorder %s665, 15
        %s667 = scalar_select %p666, %s665, 15
        %s668 = smul.u32 %s667, 16
        %s669 = scalar_lea.vmem %s236, %s668
        %v670 = vld [vmem:[%s669] sm:$0xff]
        %v671 = vld [vmem:[%s669 + $0x8] sm:$0xff]
        %s672 = scalar_select %p663, 1, 0
        %v673 = vstv %s672
        %vm674 = vcmp.eq.s32.totalorder %v673, 1
        %v675 = vsel %vm674, %v670, 0.0
        %v676 = vsel %vm674, %v671, 0.0
        %v677 = vpack.c.bf16 %v675, %v675
        %v678 = vpack.c.bf16 %v676, %v676
        %v680 = vshrl.u32 %v677, 16
        %v682 = vrot.slane %v680, 7
        %v683 = vshll.u32 %v677, 16
        %v685 = vor.u32 %v682, %v683
        %v686 = vrot.slane %v682, 4
        %v688 = vshrl.u32 %v678, 16
        %v690 = vrot.slane %v688, 7
        %v691 = vshll.u32 %v678, 16
        %v693 = vor.u32 %v690, %v691
        %v694 = vsel %vm299, %v686, %v693
        %v695 = vrot.slane %v690, 4
        %s699 = scalar_lea.vmem [#allocation2], 120
        %v700 = vld [vmem:[%s699] sm:$0xf]
        %v701 = vsel %vm322, %v685, %v700
        %702 = vst [vmem:[%s699] sm:$0xf] %v701
        %703 = vst.msk [vmem:[%s699 + $0x4] sm:$0xf] %vm239, %v694
        %v704 = vld [vmem:[%s699 + $0x8] sm:$0x1]
        %v705 = vsel %vm328, %v695, %v704
        %706 = vst [vmem:[%s699 + $0x8] sm:$0x1] %v705
        %s707 = sadd.s32 %s238, 9
        %p708 = scmp.ge.s32.totalorder %s707, 0
        %p709 = scmp.lt.s32.totalorder %s707, 16
        %p710 = pnand %p708, %p709
        %p711 = pneg %p710
        %p712 = scmp.gt.s32.totalorder %s707, 0
        %s713 = scalar_select %p712, %s707, 0
        %p714 = scmp.lt.s32.totalorder %s713, 15
        %s715 = scalar_select %p714, %s713, 15
        %s716 = smul.u32 %s715, 16
        %s717 = scalar_lea.vmem %s236, %s716
        %v718 = vld [vmem:[%s717] sm:$0xff]
        %v719 = vld [vmem:[%s717 + $0x8] sm:$0xff]
        %s720 = scalar_select %p711, 1, 0
        %v721 = vstv %s720
        %vm722 = vcmp.eq.s32.totalorder %v721, 1
        %v723 = vsel %vm722, %v718, 0.0
        %v724 = vsel %vm722, %v719, 0.0
        %v725 = vpack.c.bf16 %v723, %v723
        %v726 = vpack.c.bf16 %v724, %v724
        %v728 = vshrl.u32 %v725, 16
        %v730 = vrot.slane %v728, 7
        %v731 = vshll.u32 %v725, 16
        %v733 = vor.u32 %v730, %v731
        %v734 = vrot.slane %v730, 4
        %v736 = vshrl.u32 %v726, 16
        %v738 = vrot.slane %v736, 7
        %v739 = vshll.u32 %v726, 16
        %v741 = vor.u32 %v738, %v739
        %v742 = vsel %vm299, %v734, %v741
        %v743 = vrot.slane %v738, 4
        %s747 = scalar_lea.vmem [#allocation2], 132
        %v748 = vld [vmem:[%s747] sm:$0xf]
        %v749 = vsel %vm322, %v733, %v748
        %750 = vst [vmem:[%s747] sm:$0xf] %v749
        %751 = vst.msk [vmem:[%s747 + $0x4] sm:$0xf] %vm239, %v742
        %v752 = vld [vmem:[%s747 + $0x8] sm:$0x1]
        %v753 = vsel %vm328, %v743, %v752
        %754 = vst [vmem:[%s747 + $0x8] sm:$0x1] %v753
        %v755 = vld [vmem:[#allocation2] sm:$0xf]
        %v756 = vld [vmem:[#allocation2 + $0x4] sm:$0xf]
        %v757 = vld [vmem:[#allocation2 + $0x8] sm:$0x1]
        %v758 = vld [vmem:[#allocation2 + $0xc] sm:$0xf]
        %v759 = vld [vmem:[#allocation2 + $0x10] sm:$0xf]
        %v760 = vld [vmem:[#allocation2 + $0x14] sm:$0x1]
        %v761 = vld [vmem:[#allocation2 + $0x18] sm:$0xf]
        %v762 = vld [vmem:[#allocation2 + $0x1c] sm:$0xf]
        %v763 = vld [vmem:[#allocation2 + $0x20] sm:$0x1]
        %v764 = vld [vmem:[#allocation2 + $0x24] sm:$0xf]
        %v765 = vld [vmem:[#allocation2 + $0x28] sm:$0xf]
        %v766 = vld [vmem:[#allocation2 + $0x2c] sm:$0x1]
        %v767 = vld [vmem:[#allocation2 + $0x30] sm:$0xf]
        %v768 = vld [vmem:[#allocation2 + $0x34] sm:$0xf]
        %v769 = vld [vmem:[#allocation2 + $0x38] sm:$0x1]
        %v770 = vld [vmem:[#allocation2 + $0x3c] sm:$0xf]
        %v771 = vld [vmem:[#allocation2 + $0x40] sm:$0xf]
        %v772 = vld [vmem:[#allocation2 + $0x44] sm:$0x1]
        %v773 = vld [vmem:[#allocation2 + $0x48] sm:$0xf]
        %v774 = vld [vmem:[#allocation2 + $0x4c] sm:$0xf]
        %v775 = vld [vmem:[#allocation2 + $0x50] sm:$0x1]
        %v776 = vld [vmem:[#allocation2 + $0x54] sm:$0xf]
        %v777 = vld [vmem:[#allocation2 + $0x58] sm:$0xf]
        %v778 = vld [vmem:[#allocation2 + $0x5c] sm:$0x1]
        %v779 = vld [vmem:[#allocation2 + $0x60] sm:$0xf]
        %v780 = vld [vmem:[#allocation2 + $0x64] sm:$0xf]
        %v781 = vld [vmem:[#allocation2 + $0x68] sm:$0x1]
        %v782 = vld [vmem:[#allocation2 + $0x6c] sm:$0xf]
        %v783 = vld [vmem:[#allocation2 + $0x70] sm:$0xf]
        %v784 = vld [vmem:[#allocation2 + $0x74] sm:$0x1]
        %v785 = vld [vmem:[#allocation2 + $0x78] sm:$0xf]
        %v786 = vld [vmem:[#allocation2 + $0x7c] sm:$0xf]
        %v787 = vld [vmem:[#allocation2 + $0x80] sm:$0x1]
        %v788 = vld [vmem:[#allocation2 + $0x84] sm:$0xf]
        %v789 = vld [vmem:[#allocation2 + $0x88] sm:$0xf]
        %v790 = vld [vmem:[#allocation2 + $0x8c] sm:$0x1]
        %v791 = vld [vmem:[%s1] sm:$0x3]
        %vm792 = vsmask.f32 3328
        %vm793 = vsmask.f32 7440
        %vm794 = vmor %vm792, %vm793
        %v796 = vshrl.u32 %v755, 16
        %v798 = vrot.slane %v796, 4
        %v799 = vshll.u32 %v755, 16
        %v801 = vrot.slane %v799, 5
        %v802 = vor.u32 %v798, %v801
        %v803 = vrot.slane %v802, 4
        %v805 = vshll.u32 %v756, 16
        %v807 = vrot.slane %v805, 5
        %v808 = vsel %vm794, %v803, %v807
        %v809 = vshrl.u32 %v756, 16
        %v811 = vrot.slane %v809, 4
        %v812 = vor.u32 %v811, %v807
        %v813 = vrot.slane %v812, 4
        %v815 = vshll.u32 %v757, 16
        %v817 = vrot.slane %v815, 5
        %v818 = vsel %vm794, %v813, %v817
        %v820 = vshrl.u32 %v758, 16
        %v822 = vrot.slane %v820, 4
        %v823 = vshll.u32 %v758, 16
        %v825 = vrot.slane %v823, 5
        %v826 = vor.u32 %v822, %v825
        %v827 = vrot.slane %v826, 4
        %v829 = vshll.u32 %v759, 16
        %v831 = vrot.slane %v829, 5
        %v832 = vsel %vm794, %v827, %v831
        %v833 = vshrl.u32 %v759, 16
        %v835 = vrot.slane %v833, 4
        %v836 = vor.u32 %v835, %v831
        %v837 = vrot.slane %v836, 4
        %v839 = vshll.u32 %v760, 16
        %v841 = vrot.slane %v839, 5
        %v842 = vsel %vm794, %v837, %v841
        %v844 = vshrl.u32 %v761, 16
        %v846 = vrot.slane %v844, 4
        %v847 = vshll.u32 %v761, 16
        %v849 = vrot.slane %v847, 5
        %v850 = vor.u32 %v846, %v849
        %v851 = vrot.slane %v850, 4
        %v853 = vshll.u32 %v762, 16
        %v855 = vrot.slane %v853, 5
        %v856 = vsel %vm794, %v851, %v855
        %v857 = vshrl.u32 %v762, 16
        %v859 = vrot.slane %v857, 4
        %v860 = vor.u32 %v859, %v855
        %v861 = vrot.slane %v860, 4
        %v863 = vshll.u32 %v763, 16
        %v865 = vrot.slane %v863, 5
        %v866 = vsel %vm794, %v861, %v865
        %v868 = vshrl.u32 %v764, 16
        %v870 = vrot.slane %v868, 4
        %v871 = vshll.u32 %v764, 16
        %v873 = vrot.slane %v871, 5
        %v874 = vor.u32 %v870, %v873
        %v875 = vrot.slane %v874, 4
        %v877 = vshll.u32 %v765, 16
        %v879 = vrot.slane %v877, 5
        %v880 = vsel %vm794, %v875, %v879
        %v881 = vshrl.u32 %v765, 16
        %v883 = vrot.slane %v881, 4
        %v884 = vor.u32 %v883, %v879
        %v885 = vrot.slane %v884, 4
        %v887 = vshll.u32 %v766, 16
        %v889 = vrot.slane %v887, 5
        %v890 = vsel %vm794, %v885, %v889
        %v892 = vshrl.u32 %v767, 16
        %v894 = vrot.slane %v892, 4
        %v895 = vshll.u32 %v767, 16
        %v897 = vrot.slane %v895, 5
        %v898 = vor.u32 %v894, %v897
        %v899 = vrot.slane %v898, 4
        %v901 = vshll.u32 %v768, 16
        %v903 = vrot.slane %v901, 5
        %v904 = vsel %vm794, %v899, %v903
        %v905 = vshrl.u32 %v768, 16
        %v907 = vrot.slane %v905, 4
        %v908 = vor.u32 %v907, %v903
        %v909 = vrot.slane %v908, 4
        %v911 = vshll.u32 %v769, 16
        %v913 = vrot.slane %v911, 5
        %v914 = vsel %vm794, %v909, %v913
        %v916 = vshrl.u32 %v770, 16
        %v918 = vrot.slane %v916, 4
        %v919 = vshll.u32 %v770, 16
        %v921 = vrot.slane %v919, 5
        %v922 = vor.u32 %v918, %v921
        %v923 = vrot.slane %v922, 4
        %v925 = vshll.u32 %v771, 16
        %v927 = vrot.slane %v925, 5
        %v928 = vsel %vm794, %v923, %v927
        %v929 = vshrl.u32 %v771, 16
        %v931 = vrot.slane %v929, 4
        %v932 = vor.u32 %v931, %v927
        %v933 = vrot.slane %v932, 4
        %v935 = vshll.u32 %v772, 16
        %v937 = vrot.slane %v935, 5
        %v938 = vsel %vm794, %v933, %v937
        %v940 = vshrl.u32 %v773, 16
        %v942 = vrot.slane %v940, 4
        %v943 = vshll.u32 %v773, 16
        %v945 = vrot.slane %v943, 5
        %v946 = vor.u32 %v942, %v945
        %v947 = vrot.slane %v946, 4
        %v949 = vshll.u32 %v774, 16
        %v951 = vrot.slane %v949, 5
        %v952 = vsel %vm794, %v947, %v951
        %v953 = vshrl.u32 %v774, 16
        %v955 = vrot.slane %v953, 4
        %v956 = vor.u32 %v955, %v951
        %v957 = vrot.slane %v956, 4
        %v959 = vshll.u32 %v775, 16
        %v961 = vrot.slane %v959, 5
        %v962 = vsel %vm794, %v957, %v961
        %v964 = vshrl.u32 %v776, 16
        %v966 = vrot.slane %v964, 4
        %v967 = vshll.u32 %v776, 16
        %v969 = vrot.slane %v967, 5
        %v970 = vor.u32 %v966, %v969
        %v971 = vrot.slane %v970, 4
        %v973 = vshll.u32 %v777, 16
        %v975 = vrot.slane %v973, 5
        %v976 = vsel %vm794, %v971, %v975
        %v977 = vshrl.u32 %v777, 16
        %v979 = vrot.slane %v977, 4
        %v980 = vor.u32 %v979, %v975
        %v981 = vrot.slane %v980, 4
        %v983 = vshll.u32 %v778, 16
        %v985 = vrot.slane %v983, 5
        %v986 = vsel %vm794, %v981, %v985
        %v988 = vshrl.u32 %v779, 16
        %v990 = vrot.slane %v988, 4
        %v991 = vshll.u32 %v779, 16
        %v993 = vrot.slane %v991, 5
        %v994 = vor.u32 %v990, %v993
        %v995 = vrot.slane %v994, 4
        %v997 = vshll.u32 %v780, 16
        %v999 = vrot.slane %v997, 5
        %v1000 = vsel %vm794, %v995, %v999
        %v1001 = vshrl.u32 %v780, 16
        %v1003 = vrot.slane %v1001, 4
        %v1004 = vor.u32 %v1003, %v999
        %v1005 = vrot.slane %v1004, 4
        %v1007 = vshll.u32 %v781, 16
        %v1009 = vrot.slane %v1007, 5
        %v1010 = vsel %vm794, %v1005, %v1009
        %v1012 = vshrl.u32 %v782, 16
        %v1014 = vrot.slane %v1012, 4
        %v1015 = vshll.u32 %v782, 16
        %v1017 = vrot.slane %v1015, 5
        %v1018 = vor.u32 %v1014, %v1017
        %v1019 = vrot.slane %v1018, 4
        %v1021 = vshll.u32 %v783, 16
        %v1023 = vrot.slane %v1021, 5
        %v1024 = vsel %vm794, %v1019, %v1023
        %v1025 = vshrl.u32 %v783, 16
        %v1027 = vrot.slane %v1025, 4
        %v1028 = vor.u32 %v1027, %v1023
        %v1029 = vrot.slane %v1028, 4
        %v1031 = vshll.u32 %v784, 16
        %v1033 = vrot.slane %v1031, 5
        %v1034 = vsel %vm794, %v1029, %v1033
        %s1035 = scalar_lea.vmem %s1, 2
        %v1036 = vld [vmem:[%s1035] sm:$0x3]
        %v1037 = vunpack.c.l.b16 %v808
        %v1038 = vunpack.c.l.b16 %v818
        %v1039 = vunpack.c.l.b16 %v832
        %v1040 = vunpack.c.l.b16 %v842
        %v1041 = vunpack.c.l.b16 %v856
        %v1042 = vunpack.c.l.b16 %v866
        %v1043 = vunpack.c.l.b16 %v880
        %v1044 = vunpack.c.l.b16 %v890
        %v1045 = vunpack.c.l.b16 %v904
        %v1046 = vunpack.c.l.b16 %v914
        %v1047 = vunpack.c.l.b16 %v928
        %v1048 = vunpack.c.l.b16 %v938
        %v1049 = vunpack.c.l.b16 %v952
        %v1050 = vunpack.c.l.b16 %v962
        %v1051 = vunpack.c.l.b16 %v976
        %v1052 = vunpack.c.l.b16 %v986
        %v1053 = vunpack.c.l.b16 %v1000
        %v1054 = vunpack.c.l.b16 %v1010
        %v1055 = vunpack.c.l.b16 %v1024
        %v1056 = vunpack.c.l.b16 %v1034
        %v1057 = vpack.c.b16 %v1038, %v1037
        %v1058 = vpack.c.b16 %v1040, %v1039
        %v1059 = vpack.c.b16 %v1042, %v1041
        %v1060 = vpack.c.b16 %v1044, %v1043
        %v1061 = vpack.c.b16 %v1046, %v1045
        %v1062 = vpack.c.b16 %v1048, %v1047
        %v1063 = vpack.c.b16 %v1050, %v1049
        %v1064 = vpack.c.b16 %v1052, %v1051
        %v1065 = vpack.c.b16 %v1054, %v1053
        %v1066 = vpack.c.b16 %v1056, %v1055
        %vm1067 = vcmask 31744
        %v1069 = vsel %vm1067, %v1057, 0
        %v1072 = vsel %vm1067, %v1058, 0
        %v1075 = vsel %vm1067, %v1059, 0
        %v1078 = vsel %vm1067, %v1060, 0
        %v1081 = vsel %vm1067, %v1061, 0
        %v1084 = vsel %vm1067, %v1062, 0
        %v1087 = vsel %vm1067, %v1063, 0
        %v1090 = vsel %vm1067, %v1064, 0
        %v1093 = vsel %vm1067, %v1065, 0
        %v1096 = vsel %vm1067, %v1066, 0
        %vm1098 = vcmask 1041408
        %v1100 = vsel %vm1098, %v1036, 0
        %1102 = vmatpush.bf16.msra.mxu0 0
        %1103 = vmatpush.bf16.msra.mxu0 0
        %1104 = vmatpush.bf16.msra.mxu0 0
        %1105 = vmatpush.bf16.msra.mxu0 0
        %1106 = vmatpush.bf16.msra.mxu0 0
        %1107 = vmatpush.bf16.msra.mxu0 0
        %1108 = vmatpush.bf16.msra.mxu0 0
        %1109 = vmatpush.bf16.msra.mxu0 %v1100
        %1110 = vmatmul.bf16.gmra.mxu0 %v1069
        %v1111 = vpop.f32.mrf.mxu0
        %v1112 = vadd.f32 0.0, %v1111
        %v1113 = vpop.f32.mrf.mxu0
        %v1114 = vadd.f32 0.0, %v1113
        %1115 = vmatmul.bf16.gmra.mxu0 %v1072
        %v1116 = vpop.f32.mrf.mxu0
        %v1117 = vadd.f32 0.0, %v1116
        %v1118 = vpop.f32.mrf.mxu0
        %v1119 = vadd.f32 0.0, %v1118
        %1120 = vmatmul.bf16.gmra.mxu0 %v1075
        %v1121 = vpop.f32.mrf.mxu0
        %v1122 = vadd.f32 0.0, %v1121
        %v1123 = vpop.f32.mrf.mxu0
        %v1124 = vadd.f32 0.0, %v1123
        %1125 = vmatmul.bf16.gmra.mxu0 %v1078
        %v1126 = vpop.f32.mrf.mxu0
        %v1127 = vadd.f32 0.0, %v1126
        %v1128 = vpop.f32.mrf.mxu0
        %v1129 = vadd.f32 0.0, %v1128
        %1130 = vmatmul.bf16.gmra.mxu0 %v1081
        %v1131 = vpop.f32.mrf.mxu0
        %v1132 = vadd.f32 0.0, %v1131
        %v1133 = vpop.f32.mrf.mxu0
        %v1134 = vadd.f32 0.0, %v1133
        %1135 = vmatmul.bf16.gmra.mxu0 %v1084
        %v1136 = vpop.f32.mrf.mxu0
        %v1137 = vadd.f32 0.0, %v1136
        %v1138 = vpop.f32.mrf.mxu0
        %v1139 = vadd.f32 0.0, %v1138
        %1140 = vmatmul.bf16.gmra.mxu0 %v1087
        %v1141 = vpop.f32.mrf.mxu0
        %v1142 = vadd.f32 0.0, %v1141
        %v1143 = vpop.f32.mrf.mxu0
        %v1144 = vadd.f32 0.0, %v1143
        %1145 = vmatmul.bf16.gmra.mxu0 %v1090
        %v1146 = vpop.f32.mrf.mxu0
        %v1147 = vadd.f32 0.0, %v1146
        %v1148 = vpop.f32.mrf.mxu0
        %v1149 = vadd.f32 0.0, %v1148
        %1150 = vmatmul.bf16.gmra.mxu0 %v1093
        %v1151 = vpop.f32.mrf.mxu0
        %v1152 = vadd.f32 0.0, %v1151
        %v1153 = vpop.f32.mrf.mxu0
        %v1154 = vadd.f32 0.0, %v1153
        %1155 = vmatmul.bf16.gmra.mxu0 %v1096
        %v1156 = vpop.f32.mrf.mxu0
        %v1157 = vadd.f32 0.0, %v1156
        %v1158 = vpop.f32.mrf.mxu0
        %v1159 = vadd.f32 0.0, %v1158
        %1160 = vdwg.mxu0
        %v1181 = vunpack.c.l.b16 %v755
        %v1182 = vunpack.c.l.b16 %v756
        %v1183 = vunpack.c.l.b16 %v758
        %v1184 = vunpack.c.l.b16 %v759
        %v1185 = vunpack.c.l.b16 %v761
        %v1186 = vunpack.c.l.b16 %v762
        %v1187 = vunpack.c.l.b16 %v764
        %v1188 = vunpack.c.l.b16 %v765
        %v1189 = vunpack.c.l.b16 %v767
        %v1190 = vunpack.c.l.b16 %v768
        %v1191 = vunpack.c.l.b16 %v770
        %v1192 = vunpack.c.l.b16 %v771
        %v1193 = vunpack.c.l.b16 %v773
        %v1194 = vunpack.c.l.b16 %v774
        %v1195 = vunpack.c.l.b16 %v776
        %v1196 = vunpack.c.l.b16 %v777
        %v1197 = vunpack.c.l.b16 %v779
        %v1198 = vunpack.c.l.b16 %v780
        %v1199 = vunpack.c.l.b16 %v782
        %v1200 = vunpack.c.l.b16 %v783
        %v1201 = vpack.c.b16 %v1182, %v1181
        %v1202 = vpack.c.b16 %v1184, %v1183
        %v1203 = vpack.c.b16 %v1186, %v1185
        %v1204 = vpack.c.b16 %v1188, %v1187
        %v1205 = vpack.c.b16 %v1190, %v1189
        %v1206 = vpack.c.b16 %v1192, %v1191
        %v1207 = vpack.c.b16 %v1194, %v1193
        %v1208 = vpack.c.b16 %v1196, %v1195
        %v1209 = vpack.c.b16 %v1198, %v1197
        %v1210 = vpack.c.b16 %v1200, %v1199
        %v1212 = vsel %vm1067, %v1201, 0
        %v1215 = vsel %vm1067, %v1202, 0
        %v1218 = vsel %vm1067, %v1203, 0
        %v1221 = vsel %vm1067, %v1204, 0
        %v1224 = vsel %vm1067, %v1205, 0
        %v1227 = vsel %vm1067, %v1206, 0
        %v1230 = vsel %vm1067, %v1207, 0
        %v1233 = vsel %vm1067, %v1208, 0
        %v1236 = vsel %vm1067, %v1209, 0
        %v1239 = vsel %vm1067, %v1210, 0
        %v1242 = vsel %vm1098, %v791, 0
        %1244 = vmatpush.bf16.msra.mxu0 0
        %1245 = vmatpush.bf16.msra.mxu0 0
        %1246 = vmatpush.bf16.msra.mxu0 0
        %1247 = vmatpush.bf16.msra.mxu0 0
        %1248 = vmatpush.bf16.msra.mxu0 0
        %1249 = vmatpush.bf16.msra.mxu0 0
        %1250 = vmatpush.bf16.msra.mxu0 0
        %1251 = vmatpush.bf16.msra.mxu0 %v1242
        %1252 = vmatmul.bf16.gmra.mxu0 %v1212
        %v1253 = vpop.f32.mrf.mxu0
        %v1254 = vadd.f32 %v1112, %v1253
        %v1255 = vpop.f32.mrf.mxu0
        %v1256 = vadd.f32 %v1114, %v1255
        %1257 = vmatmul.bf16.gmra.mxu0 %v1215
        %v1258 = vpop.f32.mrf.mxu0
        %v1259 = vadd.f32 %v1117, %v1258
        %v1260 = vpop.f32.mrf.mxu0
        %v1261 = vadd.f32 %v1119, %v1260
        %1262 = vmatmul.bf16.gmra.mxu0 %v1218
        %v1263 = vpop.f32.mrf.mxu0
        %v1264 = vadd.f32 %v1122, %v1263
        %v1265 = vpop.f32.mrf.mxu0
        %v1266 = vadd.f32 %v1124, %v1265
        %1267 = vmatmul.bf16.gmra.mxu0 %v1221
        %v1268 = vpop.f32.mrf.mxu0
        %v1269 = vadd.f32 %v1127, %v1268
        %v1270 = vpop.f32.mrf.mxu0
        %v1271 = vadd.f32 %v1129, %v1270
        %1272 = vmatmul.bf16.gmra.mxu0 %v1224
        %v1273 = vpop.f32.mrf.mxu0
        %v1274 = vadd.f32 %v1132, %v1273
        %v1275 = vpop.f32.mrf.mxu0
        %v1276 = vadd.f32 %v1134, %v1275
        %1277 = vmatmul.bf16.gmra.mxu0 %v1227
        %v1278 = vpop.f32.mrf.mxu0
        %v1279 = vadd.f32 %v1137, %v1278
        %v1280 = vpop.f32.mrf.mxu0
        %v1281 = vadd.f32 %v1139, %v1280
        %1282 = vmatmul.bf16.gmra.mxu0 %v1230
        %v1283 = vpop.f32.mrf.mxu0
        %v1284 = vadd.f32 %v1142, %v1283
        %v1285 = vpop.f32.mrf.mxu0
        %v1286 = vadd.f32 %v1144, %v1285
        %1287 = vmatmul.bf16.gmra.mxu0 %v1233
        %v1288 = vpop.f32.mrf.mxu0
        %v1289 = vadd.f32 %v1147, %v1288
        %v1290 = vpop.f32.mrf.mxu0
        %v1291 = vadd.f32 %v1149, %v1290
        %1292 = vmatmul.bf16.gmra.mxu0 %v1236
        %v1293 = vpop.f32.mrf.mxu0
        %v1294 = vadd.f32 %v1152, %v1293
        %v1295 = vpop.f32.mrf.mxu0
        %v1296 = vadd.f32 %v1154, %v1295
        %1297 = vmatmul.bf16.gmra.mxu0 %v1239
        %v1298 = vpop.f32.mrf.mxu0
        %v1299 = vadd.f32 %v1157, %v1298
        %v1300 = vpop.f32.mrf.mxu0
        %v1301 = vadd.f32 %v1159, %v1300
        %1302 = vdwg.mxu0
        %vm1313 = vcmask 1042432
        %vm1314 = vcmask 1046532
        %vm1315 = vmor %vm1313, %vm1314
        %v1316 = vrot.slane %v755, 5
        %v1317 = vrot.slane %v1316, 4
        %v1318 = vrot.slane %v756, 5
        %v1319 = vsel %vm1315, %v1317, %v1318
        %v1320 = vrot.slane %v1318, 4
        %v1321 = vrot.slane %v757, 5
        %v1322 = vsel %vm1315, %v1320, %v1321
        %v1323 = vrot.slane %v758, 5
        %v1324 = vrot.slane %v1323, 4
        %v1325 = vrot.slane %v759, 5
        %v1326 = vsel %vm1315, %v1324, %v1325
        %v1327 = vrot.slane %v1325, 4
        %v1328 = vrot.slane %v760, 5
        %v1329 = vsel %vm1315, %v1327, %v1328
        %v1330 = vrot.slane %v761, 5
        %v1331 = vrot.slane %v1330, 4
        %v1332 = vrot.slane %v762, 5
        %v1333 = vsel %vm1315, %v1331, %v1332
        %v1334 = vrot.slane %v1332, 4
        %v1335 = vrot.slane %v763, 5
        %v1336 = vsel %vm1315, %v1334, %v1335
        %v1337 = vrot.slane %v764, 5
        %v1338 = vrot.slane %v1337, 4
        %v1339 = vrot.slane %v765, 5
        %v1340 = vsel %vm1315, %v1338, %v1339
        %v1341 = vrot.slane %v1339, 4
        %v1342 = vrot.slane %v766, 5
        %v1343 = vsel %vm1315, %v1341, %v1342
        %v1344 = vrot.slane %v767, 5
        %v1345 = vrot.slane %v1344, 4
        %v1346 = vrot.slane %v768, 5
        %v1347 = vsel %vm1315, %v1345, %v1346
        %v1348 = vrot.slane %v1346, 4
        %v1349 = vrot.slane %v769, 5
        %v1350 = vsel %vm1315, %v1348, %v1349
        %v1351 = vrot.slane %v770, 5
        %v1352 = vrot.slane %v1351, 4
        %v1353 = vrot.slane %v771, 5
        %v1354 = vsel %vm1315, %v1352, %v1353
        %v1355 = vrot.slane %v1353, 4
        %v1356 = vrot.slane %v772, 5
        %v1357 = vsel %vm1315, %v1355, %v1356
        %v1358 = vrot.slane %v773, 5
        %v1359 = vrot.slane %v1358, 4
        %v1360 = vrot.slane %v774, 5
        %v1361 = vsel %vm1315, %v1359, %v1360
        %v1362 = vrot.slane %v1360, 4
        %v1363 = vrot.slane %v775, 5
        %v1364 = vsel %vm1315, %v1362, %v1363
        %v1365 = vrot.slane %v776, 5
        %v1366 = vrot.slane %v1365, 4
        %v1367 = vrot.slane %v777, 5
        %v1368 = vsel %vm1315, %v1366, %v1367
        %v1369 = vrot.slane %v1367, 4
        %v1370 = vrot.slane %v778, 5
        %v1371 = vsel %vm1315, %v1369, %v1370
        %v1372 = vrot.slane %v779, 5
        %v1373 = vrot.slane %v1372, 4
        %v1374 = vrot.slane %v780, 5
        %v1375 = vsel %vm1315, %v1373, %v1374
        %v1376 = vrot.slane %v1374, 4
        %v1377 = vrot.slane %v781, 5
        %v1378 = vsel %vm1315, %v1376, %v1377
        %v1379 = vrot.slane %v782, 5
        %v1380 = vrot.slane %v1379, 4
        %v1381 = vrot.slane %v783, 5
        %v1382 = vsel %vm1315, %v1380, %v1381
        %v1383 = vrot.slane %v1381, 4
        %v1384 = vrot.slane %v784, 5
        %v1385 = vsel %vm1315, %v1383, %v1384
        %s1386 = scalar_lea.vmem %s1, 4
        %v1387 = vld [vmem:[%s1386] sm:$0x3]
        %v1388 = vunpack.c.l.b16 %v1319
        %v1389 = vunpack.c.l.b16 %v1322
        %v1390 = vunpack.c.l.b16 %v1326
        %v1391 = vunpack.c.l.b16 %v1329
        %v1392 = vunpack.c.l.b16 %v1333
        %v1393 = vunpack.c.l.b16 %v1336
        %v1394 = vunpack.c.l.b16 %v1340
        %v1395 = vunpack.c.l.b16 %v1343
        %v1396 = vunpack.c.l.b16 %v1347
        %v1397 = vunpack.c.l.b16 %v1350
        %v1398 = vunpack.c.l.b16 %v1354
        %v1399 = vunpack.c.l.b16 %v1357
        %v1400 = vunpack.c.l.b16 %v1361
        %v1401 = vunpack.c.l.b16 %v1364
        %v1402 = vunpack.c.l.b16 %v1368
        %v1403 = vunpack.c.l.b16 %v1371
        %v1404 = vunpack.c.l.b16 %v1375
        %v1405 = vunpack.c.l.b16 %v1378
        %v1406 = vunpack.c.l.b16 %v1382
        %v1407 = vunpack.c.l.b16 %v1385
        %v1408 = vpack.c.b16 %v1389, %v1388
        %v1409 = vpack.c.b16 %v1391, %v1390
        %v1410 = vpack.c.b16 %v1393, %v1392
        %v1411 = vpack.c.b16 %v1395, %v1394
        %v1412 = vpack.c.b16 %v1397, %v1396
        %v1413 = vpack.c.b16 %v1399, %v1398
        %v1414 = vpack.c.b16 %v1401, %v1400
        %v1415 = vpack.c.b16 %v1403, %v1402
        %v1416 = vpack.c.b16 %v1405, %v1404
        %v1417 = vpack.c.b16 %v1407, %v1406
        %v1419 = vsel %vm1067, %v1408, 0
        %v1422 = vsel %vm1067, %v1409, 0
        %v1425 = vsel %vm1067, %v1410, 0
        %v1428 = vsel %vm1067, %v1411, 0
        %v1431 = vsel %vm1067, %v1412, 0
        %v1434 = vsel %vm1067, %v1413, 0
        %v1437 = vsel %vm1067, %v1414, 0
        %v1440 = vsel %vm1067, %v1415, 0
        %v1443 = vsel %vm1067, %v1416, 0
        %v1446 = vsel %vm1067, %v1417, 0
        %v1449 = vsel %vm1098, %v1387, 0
        %1451 = vmatpush.bf16.msra.mxu0 0
        %1452 = vmatpush.bf16.msra.mxu0 0
        %1453 = vmatpush.bf16.msra.mxu0 0
        %1454 = vmatpush.bf16.msra.mxu0 0
        %1455 = vmatpush.bf16.msra.mxu0 0
        %1456 = vmatpush.bf16.msra.mxu0 0
        %1457 = vmatpush.bf16.msra.mxu0 0
        %1458 = vmatpush.bf16.msra.mxu0 %v1449
        %1459 = vmatmul.bf16.gmra.mxu0 %v1419
        %v1460 = vpop.f32.mrf.mxu0
        %v1461 = vadd.f32 0.0, %v1460
        %v1462 = vpop.f32.mrf.mxu0
        %v1463 = vadd.f32 0.0, %v1462
        %1464 = vmatmul.bf16.gmra.mxu0 %v1422
        %v1465 = vpop.f32.mrf.mxu0
        %v1466 = vadd.f32 0.0, %v1465
        %v1467 = vpop.f32.mrf.mxu0
        %v1468 = vadd.f32 0.0, %v1467
        %1469 = vmatmul.bf16.gmra.mxu0 %v1425
        %v1470 = vpop.f32.mrf.mxu0
        %v1471 = vadd.f32 0.0, %v1470
        %v1472 = vpop.f32.mrf.mxu0
        %v1473 = vadd.f32 0.0, %v1472
        %1474 = vmatmul.bf16.gmra.mxu0 %v1428
        %v1475 = vpop.f32.mrf.mxu0
        %v1476 = vadd.f32 0.0, %v1475
        %v1477 = vpop.f32.mrf.mxu0
        %v1478 = vadd.f32 0.0, %v1477
        %1479 = vmatmul.bf16.gmra.mxu0 %v1431
        %v1480 = vpop.f32.mrf.mxu0
        %v1481 = vadd.f32 0.0, %v1480
        %v1482 = vpop.f32.mrf.mxu0
        %v1483 = vadd.f32 0.0, %v1482
        %1484 = vmatmul.bf16.gmra.mxu0 %v1434
        %v1485 = vpop.f32.mrf.mxu0
        %v1486 = vadd.f32 0.0, %v1485
        %v1487 = vpop.f32.mrf.mxu0
        %v1488 = vadd.f32 0.0, %v1487
        %1489 = vmatmul.bf16.gmra.mxu0 %v1437
        %v1490 = vpop.f32.mrf.mxu0
        %v1491 = vadd.f32 0.0, %v1490
        %v1492 = vpop.f32.mrf.mxu0
        %v1493 = vadd.f32 0.0, %v1492
        %1494 = vmatmul.bf16.gmra.mxu0 %v1440
        %v1495 = vpop.f32.mrf.mxu0
        %v1496 = vadd.f32 0.0, %v1495
        %v1497 = vpop.f32.mrf.mxu0
        %v1498 = vadd.f32 0.0, %v1497
        %1499 = vmatmul.bf16.gmra.mxu0 %v1443
        %v1500 = vpop.f32.mrf.mxu0
        %v1501 = vadd.f32 0.0, %v1500
        %v1502 = vpop.f32.mrf.mxu0
        %v1503 = vadd.f32 0.0, %v1502
        %1504 = vmatmul.bf16.gmra.mxu0 %v1446
        %v1505 = vpop.f32.mrf.mxu0
        %v1506 = vadd.f32 0.0, %v1505
        %v1507 = vpop.f32.mrf.mxu0
        %v1508 = vadd.f32 0.0, %v1507
        %1509 = vdwg.mxu0
        %v1510 = vadd.f32 %v1254, %v1461
        %v1511 = vadd.f32 %v1256, %v1463
        %v1512 = vadd.f32 %v1259, %v1466
        %v1513 = vadd.f32 %v1261, %v1468
        %v1514 = vadd.f32 %v1264, %v1471
        %v1515 = vadd.f32 %v1266, %v1473
        %v1516 = vadd.f32 %v1269, %v1476
        %v1517 = vadd.f32 %v1271, %v1478
        %v1518 = vadd.f32 %v1274, %v1481
        %v1519 = vadd.f32 %v1276, %v1483
        %v1520 = vadd.f32 %v1279, %v1486
        %v1521 = vadd.f32 %v1281, %v1488
        %v1522 = vadd.f32 %v1284, %v1491
        %v1523 = vadd.f32 %v1286, %v1493
        %v1524 = vadd.f32 %v1289, %v1496
        %v1525 = vadd.f32 %v1291, %v1498
        %v1526 = vadd.f32 %v1294, %v1501
        %v1527 = vadd.f32 %v1296, %v1503
        %v1528 = vadd.f32 %v1299, %v1506
        %v1529 = vadd.f32 %v1301, %v1508
        %s1530 = scalar_lea.vmem %s1, 6
        %v1531 = vld [vmem:[%s1530] sm:$0x3]
        %v1534 = vunpack.c.l.b16 %v785
        %v1535 = vunpack.c.l.b16 %v786
        %v1536 = vpack.c.b16 %v1535, %v1534
        %v1538 = vsel %vm1067, %v1536, 0
        %v1541 = vsel %vm1098, %v1531, 0
        %1543 = vmatpush.bf16.msra.mxu0 0
        %1544 = vmatpush.bf16.msra.mxu0 0
        %1545 = vmatpush.bf16.msra.mxu0 0
        %1546 = vmatpush.bf16.msra.mxu0 0
        %1547 = vmatpush.bf16.msra.mxu0 0
        %1548 = vmatpush.bf16.msra.mxu0 0
        %1549 = vmatpush.bf16.msra.mxu0 0
        %1550 = vmatpush.bf16.msra.mxu0 %v1541
        %1551 = vmatmul.bf16.gmra.mxu0 %v1215
        %v1552 = vpop.f32.mrf.mxu0
        %v1553 = vadd.f32 0.0, %v1552
        %v1554 = vpop.f32.mrf.mxu0
        %v1555 = vadd.f32 0.0, %v1554
        %1556 = vmatmul.bf16.gmra.mxu0 %v1218
        %v1557 = vpop.f32.mrf.mxu0
        %v1558 = vadd.f32 0.0, %v1557
        %v1559 = vpop.f32.mrf.mxu0
        %v1560 = vadd.f32 0.0, %v1559
        %1561 = vmatmul.bf16.gmra.mxu0 %v1221
        %v1562 = vpop.f32.mrf.mxu0
        %v1563 = vadd.f32 0.0, %v1562
        %v1564 = vpop.f32.mrf.mxu0
        %v1565 = vadd.f32 0.0, %v1564
        %1566 = vmatmul.bf16.gmra.mxu0 %v1224
        %v1567 = vpop.f32.mrf.mxu0
        %v1568 = vadd.f32 0.0, %v1567
        %v1569 = vpop.f32.mrf.mxu0
        %v1570 = vadd.f32 0.0, %v1569
        %1571 = vmatmul.bf16.gmra.mxu0 %v1227
        %v1572 = vpop.f32.mrf.mxu0
        %v1573 = vadd.f32 0.0, %v1572
        %v1574 = vpop.f32.mrf.mxu0
        %v1575 = vadd.f32 0.0, %v1574
        %1576 = vmatmul.bf16.gmra.mxu0 %v1230
        %v1577 = vpop.f32.mrf.mxu0
        %v1578 = vadd.f32 0.0, %v1577
        %v1579 = vpop.f32.mrf.mxu0
        %v1580 = vadd.f32 0.0, %v1579
        %1581 = vmatmul.bf16.gmra.mxu0 %v1233
        %v1582 = vpop.f32.mrf.mxu0
        %v1583 = vadd.f32 0.0, %v1582
        %v1584 = vpop.f32.mrf.mxu0
        %v1585 = vadd.f32 0.0, %v1584
        %1586 = vmatmul.bf16.gmra.mxu0 %v1236
        %v1587 = vpop.f32.mrf.mxu0
        %v1588 = vadd.f32 0.0, %v1587
        %v1589 = vpop.f32.mrf.mxu0
        %v1590 = vadd.f32 0.0, %v1589
        %1591 = vmatmul.bf16.gmra.mxu0 %v1239
        %v1592 = vpop.f32.mrf.mxu0
        %v1593 = vadd.f32 0.0, %v1592
        %v1594 = vpop.f32.mrf.mxu0
        %v1595 = vadd.f32 0.0, %v1594
        %1596 = vmatmul.bf16.gmra.mxu0 %v1538
        %v1597 = vpop.f32.mrf.mxu0
        %v1598 = vadd.f32 0.0, %v1597
        %v1599 = vpop.f32.mrf.mxu0
        %v1600 = vadd.f32 0.0, %v1599
        %1601 = vdwg.mxu0
        %v1602 = vadd.f32 %v1510, %v1553
        %v1603 = vadd.f32 %v1511, %v1555
        %v1604 = vadd.f32 %v1512, %v1558
        %v1605 = vadd.f32 %v1513, %v1560
        %v1606 = vadd.f32 %v1514, %v1563
        %v1607 = vadd.f32 %v1515, %v1565
        %v1608 = vadd.f32 %v1516, %v1568
        %v1609 = vadd.f32 %v1517, %v1570
        %v1610 = vadd.f32 %v1518, %v1573
        %v1611 = vadd.f32 %v1519, %v1575
        %v1612 = vadd.f32 %v1520, %v1578
        %v1613 = vadd.f32 %v1521, %v1580
        %v1614 = vadd.f32 %v1522, %v1583
        %v1615 = vadd.f32 %v1523, %v1585
        %v1616 = vadd.f32 %v1524, %v1588
        %v1617 = vadd.f32 %v1525, %v1590
        %v1618 = vadd.f32 %v1526, %v1593
        %v1619 = vadd.f32 %v1527, %v1595
        %v1620 = vadd.f32 %v1528, %v1598
        %v1621 = vadd.f32 %v1529, %v1600
        %v1623 = vshrl.u32 %v785, 16
        %v1625 = vrot.slane %v1623, 4
        %v1626 = vshll.u32 %v785, 16
        %v1628 = vrot.slane %v1626, 5
        %v1629 = vor.u32 %v1625, %v1628
        %v1630 = vrot.slane %v1629, 4
        %v1632 = vshll.u32 %v786, 16
        %v1634 = vrot.slane %v1632, 5
        %v1635 = vsel %vm794, %v1630, %v1634
        %v1636 = vshrl.u32 %v786, 16
        %v1638 = vrot.slane %v1636, 4
        %v1639 = vor.u32 %v1638, %v1634
        %v1640 = vrot.slane %v1639, 4
        %v1642 = vshll.u32 %v787, 16
        %v1644 = vrot.slane %v1642, 5
        %v1645 = vsel %vm794, %v1640, %v1644
        %s1646 = scalar_lea.vmem %s1, 8
        %v1647 = vld [vmem:[%s1646] sm:$0x3]
        %v1648 = vunpack.c.l.b16 %v1635
        %v1649 = vunpack.c.l.b16 %v1645
        %v1650 = vpack.c.b16 %v1649, %v1648
        %v1652 = vsel %vm1067, %v1650, 0
        %v1655 = vsel %vm1098, %v1647, 0
        %1657 = vmatpush.bf16.msra.mxu0 0
        %1658 = vmatpush.bf16.msra.mxu0 0
        %1659 = vmatpush.bf16.msra.mxu0 0
        %1660 = vmatpush.bf16.msra.mxu0 0
        %1661 = vmatpush.bf16.msra.mxu0 0
        %1662 = vmatpush.bf16.msra.mxu0 0
        %1663 = vmatpush.bf16.msra.mxu0 0
        %1664 = vmatpush.bf16.msra.mxu0 %v1655
        %1665 = vmatmul.bf16.gmra.mxu0 %v1072
        %v1666 = vpop.f32.mrf.mxu0
        %v1667 = vadd.f32 0.0, %v1666
        %v1668 = vpop.f32.mrf.mxu0
        %v1669 = vadd.f32 0.0, %v1668
        %1670 = vmatmul.bf16.gmra.mxu0 %v1075
        %v1671 = vpop.f32.mrf.mxu0
        %v1672 = vadd.f32 0.0, %v1671
        %v1673 = vpop.f32.mrf.mxu0
        %v1674 = vadd.f32 0.0, %v1673
        %1675 = vmatmul.bf16.gmra.mxu0 %v1078
        %v1676 = vpop.f32.mrf.mxu0
        %v1677 = vadd.f32 0.0, %v1676
        %v1678 = vpop.f32.mrf.mxu0
        %v1679 = vadd.f32 0.0, %v1678
        %1680 = vmatmul.bf16.gmra.mxu0 %v1081
        %v1681 = vpop.f32.mrf.mxu0
        %v1682 = vadd.f32 0.0, %v1681
        %v1683 = vpop.f32.mrf.mxu0
        %v1684 = vadd.f32 0.0, %v1683
        %1685 = vmatmul.bf16.gmra.mxu0 %v1084
        %v1686 = vpop.f32.mrf.mxu0
        %v1687 = vadd.f32 0.0, %v1686
        %v1688 = vpop.f32.mrf.mxu0
        %v1689 = vadd.f32 0.0, %v1688
        %1690 = vmatmul.bf16.gmra.mxu0 %v1087
        %v1691 = vpop.f32.mrf.mxu0
        %v1692 = vadd.f32 0.0, %v1691
        %v1693 = vpop.f32.mrf.mxu0
        %v1694 = vadd.f32 0.0, %v1693
        %1695 = vmatmul.bf16.gmra.mxu0 %v1090
        %v1696 = vpop.f32.mrf.mxu0
        %v1697 = vadd.f32 0.0, %v1696
        %v1698 = vpop.f32.mrf.mxu0
        %v1699 = vadd.f32 0.0, %v1698
        %1700 = vmatmul.bf16.gmra.mxu0 %v1093
        %v1701 = vpop.f32.mrf.mxu0
        %v1702 = vadd.f32 0.0, %v1701
        %v1703 = vpop.f32.mrf.mxu0
        %v1704 = vadd.f32 0.0, %v1703
        %1705 = vmatmul.bf16.gmra.mxu0 %v1096
        %v1706 = vpop.f32.mrf.mxu0
        %v1707 = vadd.f32 0.0, %v1706
        %v1708 = vpop.f32.mrf.mxu0
        %v1709 = vadd.f32 0.0, %v1708
        %1710 = vmatmul.bf16.gmra.mxu0 %v1652
        %v1711 = vpop.f32.mrf.mxu0
        %v1712 = vadd.f32 0.0, %v1711
        %v1713 = vpop.f32.mrf.mxu0
        %v1714 = vadd.f32 0.0, %v1713
        %1715 = vdwg.mxu0
        %v1716 = vadd.f32 %v1602, %v1667
        %v1717 = vadd.f32 %v1603, %v1669
        %v1718 = vadd.f32 %v1604, %v1672
        %v1719 = vadd.f32 %v1605, %v1674
        %v1720 = vadd.f32 %v1606, %v1677
        %v1721 = vadd.f32 %v1607, %v1679
        %v1722 = vadd.f32 %v1608, %v1682
        %v1723 = vadd.f32 %v1609, %v1684
        %v1724 = vadd.f32 %v1610, %v1687
        %v1725 = vadd.f32 %v1611, %v1689
        %v1726 = vadd.f32 %v1612, %v1692
        %v1727 = vadd.f32 %v1613, %v1694
        %v1728 = vadd.f32 %v1614, %v1697
        %v1729 = vadd.f32 %v1615, %v1699
        %v1730 = vadd.f32 %v1616, %v1702
        %v1731 = vadd.f32 %v1617, %v1704
        %v1732 = vadd.f32 %v1618, %v1707
        %v1733 = vadd.f32 %v1619, %v1709
        %v1734 = vadd.f32 %v1620, %v1712
        %v1735 = vadd.f32 %v1621, %v1714
        %v1737 = vrot.slane %v785, 5
        %v1738 = vrot.slane %v1737, 4
        %v1739 = vrot.slane %v786, 5
        %v1740 = vsel %vm1315, %v1738, %v1739
        %v1741 = vrot.slane %v1739, 4
        %v1742 = vrot.slane %v787, 5
        %v1743 = vsel %vm1315, %v1741, %v1742
        %s1744 = scalar_lea.vmem %s1, 10
        %v1745 = vld [vmem:[%s1744] sm:$0x3]
        %v1746 = vunpack.c.l.b16 %v1740
        %v1747 = vunpack.c.l.b16 %v1743
        %v1748 = vpack.c.b16 %v1747, %v1746
        %v1750 = vsel %vm1067, %v1748, 0
        %v1753 = vsel %vm1098, %v1745, 0
        %1755 = vmatpush.bf16.msra.mxu0 0
        %1756 = vmatpush.bf16.msra.mxu0 0
        %1757 = vmatpush.bf16.msra.mxu0 0
        %1758 = vmatpush.bf16.msra.mxu0 0
        %1759 = vmatpush.bf16.msra.mxu0 0
        %1760 = vmatpush.bf16.msra.mxu0 0
        %1761 = vmatpush.bf16.msra.mxu0 0
        %1762 = vmatpush.bf16.msra.mxu0 %v1753
        %1763 = vmatmul.bf16.gmra.mxu0 %v1422
        %v1764 = vpop.f32.mrf.mxu0
        %v1765 = vadd.f32 0.0, %v1764
        %v1766 = vpop.f32.mrf.mxu0
        %v1767 = vadd.f32 0.0, %v1766
        %1768 = vmatmul.bf16.gmra.mxu0 %v1425
        %v1769 = vpop.f32.mrf.mxu0
        %v1770 = vadd.f32 0.0, %v1769
        %v1771 = vpop.f32.mrf.mxu0
        %v1772 = vadd.f32 0.0, %v1771
        %1773 = vmatmul.bf16.gmra.mxu0 %v1428
        %v1774 = vpop.f32.mrf.mxu0
        %v1775 = vadd.f32 0.0, %v1774
        %v1776 = vpop.f32.mrf.mxu0
        %v1777 = vadd.f32 0.0, %v1776
        %1778 = vmatmul.bf16.gmra.mxu0 %v1431
        %v1779 = vpop.f32.mrf.mxu0
        %v1780 = vadd.f32 0.0, %v1779
        %v1781 = vpop.f32.mrf.mxu0
        %v1782 = vadd.f32 0.0, %v1781
        %1783 = vmatmul.bf16.gmra.mxu0 %v1434
        %v1784 = vpop.f32.mrf.mxu0
        %v1785 = vadd.f32 0.0, %v1784
        %v1786 = vpop.f32.mrf.mxu0
        %v1787 = vadd.f32 0.0, %v1786
        %1788 = vmatmul.bf16.gmra.mxu0 %v1437
        %v1789 = vpop.f32.mrf.mxu0
        %v1790 = vadd.f32 0.0, %v1789
        %v1791 = vpop.f32.mrf.mxu0
        %v1792 = vadd.f32 0.0, %v1791
        %1793 = vmatmul.bf16.gmra.mxu0 %v1440
        %v1794 = vpop.f32.mrf.mxu0
        %v1795 = vadd.f32 0.0, %v1794
        %v1796 = vpop.f32.mrf.mxu0
        %v1797 = vadd.f32 0.0, %v1796
        %1798 = vmatmul.bf16.gmra.mxu0 %v1443
        %v1799 = vpop.f32.mrf.mxu0
        %v1800 = vadd.f32 0.0, %v1799
        %v1801 = vpop.f32.mrf.mxu0
        %v1802 = vadd.f32 0.0, %v1801
        %1803 = vmatmul.bf16.gmra.mxu0 %v1446
        %v1804 = vpop.f32.mrf.mxu0
        %v1805 = vadd.f32 0.0, %v1804
        %v1806 = vpop.f32.mrf.mxu0
        %v1807 = vadd.f32 0.0, %v1806
        %1808 = vmatmul.bf16.gmra.mxu0 %v1750
        %v1809 = vpop.f32.mrf.mxu0
        %v1810 = vadd.f32 0.0, %v1809
        %v1811 = vpop.f32.mrf.mxu0
        %v1812 = vadd.f32 0.0, %v1811
        %1813 = vdwg.mxu0
        %v1814 = vadd.f32 %v1716, %v1765
        %v1815 = vadd.f32 %v1717, %v1767
        %v1816 = vadd.f32 %v1718, %v1770
        %v1817 = vadd.f32 %v1719, %v1772
        %v1818 = vadd.f32 %v1720, %v1775
        %v1819 = vadd.f32 %v1721, %v1777
        %v1820 = vadd.f32 %v1722, %v1780
        %v1821 = vadd.f32 %v1723, %v1782
        %v1822 = vadd.f32 %v1724, %v1785
        %v1823 = vadd.f32 %v1725, %v1787
        %v1824 = vadd.f32 %v1726, %v1790
        %v1825 = vadd.f32 %v1727, %v1792
        %v1826 = vadd.f32 %v1728, %v1795
        %v1827 = vadd.f32 %v1729, %v1797
        %v1828 = vadd.f32 %v1730, %v1800
        %v1829 = vadd.f32 %v1731, %v1802
        %v1830 = vadd.f32 %v1732, %v1805
        %v1831 = vadd.f32 %v1733, %v1807
        %v1832 = vadd.f32 %v1734, %v1810
        %v1833 = vadd.f32 %v1735, %v1812
        %s1834 = scalar_lea.vmem %s1, 12
        %v1835 = vld [vmem:[%s1834] sm:$0x3]
        %v1838 = vunpack.c.l.b16 %v788
        %v1839 = vunpack.c.l.b16 %v789
        %v1840 = vpack.c.b16 %v1839, %v1838
        %v1842 = vsel %vm1067, %v1840, 0
        %v1845 = vsel %vm1098, %v1835, 0
        %1847 = vmatpush.bf16.msra.mxu0 0
        %1848 = vmatpush.bf16.msra.mxu0 0
        %1849 = vmatpush.bf16.msra.mxu0 0
        %1850 = vmatpush.bf16.msra.mxu0 0
        %1851 = vmatpush.bf16.msra.mxu0 0
        %1852 = vmatpush.bf16.msra.mxu0 0
        %1853 = vmatpush.bf16.msra.mxu0 0
        %1854 = vmatpush.bf16.msra.mxu0 %v1845
        %1855 = vmatmul.bf16.gmra.mxu0 %v1218
        %v1856 = vpop.f32.mrf.mxu0
        %v1857 = vadd.f32 0.0, %v1856
        %v1858 = vpop.f32.mrf.mxu0
        %v1859 = vadd.f32 0.0, %v1858
        %1860 = vmatmul.bf16.gmra.mxu0 %v1221
        %v1861 = vpop.f32.mrf.mxu0
        %v1862 = vadd.f32 0.0, %v1861
        %v1863 = vpop.f32.mrf.mxu0
        %v1864 = vadd.f32 0.0, %v1863
        %1865 = vmatmul.bf16.gmra.mxu0 %v1224
        %v1866 = vpop.f32.mrf.mxu0
        %v1867 = vadd.f32 0.0, %v1866
        %v1868 = vpop.f32.mrf.mxu0
        %v1869 = vadd.f32 0.0, %v1868
        %1870 = vmatmul.bf16.gmra.mxu0 %v1227
        %v1871 = vpop.f32.mrf.mxu0
        %v1872 = vadd.f32 0.0, %v1871
        %v1873 = vpop.f32.mrf.mxu0
        %v1874 = vadd.f32 0.0, %v1873
        %1875 = vmatmul.bf16.gmra.mxu0 %v1230
        %v1876 = vpop.f32.mrf.mxu0
        %v1877 = vadd.f32 0.0, %v1876
        %v1878 = vpop.f32.mrf.mxu0
        %v1879 = vadd.f32 0.0, %v1878
        %1880 = vmatmul.bf16.gmra.mxu0 %v1233
        %v1881 = vpop.f32.mrf.mxu0
        %v1882 = vadd.f32 0.0, %v1881
        %v1883 = vpop.f32.mrf.mxu0
        %v1884 = vadd.f32 0.0, %v1883
        %1885 = vmatmul.bf16.gmra.mxu0 %v1236
        %v1886 = vpop.f32.mrf.mxu0
        %v1887 = vadd.f32 0.0, %v1886
        %v1888 = vpop.f32.mrf.mxu0
        %v1889 = vadd.f32 0.0, %v1888
        %1890 = vmatmul.bf16.gmra.mxu0 %v1239
        %v1891 = vpop.f32.mrf.mxu0
        %v1892 = vadd.f32 0.0, %v1891
        %v1893 = vpop.f32.mrf.mxu0
        %v1894 = vadd.f32 0.0, %v1893
        %1895 = vmatmul.bf16.gmra.mxu0 %v1538
        %v1896 = vpop.f32.mrf.mxu0
        %v1897 = vadd.f32 0.0, %v1896
        %v1898 = vpop.f32.mrf.mxu0
        %v1899 = vadd.f32 0.0, %v1898
        %1900 = vmatmul.bf16.gmra.mxu0 %v1842
        %v1901 = vpop.f32.mrf.mxu0
        %v1902 = vadd.f32 0.0, %v1901
        %v1903 = vpop.f32.mrf.mxu0
        %v1904 = vadd.f32 0.0, %v1903
        %1905 = vdwg.mxu0
        %v1906 = vadd.f32 %v1814, %v1857
        %v1907 = vadd.f32 %v1815, %v1859
        %v1908 = vadd.f32 %v1816, %v1862
        %v1909 = vadd.f32 %v1817, %v1864
        %v1910 = vadd.f32 %v1818, %v1867
        %v1911 = vadd.f32 %v1819, %v1869
        %v1912 = vadd.f32 %v1820, %v1872
        %v1913 = vadd.f32 %v1821, %v1874
        %v1914 = vadd.f32 %v1822, %v1877
        %v1915 = vadd.f32 %v1823, %v1879
        %v1916 = vadd.f32 %v1824, %v1882
        %v1917 = vadd.f32 %v1825, %v1884
        %v1918 = vadd.f32 %v1826, %v1887
        %v1919 = vadd.f32 %v1827, %v1889
        %v1920 = vadd.f32 %v1828, %v1892
        %v1921 = vadd.f32 %v1829, %v1894
        %v1922 = vadd.f32 %v1830, %v1897
        %v1923 = vadd.f32 %v1831, %v1899
        %v1924 = vadd.f32 %v1832, %v1902
        %v1925 = vadd.f32 %v1833, %v1904
        %v1927 = vshrl.u32 %v788, 16
        %v1929 = vrot.slane %v1927, 4
        %v1930 = vshll.u32 %v788, 16
        %v1932 = vrot.slane %v1930, 5
        %v1933 = vor.u32 %v1929, %v1932
        %v1934 = vrot.slane %v1933, 4
        %v1936 = vshll.u32 %v789, 16
        %v1938 = vrot.slane %v1936, 5
        %v1939 = vsel %vm794, %v1934, %v1938
        %v1940 = vshrl.u32 %v789, 16
        %v1942 = vrot.slane %v1940, 4
        %v1943 = vor.u32 %v1942, %v1938
        %v1944 = vrot.slane %v1943, 4
        %v1946 = vshll.u32 %v790, 16
        %v1948 = vrot.slane %v1946, 5
        %v1949 = vsel %vm794, %v1944, %v1948
        %s1950 = scalar_lea.vmem %s1, 14
        %v1951 = vld [vmem:[%s1950] sm:$0x3]
        %v1952 = vunpack.c.l.b16 %v1939
        %v1953 = vunpack.c.l.b16 %v1949
        %v1954 = vpack.c.b16 %v1953, %v1952
        %v1956 = vsel %vm1067, %v1954, 0
        %v1959 = vsel %vm1098, %v1951, 0
        %1961 = vmatpush.bf16.msra.mxu0 0
        %1962 = vmatpush.bf16.msra.mxu0 0
        %1963 = vmatpush.bf16.msra.mxu0 0
        %1964 = vmatpush.bf16.msra.mxu0 0
        %1965 = vmatpush.bf16.msra.mxu0 0
        %1966 = vmatpush.bf16.msra.mxu0 0
        %1967 = vmatpush.bf16.msra.mxu0 0
        %1968 = vmatpush.bf16.msra.mxu0 %v1959
        %1969 = vmatmul.bf16.gmra.mxu0 %v1075
        %v1970 = vpop.f32.mrf.mxu0
        %v1971 = vadd.f32 0.0, %v1970
        %v1972 = vpop.f32.mrf.mxu0
        %v1973 = vadd.f32 0.0, %v1972
        %1974 = vmatmul.bf16.gmra.mxu0 %v1078
        %v1975 = vpop.f32.mrf.mxu0
        %v1976 = vadd.f32 0.0, %v1975
        %v1977 = vpop.f32.mrf.mxu0
        %v1978 = vadd.f32 0.0, %v1977
        %1979 = vmatmul.bf16.gmra.mxu0 %v1081
        %v1980 = vpop.f32.mrf.mxu0
        %v1981 = vadd.f32 0.0, %v1980
        %v1982 = vpop.f32.mrf.mxu0
        %v1983 = vadd.f32 0.0, %v1982
        %1984 = vmatmul.bf16.gmra.mxu0 %v1084
        %v1985 = vpop.f32.mrf.mxu0
        %v1986 = vadd.f32 0.0, %v1985
        %v1987 = vpop.f32.mrf.mxu0
        %v1988 = vadd.f32 0.0, %v1987
        %1989 = vmatmul.bf16.gmra.mxu0 %v1087
        %v1990 = vpop.f32.mrf.mxu0
        %v1991 = vadd.f32 0.0, %v1990
        %v1992 = vpop.f32.mrf.mxu0
        %v1993 = vadd.f32 0.0, %v1992
        %1994 = vmatmul.bf16.gmra.mxu0 %v1090
        %v1995 = vpop.f32.mrf.mxu0
        %v1996 = vadd.f32 0.0, %v1995
        %v1997 = vpop.f32.mrf.mxu0
        %v1998 = vadd.f32 0.0, %v1997
        %1999 = vmatmul.bf16.gmra.mxu0 %v1093
        %v2000 = vpop.f32.mrf.mxu0
        %v2001 = vadd.f32 0.0, %v2000
        %v2002 = vpop.f32.mrf.mxu0
        %v2003 = vadd.f32 0.0, %v2002
        %2004 = vmatmul.bf16.gmra.mxu0 %v1096
        %v2005 = vpop.f32.mrf.mxu0
        %v2006 = vadd.f32 0.0, %v2005
        %v2007 = vpop.f32.mrf.mxu0
        %v2008 = vadd.f32 0.0, %v2007
        %2009 = vmatmul.bf16.gmra.mxu0 %v1652
        %v2010 = vpop.f32.mrf.mxu0
        %v2011 = vadd.f32 0.0, %v2010
        %v2012 = vpop.f32.mrf.mxu0
        %v2013 = vadd.f32 0.0, %v2012
        %2014 = vmatmul.bf16.gmra.mxu0 %v1956
        %v2015 = vpop.f32.mrf.mxu0
        %v2016 = vadd.f32 0.0, %v2015
        %v2017 = vpop.f32.mrf.mxu0
        %v2018 = vadd.f32 0.0, %v2017
        %2019 = vdwg.mxu0
        %v2020 = vadd.f32 %v1906, %v1971
        %v2021 = vadd.f32 %v1907, %v1973
        %v2022 = vadd.f32 %v1908, %v1976
        %v2023 = vadd.f32 %v1909, %v1978
        %v2024 = vadd.f32 %v1910, %v1981
        %v2025 = vadd.f32 %v1911, %v1983
        %v2026 = vadd.f32 %v1912, %v1986
        %v2027 = vadd.f32 %v1913, %v1988
        %v2028 = vadd.f32 %v1914, %v1991
        %v2029 = vadd.f32 %v1915, %v1993
        %v2030 = vadd.f32 %v1916, %v1996
        %v2031 = vadd.f32 %v1917, %v1998
        %v2032 = vadd.f32 %v1918, %v2001
        %v2033 = vadd.f32 %v1919, %v2003
        %v2034 = vadd.f32 %v1920, %v2006
        %v2035 = vadd.f32 %v1921, %v2008
        %v2036 = vadd.f32 %v1922, %v2011
        %v2037 = vadd.f32 %v1923, %v2013
        %v2038 = vadd.f32 %v1924, %v2016
        %v2039 = vadd.f32 %v1925, %v2018
        %v2041 = vrot.slane %v788, 5
        %v2042 = vrot.slane %v2041, 4
        %v2043 = vrot.slane %v789, 5
        %v2044 = vsel %vm1315, %v2042, %v2043
        %v2045 = vrot.slane %v2043, 4
        %v2046 = vrot.slane %v790, 5
        %v2047 = vsel %vm1315, %v2045, %v2046
        %s2048 = scalar_lea.vmem %s1, 16
        %v2049 = vld [vmem:[%s2048] sm:$0x3]
        %v2050 = vunpack.c.l.b16 %v2044
        %v2051 = vunpack.c.l.b16 %v2047
        %v2052 = vpack.c.b16 %v2051, %v2050
        %v2054 = vsel %vm1067, %v2052, 0
        %v2057 = vsel %vm1098, %v2049, 0
        %2059 = vmatpush.bf16.msra.mxu0 0
        %2060 = vmatpush.bf16.msra.mxu0 0
        %2061 = vmatpush.bf16.msra.mxu0 0
        %2062 = vmatpush.bf16.msra.mxu0 0
        %2063 = vmatpush.bf16.msra.mxu0 0
        %2064 = vmatpush.bf16.msra.mxu0 0
        %2065 = vmatpush.bf16.msra.mxu0 0
        %2066 = vmatpush.bf16.msra.mxu0 %v2057
        %2067 = vmatmul.bf16.gmra.mxu0 %v1425
        %v2068 = vpop.f32.mrf.mxu0
        %v2069 = vadd.f32 0.0, %v2068
        %v2070 = vpop.f32.mrf.mxu0
        %v2071 = vadd.f32 0.0, %v2070
        %2072 = vmatmul.bf16.gmra.mxu0 %v1428
        %v2073 = vpop.f32.mrf.mxu0
        %v2074 = vadd.f32 0.0, %v2073
        %v2075 = vpop.f32.mrf.mxu0
        %v2076 = vadd.f32 0.0, %v2075
        %2077 = vmatmul.bf16.gmra.mxu0 %v1431
        %v2078 = vpop.f32.mrf.mxu0
        %v2079 = vadd.f32 0.0, %v2078
        %v2080 = vpop.f32.mrf.mxu0
        %v2081 = vadd.f32 0.0, %v2080
        %2082 = vmatmul.bf16.gmra.mxu0 %v1434
        %v2083 = vpop.f32.mrf.mxu0
        %v2084 = vadd.f32 0.0, %v2083
        %v2085 = vpop.f32.mrf.mxu0
        %v2086 = vadd.f32 0.0, %v2085
        %2087 = vmatmul.bf16.gmra.mxu0 %v1437
        %v2088 = vpop.f32.mrf.mxu0
        %v2089 = vadd.f32 0.0, %v2088
        %v2090 = vpop.f32.mrf.mxu0
        %v2091 = vadd.f32 0.0, %v2090
        %2092 = vmatmul.bf16.gmra.mxu0 %v1440
        %v2093 = vpop.f32.mrf.mxu0
        %v2094 = vadd.f32 0.0, %v2093
        %v2095 = vpop.f32.mrf.mxu0
        %v2096 = vadd.f32 0.0, %v2095
        %2097 = vmatmul.bf16.gmra.mxu0 %v1443
        %v2098 = vpop.f32.mrf.mxu0
        %v2099 = vadd.f32 0.0, %v2098
        %v2100 = vpop.f32.mrf.mxu0
        %v2101 = vadd.f32 0.0, %v2100
        %2102 = vmatmul.bf16.gmra.mxu0 %v1446
        %v2103 = vpop.f32.mrf.mxu0
        %v2104 = vadd.f32 0.0, %v2103
        %v2105 = vpop.f32.mrf.mxu0
        %v2106 = vadd.f32 0.0, %v2105
        %2107 = vmatmul.bf16.gmra.mxu0 %v1750
        %v2108 = vpop.f32.mrf.mxu0
        %v2109 = vadd.f32 0.0, %v2108
        %v2110 = vpop.f32.mrf.mxu0
        %v2111 = vadd.f32 0.0, %v2110
        %2112 = vmatmul.bf16.gmra.mxu0 %v2054
        %v2113 = vpop.f32.mrf.mxu0
        %v2114 = vadd.f32 0.0, %v2113
        %v2115 = vpop.f32.mrf.mxu0
        %v2116 = vadd.f32 0.0, %v2115
        %2117 = vdwg.mxu0
        %v2118 = vadd.f32 %v2020, %v2069
        %v2119 = vadd.f32 %v2021, %v2071
        %v2120 = vadd.f32 %v2022, %v2074
        %v2121 = vadd.f32 %v2023, %v2076
        %v2122 = vadd.f32 %v2024, %v2079
        %v2123 = vadd.f32 %v2025, %v2081
        %v2124 = vadd.f32 %v2026, %v2084
        %v2125 = vadd.f32 %v2027, %v2086
        %v2126 = vadd.f32 %v2028, %v2089
        %v2127 = vadd.f32 %v2029, %v2091
        %v2128 = vadd.f32 %v2030, %v2094
        %v2129 = vadd.f32 %v2031, %v2096
        %v2130 = vadd.f32 %v2032, %v2099
        %v2131 = vadd.f32 %v2033, %v2101
        %v2132 = vadd.f32 %v2034, %v2104
        %v2133 = vadd.f32 %v2035, %v2106
        %v2134 = vadd.f32 %v2036, %v2109
        %v2135 = vadd.f32 %v2037, %v2111
        %v2136 = vadd.f32 %v2038, %v2114
        %v2137 = vadd.f32 %v2039, %v2116
        %v2138 = vld [vmem:[%s2] sm:$0x1]
        %v2140 = vperm.slane %v2138, 0
        %v2142 = vadd.f32 %v2118, %v2140
        %v2143 = vadd.f32 %v2119, %v2140
        %v2144 = vadd.f32 %v2120, %v2140
        %v2145 = vadd.f32 %v2121, %v2140
        %v2146 = vadd.f32 %v2122, %v2140
        %v2147 = vadd.f32 %v2123, %v2140
        %v2148 = vadd.f32 %v2124, %v2140
        %v2149 = vadd.f32 %v2125, %v2140
        %v2150 = vadd.f32 %v2126, %v2140
        %v2151 = vadd.f32 %v2127, %v2140
        %v2152 = vadd.f32 %v2128, %v2140
        %v2153 = vadd.f32 %v2129, %v2140
        %v2154 = vadd.f32 %v2130, %v2140
        %v2155 = vadd.f32 %v2131, %v2140
        %v2156 = vadd.f32 %v2132, %v2140
        %v2157 = vadd.f32 %v2133, %v2140
        %v2158 = vadd.f32 %v2134, %v2140
        %v2159 = vadd.f32 %v2135, %v2140
        %v2160 = vadd.f32 %v2136, %v2140
        %v2161 = vadd.f32 %v2137, %v2140
        %v2162 = vmax.f32 %v2142, 0.0
        %v2163 = vmax.f32 %v2143, 0.0
        %v2164 = vmax.f32 %v2144, 0.0
        %v2165 = vmax.f32 %v2145, 0.0
        %v2166 = vmax.f32 %v2146, 0.0
        %v2167 = vmax.f32 %v2147, 0.0
        %v2168 = vmax.f32 %v2148, 0.0
        %v2169 = vmax.f32 %v2149, 0.0
        %v2170 = vmax.f32 %v2150, 0.0
        %v2171 = vmax.f32 %v2151, 0.0
        %v2172 = vmax.f32 %v2152, 0.0
        %v2173 = vmax.f32 %v2153, 0.0
        %v2174 = vmax.f32 %v2154, 0.0
        %v2175 = vmax.f32 %v2155, 0.0
        %v2176 = vmax.f32 %v2156, 0.0
        %v2177 = vmax.f32 %v2157, 0.0
        %v2178 = vmax.f32 %v2158, 0.0
        %v2179 = vmax.f32 %v2159, 0.0
        %v2180 = vmax.f32 %v2160, 0.0
        %v2181 = vmax.f32 %v2161, 0.0
        %s2182 = ssub.s32 %s238, 1
        %v2183 = vstv %s2182
        %v2184 = vadd.s32 %v2183, 1
        %v2185 = vadd.s32 %v2183, 2
        %v2186 = vadd.s32 %v2183, 3
        %v2187 = vadd.s32 %v2183, 4
        %v2188 = vadd.s32 %v2183, 5
        %v2189 = vadd.s32 %v2183, 6
        %v2190 = vadd.s32 %v2183, 7
        %v2191 = vadd.s32 %v2183, 8
        %v2192 = vadd.s32 %v2183, 9
        %vm2193 = vcmp.ge.s32.totalorder %v2183, 0
        %vm2194 = vcmp.ge.s32.totalorder %v2184, 0
        %vm2195 = vcmp.ge.s32.totalorder %v2185, 0
        %vm2196 = vcmp.ge.s32.totalorder %v2186, 0
        %vm2197 = vcmp.ge.s32.totalorder %v2187, 0
        %vm2198 = vcmp.ge.s32.totalorder %v2188, 0
        %vm2199 = vcmp.ge.s32.totalorder %v2189, 0
        %vm2200 = vcmp.ge.s32.totalorder %v2190, 0
        %vm2201 = vcmp.ge.s32.totalorder %v2191, 0
        %vm2202 = vcmp.ge.s32.totalorder %v2192, 0
        %vm2203 = vcmp.lt.s32.totalorder %v2183, 16
        %vm2204 = vcmp.lt.s32.totalorder %v2184, 16
        %vm2205 = vcmp.lt.s32.totalorder %v2185, 16
        %vm2206 = vcmp.lt.s32.totalorder %v2186, 16
        %vm2207 = vcmp.lt.s32.totalorder %v2187, 16
        %vm2208 = vcmp.lt.s32.totalorder %v2188, 16
        %vm2209 = vcmp.lt.s32.totalorder %v2189, 16
        %vm2210 = vcmp.lt.s32.totalorder %v2190, 16
        %vm2211 = vcmp.lt.s32.totalorder %v2191, 16
        %vm2212 = vcmp.lt.s32.totalorder %v2192, 16
        %vm2213 = vmand %vm2193, %vm2203
        %vm2214 = vmand %vm2194, %vm2204
        %vm2215 = vmand %vm2195, %vm2205
        %vm2216 = vmand %vm2196, %vm2206
        %vm2217 = vmand %vm2197, %vm2207
        %vm2218 = vmand %vm2198, %vm2208
        %vm2219 = vmand %vm2199, %vm2209
        %vm2220 = vmand %vm2200, %vm2210
        %vm2221 = vmand %vm2201, %vm2211
        %vm2222 = vmand %vm2202, %vm2212
        %v2223 = vsel %vm2213, %v2162, 0.0
        %v2224 = vsel %vm2213, %v2163, 0.0
        %v2225 = vsel %vm2214, %v2164, 0.0
        %v2226 = vsel %vm2214, %v2165, 0.0
        %v2227 = vsel %vm2215, %v2166, 0.0
        %v2228 = vsel %vm2215, %v2167, 0.0
        %v2229 = vsel %vm2216, %v2168, 0.0
        %v2230 = vsel %vm2216, %v2169, 0.0
        %v2231 = vsel %vm2217, %v2170, 0.0
        %v2232 = vsel %vm2217, %v2171, 0.0
        %v2233 = vsel %vm2218, %v2172, 0.0
        %v2234 = vsel %vm2218, %v2173, 0.0
        %v2235 = vsel %vm2219, %v2174, 0.0
        %v2236 = vsel %vm2219, %v2175, 0.0
        %v2237 = vsel %vm2220, %v2176, 0.0
        %v2238 = vsel %vm2220, %v2177, 0.0
        %v2239 = vsel %vm2221, %v2178, 0.0
        %v2240 = vsel %vm2221, %v2179, 0.0
        %v2241 = vsel %vm2222, %v2180, 0.0
        %v2242 = vsel %vm2222, %v2181, 0.0
        %2243 = vst.msk [vmem:[#allocation3] sm:$0xf] %vm239, 0
        %2244 = vst.msk [vmem:[#allocation3 + $0x4] sm:$0xf] %vm239, 0
        %2245 = vst.msk [vmem:[#allocation3 + $0x8] sm:$0x1] %vm242, 0
        %2246 = vst.msk [vmem:[#allocation3 + $0xc] sm:$0xf] %vm239, 0
        %2247 = vst.msk [vmem:[#allocation3 + $0x10] sm:$0xf] %vm239, 0
        %2248 = vst.msk [vmem:[#allocation3 + $0x14] sm:$0x1] %vm242, 0
        %2249 = vst.msk [vmem:[#allocation3 + $0x18] sm:$0xf] %vm239, 0
        %2250 = vst.msk [vmem:[#allocation3 + $0x1c] sm:$0xf] %vm239, 0
        %2251 = vst.msk [vmem:[#allocation3 + $0x20] sm:$0x1] %vm242, 0
        %2252 = vst.msk [vmem:[#allocation3 + $0x24] sm:$0xf] %vm239, 0
        %2253 = vst.msk [vmem:[#allocation3 + $0x28] sm:$0xf] %vm239, 0
        %2254 = vst.msk [vmem:[#allocation3 + $0x2c] sm:$0x1] %vm242, 0
        %2255 = vst.msk [vmem:[#allocation3 + $0x30] sm:$0xf] %vm239, 0
        %2256 = vst.msk [vmem:[#allocation3 + $0x34] sm:$0xf] %vm239, 0
        %2257 = vst.msk [vmem:[#allocation3 + $0x38] sm:$0x1] %vm242, 0
        %2258 = vst.msk [vmem:[#allocation3 + $0x3c] sm:$0xf] %vm239, 0
        %2259 = vst.msk [vmem:[#allocation3 + $0x40] sm:$0xf] %vm239, 0
        %2260 = vst.msk [vmem:[#allocation3 + $0x44] sm:$0x1] %vm242, 0
        %2261 = vst.msk [vmem:[#allocation3 + $0x48] sm:$0xf] %vm239, 0
        %2262 = vst.msk [vmem:[#allocation3 + $0x4c] sm:$0xf] %vm239, 0
        %2263 = vst.msk [vmem:[#allocation3 + $0x50] sm:$0x1] %vm242, 0
        %2264 = vst.msk [vmem:[#allocation3 + $0x54] sm:$0xf] %vm239, 0
        %2265 = vst.msk [vmem:[#allocation3 + $0x58] sm:$0xf] %vm239, 0
        %2266 = vst.msk [vmem:[#allocation3 + $0x5c] sm:$0x1] %vm242, 0
        %2267 = vst.msk [vmem:[#allocation3 + $0x60] sm:$0xf] %vm239, 0
        %2268 = vst.msk [vmem:[#allocation3 + $0x64] sm:$0xf] %vm239, 0
        %2269 = vst.msk [vmem:[#allocation3 + $0x68] sm:$0x1] %vm242, 0
        %2270 = vst.msk [vmem:[#allocation3 + $0x6c] sm:$0xf] %vm239, 0
        %2271 = vst.msk [vmem:[#allocation3 + $0x70] sm:$0xf] %vm239, 0
        %2272 = vst.msk [vmem:[#allocation3 + $0x74] sm:$0x1] %vm242, 0
        %v2273 = vpack.c.bf16 %v2223, %v2223
        %v2274 = vpack.c.bf16 %v2224, %v2224
        %v2275 = vpack.c.bf16 %v2225, %v2225
        %v2276 = vpack.c.bf16 %v2226, %v2226
        %v2277 = vpack.c.bf16 %v2227, %v2227
        %v2278 = vpack.c.bf16 %v2228, %v2228
        %v2279 = vpack.c.bf16 %v2229, %v2229
        %v2280 = vpack.c.bf16 %v2230, %v2230
        %v2281 = vpack.c.bf16 %v2231, %v2231
        %v2282 = vpack.c.bf16 %v2232, %v2232
        %v2283 = vpack.c.bf16 %v2233, %v2233
        %v2284 = vpack.c.bf16 %v2234, %v2234
        %v2285 = vpack.c.bf16 %v2235, %v2235
        %v2286 = vpack.c.bf16 %v2236, %v2236
        %v2287 = vpack.c.bf16 %v2237, %v2237
        %v2288 = vpack.c.bf16 %v2238, %v2238
        %v2289 = vpack.c.bf16 %v2239, %v2239
        %v2290 = vpack.c.bf16 %v2240, %v2240
        %v2291 = vpack.c.bf16 %v2241, %v2241
        %v2292 = vpack.c.bf16 %v2242, %v2242
        %v2294 = vshrl.u32 %v2273, 16
        %v2296 = vrot.slane %v2294, 7
        %v2297 = vshll.u32 %v2273, 16
        %v2299 = vor.u32 %v2296, %v2297
        %v2300 = vrot.slane %v2296, 4
        %v2302 = vshrl.u32 %v2274, 16
        %v2304 = vrot.slane %v2302, 7
        %v2305 = vshll.u32 %v2274, 16
        %v2307 = vor.u32 %v2304, %v2305
        %v2308 = vsel %vm299, %v2300, %v2307
        %v2309 = vrot.slane %v2304, 4
        %v2311 = vshrl.u32 %v2275, 16
        %v2313 = vrot.slane %v2311, 7
        %v2314 = vshll.u32 %v2275, 16
        %v2316 = vor.u32 %v2313, %v2314
        %v2317 = vrot.slane %v2313, 4
        %v2319 = vshrl.u32 %v2276, 16
        %v2321 = vrot.slane %v2319, 7
        %v2322 = vshll.u32 %v2276, 16
        %v2324 = vor.u32 %v2321, %v2322
        %v2325 = vsel %vm299, %v2317, %v2324
        %v2326 = vrot.slane %v2321, 4
        %v2328 = vshrl.u32 %v2277, 16
        %v2330 = vrot.slane %v2328, 7
        %v2331 = vshll.u32 %v2277, 16
        %v2333 = vor.u32 %v2330, %v2331
        %v2334 = vrot.slane %v2330, 4
        %v2336 = vshrl.u32 %v2278, 16
        %v2338 = vrot.slane %v2336, 7
        %v2339 = vshll.u32 %v2278, 16
        %v2341 = vor.u32 %v2338, %v2339
        %v2342 = vsel %vm299, %v2334, %v2341
        %v2343 = vrot.slane %v2338, 4
        %v2345 = vshrl.u32 %v2279, 16
        %v2347 = vrot.slane %v2345, 7
        %v2348 = vshll.u32 %v2279, 16
        %v2350 = vor.u32 %v2347, %v2348
        %v2351 = vrot.slane %v2347, 4
        %v2353 = vshrl.u32 %v2280, 16
        %v2355 = vrot.slane %v2353, 7
        %v2356 = vshll.u32 %v2280, 16
        %v2358 = vor.u32 %v2355, %v2356
        %v2359 = vsel %vm299, %v2351, %v2358
        %v2360 = vrot.slane %v2355, 4
        %v2362 = vshrl.u32 %v2281, 16
        %v2364 = vrot.slane %v2362, 7
        %v2365 = vshll.u32 %v2281, 16
        %v2367 = vor.u32 %v2364, %v2365
        %v2368 = vrot.slane %v2364, 4
        %v2370 = vshrl.u32 %v2282, 16
        %v2372 = vrot.slane %v2370, 7
        %v2373 = vshll.u32 %v2282, 16
        %v2375 = vor.u32 %v2372, %v2373
        %v2376 = vsel %vm299, %v2368, %v2375
        %v2377 = vrot.slane %v2372, 4
        %v2379 = vshrl.u32 %v2283, 16
        %v2381 = vrot.slane %v2379, 7
        %v2382 = vshll.u32 %v2283, 16
        %v2384 = vor.u32 %v2381, %v2382
        %v2385 = vrot.slane %v2381, 4
        %v2387 = vshrl.u32 %v2284, 16
        %v2389 = vrot.slane %v2387, 7
        %v2390 = vshll.u32 %v2284, 16
        %v2392 = vor.u32 %v2389, %v2390
        %v2393 = vsel %vm299, %v2385, %v2392
        %v2394 = vrot.slane %v2389, 4
        %v2396 = vshrl.u32 %v2285, 16
        %v2398 = vrot.slane %v2396, 7
        %v2399 = vshll.u32 %v2285, 16
        %v2401 = vor.u32 %v2398, %v2399
        %v2402 = vrot.slane %v2398, 4
        %v2404 = vshrl.u32 %v2286, 16
        %v2406 = vrot.slane %v2404, 7
        %v2407 = vshll.u32 %v2286, 16
        %v2409 = vor.u32 %v2406, %v2407
        %v2410 = vsel %vm299, %v2402, %v2409
        %v2411 = vrot.slane %v2406, 4
        %v2413 = vshrl.u32 %v2287, 16
        %v2415 = vrot.slane %v2413, 7
        %v2416 = vshll.u32 %v2287, 16
        %v2418 = vor.u32 %v2415, %v2416
        %v2419 = vrot.slane %v2415, 4
        %v2421 = vshrl.u32 %v2288, 16
        %v2423 = vrot.slane %v2421, 7
        %v2424 = vshll.u32 %v2288, 16
        %v2426 = vor.u32 %v2423, %v2424
        %v2427 = vsel %vm299, %v2419, %v2426
        %v2428 = vrot.slane %v2423, 4
        %v2430 = vshrl.u32 %v2289, 16
        %v2432 = vrot.slane %v2430, 7
        %v2433 = vshll.u32 %v2289, 16
        %v2435 = vor.u32 %v2432, %v2433
        %v2436 = vrot.slane %v2432, 4
        %v2438 = vshrl.u32 %v2290, 16
        %v2440 = vrot.slane %v2438, 7
        %v2441 = vshll.u32 %v2290, 16
        %v2443 = vor.u32 %v2440, %v2441
        %v2444 = vsel %vm299, %v2436, %v2443
        %v2445 = vrot.slane %v2440, 4
        %v2447 = vshrl.u32 %v2291, 16
        %v2449 = vrot.slane %v2447, 7
        %v2450 = vshll.u32 %v2291, 16
        %v2452 = vor.u32 %v2449, %v2450
        %v2453 = vrot.slane %v2449, 4
        %v2455 = vshrl.u32 %v2292, 16
        %v2457 = vrot.slane %v2455, 7
        %v2458 = vshll.u32 %v2292, 16
        %v2460 = vor.u32 %v2457, %v2458
        %v2461 = vsel %vm299, %v2453, %v2460
        %v2462 = vrot.slane %v2457, 4
        %v2493 = vld [vmem:[#allocation3] sm:$0xf]
        %v2494 = vsel %vm322, %v2299, %v2493
        %2495 = vst [vmem:[#allocation3] sm:$0xf] %v2494
        %2496 = vst.msk [vmem:[#allocation3 + $0x4] sm:$0xf] %vm239, %v2308
        %v2497 = vld [vmem:[#allocation3 + $0x8] sm:$0x1]
        %v2498 = vsel %vm328, %v2309, %v2497
        %2499 = vst [vmem:[#allocation3 + $0x8] sm:$0x1] %v2498
        %v2500 = vld [vmem:[#allocation3 + $0xc] sm:$0xf]
        %v2501 = vsel %vm322, %v2316, %v2500
        %2502 = vst [vmem:[#allocation3 + $0xc] sm:$0xf] %v2501
        %2503 = vst.msk [vmem:[#allocation3 + $0x10] sm:$0xf] %vm239, %v2325
        %v2504 = vld [vmem:[#allocation3 + $0x14] sm:$0x1]
        %v2505 = vsel %vm328, %v2326, %v2504
        %2506 = vst [vmem:[#allocation3 + $0x14] sm:$0x1] %v2505
        %v2507 = vld [vmem:[#allocation3 + $0x18] sm:$0xf]
        %v2508 = vsel %vm322, %v2333, %v2507
        %2509 = vst [vmem:[#allocation3 + $0x18] sm:$0xf] %v2508
        %2510 = vst.msk [vmem:[#allocation3 + $0x1c] sm:$0xf] %vm239, %v2342
        %v2511 = vld [vmem:[#allocation3 + $0x20] sm:$0x1]
        %v2512 = vsel %vm328, %v2343, %v2511
        %2513 = vst [vmem:[#allocation3 + $0x20] sm:$0x1] %v2512
        %v2514 = vld [vmem:[#allocation3 + $0x24] sm:$0xf]
        %v2515 = vsel %vm322, %v2350, %v2514
        %2516 = vst [vmem:[#allocation3 + $0x24] sm:$0xf] %v2515
        %2517 = vst.msk [vmem:[#allocation3 + $0x28] sm:$0xf] %vm239, %v2359
        %v2518 = vld [vmem:[#allocation3 + $0x2c] sm:$0x1]
        %v2519 = vsel %vm328, %v2360, %v2518
        %2520 = vst [vmem:[#allocation3 + $0x2c] sm:$0x1] %v2519
        %v2521 = vld [vmem:[#allocation3 + $0x30] sm:$0xf]
        %v2522 = vsel %vm322, %v2367, %v2521
        %2523 = vst [vmem:[#allocation3 + $0x30] sm:$0xf] %v2522
        %2524 = vst.msk [vmem:[#allocation3 + $0x34] sm:$0xf] %vm239, %v2376
        %v2525 = vld [vmem:[#allocation3 + $0x38] sm:$0x1]
        %v2526 = vsel %vm328, %v2377, %v2525
        %2527 = vst [vmem:[#allocation3 + $0x38] sm:$0x1] %v2526
        %v2528 = vld [vmem:[#allocation3 + $0x3c] sm:$0xf]
        %v2529 = vsel %vm322, %v2384, %v2528
        %2530 = vst [vmem:[#allocation3 + $0x3c] sm:$0xf] %v2529
        %2531 = vst.msk [vmem:[#allocation3 + $0x40] sm:$0xf] %vm239, %v2393
        %v2532 = vld [vmem:[#allocation3 + $0x44] sm:$0x1]
        %v2533 = vsel %vm328, %v2394, %v2532
        %2534 = vst [vmem:[#allocation3 + $0x44] sm:$0x1] %v2533
        %v2535 = vld [vmem:[#allocation3 + $0x48] sm:$0xf]
        %v2536 = vsel %vm322, %v2401, %v2535
        %2537 = vst [vmem:[#allocation3 + $0x48] sm:$0xf] %v2536
        %2538 = vst.msk [vmem:[#allocation3 + $0x4c] sm:$0xf] %vm239, %v2410
        %v2539 = vld [vmem:[#allocation3 + $0x50] sm:$0x1]
        %v2540 = vsel %vm328, %v2411, %v2539
        %2541 = vst [vmem:[#allocation3 + $0x50] sm:$0x1] %v2540
        %v2542 = vld [vmem:[#allocation3 + $0x54] sm:$0xf]
        %v2543 = vsel %vm322, %v2418, %v2542
        %2544 = vst [vmem:[#allocation3 + $0x54] sm:$0xf] %v2543
        %2545 = vst.msk [vmem:[#allocation3 + $0x58] sm:$0xf] %vm239, %v2427
        %v2546 = vld [vmem:[#allocation3 + $0x5c] sm:$0x1]
        %v2547 = vsel %vm328, %v2428, %v2546
        %2548 = vst [vmem:[#allocation3 + $0x5c] sm:$0x1] %v2547
        %v2549 = vld [vmem:[#allocation3 + $0x60] sm:$0xf]
        %v2550 = vsel %vm322, %v2435, %v2549
        %2551 = vst [vmem:[#allocation3 + $0x60] sm:$0xf] %v2550
        %2552 = vst.msk [vmem:[#allocation3 + $0x64] sm:$0xf] %vm239, %v2444
        %v2553 = vld [vmem:[#allocation3 + $0x68] sm:$0x1]
        %v2554 = vsel %vm328, %v2445, %v2553
        %2555 = vst [vmem:[#allocation3 + $0x68] sm:$0x1] %v2554
        %v2556 = vld [vmem:[#allocation3 + $0x6c] sm:$0xf]
        %v2557 = vsel %vm322, %v2452, %v2556
        %2558 = vst [vmem:[#allocation3 + $0x6c] sm:$0xf] %v2557
        %2559 = vst.msk [vmem:[#allocation3 + $0x70] sm:$0xf] %vm239, %v2461
        %v2560 = vld [vmem:[#allocation3 + $0x74] sm:$0x1]
        %v2561 = vsel %vm328, %v2462, %v2560
        %2562 = vst [vmem:[#allocation3 + $0x74] sm:$0x1] %v2561
        %v2563 = vld [vmem:[#allocation3] sm:$0xf]
        %v2564 = vld [vmem:[#allocation3 + $0x4] sm:$0xf]
        %v2565 = vld [vmem:[#allocation3 + $0x8] sm:$0x1]
        %v2566 = vld [vmem:[#allocation3 + $0xc] sm:$0xf]
        %v2567 = vld [vmem:[#allocation3 + $0x10] sm:$0xf]
        %v2568 = vld [vmem:[#allocation3 + $0x14] sm:$0x1]
        %v2569 = vld [vmem:[#allocation3 + $0x18] sm:$0xf]
        %v2570 = vld [vmem:[#allocation3 + $0x1c] sm:$0xf]
        %v2571 = vld [vmem:[#allocation3 + $0x20] sm:$0x1]
        %v2572 = vld [vmem:[#allocation3 + $0x24] sm:$0xf]
        %v2573 = vld [vmem:[#allocation3 + $0x28] sm:$0xf]
        %v2574 = vld [vmem:[#allocation3 + $0x2c] sm:$0x1]
        %v2575 = vld [vmem:[#allocation3 + $0x30] sm:$0xf]
        %v2576 = vld [vmem:[#allocation3 + $0x34] sm:$0xf]
        %v2577 = vld [vmem:[#allocation3 + $0x38] sm:$0x1]
        %v2578 = vld [vmem:[#allocation3 + $0x3c] sm:$0xf]
        %v2579 = vld [vmem:[#allocation3 + $0x40] sm:$0xf]
        %v2580 = vld [vmem:[#allocation3 + $0x44] sm:$0x1]
        %v2581 = vld [vmem:[#allocation3 + $0x48] sm:$0xf]
        %v2582 = vld [vmem:[#allocation3 + $0x4c] sm:$0xf]
        %v2583 = vld [vmem:[#allocation3 + $0x50] sm:$0x1]
        %v2584 = vld [vmem:[#allocation3 + $0x54] sm:$0xf]
        %v2585 = vld [vmem:[#allocation3 + $0x58] sm:$0xf]
        %v2586 = vld [vmem:[#allocation3 + $0x5c] sm:$0x1]
        %v2587 = vld [vmem:[#allocation3 + $0x60] sm:$0xf]
        %v2588 = vld [vmem:[#allocation3 + $0x64] sm:$0xf]
        %v2589 = vld [vmem:[#allocation3 + $0x68] sm:$0x1]
        %v2590 = vld [vmem:[#allocation3 + $0x6c] sm:$0xf]
        %v2591 = vld [vmem:[#allocation3 + $0x70] sm:$0xf]
        %v2592 = vld [vmem:[#allocation3 + $0x74] sm:$0x1]
        %v2593 = vld [vmem:[%s3] sm:$0x3]
        %v2595 = vshrl.u32 %v2563, 16
        %v2597 = vrot.slane %v2595, 4
        %v2598 = vshll.u32 %v2563, 16
        %v2600 = vrot.slane %v2598, 5
        %v2601 = vor.u32 %v2597, %v2600
        %v2602 = vrot.slane %v2601, 4
        %v2604 = vshll.u32 %v2564, 16
        %v2606 = vrot.slane %v2604, 5
        %v2607 = vsel %vm794, %v2602, %v2606
        %v2608 = vshrl.u32 %v2564, 16
        %v2610 = vrot.slane %v2608, 4
        %v2611 = vor.u32 %v2610, %v2606
        %v2612 = vrot.slane %v2611, 4
        %v2614 = vshll.u32 %v2565, 16
        %v2616 = vrot.slane %v2614, 5
        %v2617 = vsel %vm794, %v2612, %v2616
        %v2619 = vshrl.u32 %v2566, 16
        %v2621 = vrot.slane %v2619, 4
        %v2622 = vshll.u32 %v2566, 16
        %v2624 = vrot.slane %v2622, 5
        %v2625 = vor.u32 %v2621, %v2624
        %v2626 = vrot.slane %v2625, 4
        %v2628 = vshll.u32 %v2567, 16
        %v2630 = vrot.slane %v2628, 5
        %v2631 = vsel %vm794, %v2626, %v2630
        %v2632 = vshrl.u32 %v2567, 16
        %v2634 = vrot.slane %v2632, 4
        %v2635 = vor.u32 %v2634, %v2630
        %v2636 = vrot.slane %v2635, 4
        %v2638 = vshll.u32 %v2568, 16
        %v2640 = vrot.slane %v2638, 5
        %v2641 = vsel %vm794, %v2636, %v2640
        %v2643 = vshrl.u32 %v2569, 16
        %v2645 = vrot.slane %v2643, 4
        %v2646 = vshll.u32 %v2569, 16
        %v2648 = vrot.slane %v2646, 5
        %v2649 = vor.u32 %v2645, %v2648
        %v2650 = vrot.slane %v2649, 4
        %v2652 = vshll.u32 %v2570, 16
        %v2654 = vrot.slane %v2652, 5
        %v2655 = vsel %vm794, %v2650, %v2654
        %v2656 = vshrl.u32 %v2570, 16
        %v2658 = vrot.slane %v2656, 4
        %v2659 = vor.u32 %v2658, %v2654
        %v2660 = vrot.slane %v2659, 4
        %v2662 = vshll.u32 %v2571, 16
        %v2664 = vrot.slane %v2662, 5
        %v2665 = vsel %vm794, %v2660, %v2664
        %v2667 = vshrl.u32 %v2572, 16
        %v2669 = vrot.slane %v2667, 4
        %v2670 = vshll.u32 %v2572, 16
        %v2672 = vrot.slane %v2670, 5
        %v2673 = vor.u32 %v2669, %v2672
        %v2674 = vrot.slane %v2673, 4
        %v2676 = vshll.u32 %v2573, 16
        %v2678 = vrot.slane %v2676, 5
        %v2679 = vsel %vm794, %v2674, %v2678
        %v2680 = vshrl.u32 %v2573, 16
        %v2682 = vrot.slane %v2680, 4
        %v2683 = vor.u32 %v2682, %v2678
        %v2684 = vrot.slane %v2683, 4
        %v2686 = vshll.u32 %v2574, 16
        %v2688 = vrot.slane %v2686, 5
        %v2689 = vsel %vm794, %v2684, %v2688
        %v2691 = vshrl.u32 %v2575, 16
        %v2693 = vrot.slane %v2691, 4
        %v2694 = vshll.u32 %v2575, 16
        %v2696 = vrot.slane %v2694, 5
        %v2697 = vor.u32 %v2693, %v2696
        %v2698 = vrot.slane %v2697, 4
        %v2700 = vshll.u32 %v2576, 16
        %v2702 = vrot.slane %v2700, 5
        %v2703 = vsel %vm794, %v2698, %v2702
        %v2704 = vshrl.u32 %v2576, 16
        %v2706 = vrot.slane %v2704, 4
        %v2707 = vor.u32 %v2706, %v2702
        %v2708 = vrot.slane %v2707, 4
        %v2710 = vshll.u32 %v2577, 16
        %v2712 = vrot.slane %v2710, 5
        %v2713 = vsel %vm794, %v2708, %v2712
        %v2715 = vshrl.u32 %v2578, 16
        %v2717 = vrot.slane %v2715, 4
        %v2718 = vshll.u32 %v2578, 16
        %v2720 = vrot.slane %v2718, 5
        %v2721 = vor.u32 %v2717, %v2720
        %v2722 = vrot.slane %v2721, 4
        %v2724 = vshll.u32 %v2579, 16
        %v2726 = vrot.slane %v2724, 5
        %v2727 = vsel %vm794, %v2722, %v2726
        %v2728 = vshrl.u32 %v2579, 16
        %v2730 = vrot.slane %v2728, 4
        %v2731 = vor.u32 %v2730, %v2726
        %v2732 = vrot.slane %v2731, 4
        %v2734 = vshll.u32 %v2580, 16
        %v2736 = vrot.slane %v2734, 5
        %v2737 = vsel %vm794, %v2732, %v2736
        %v2739 = vshrl.u32 %v2581, 16
        %v2741 = vrot.slane %v2739, 4
        %v2742 = vshll.u32 %v2581, 16
        %v2744 = vrot.slane %v2742, 5
        %v2745 = vor.u32 %v2741, %v2744
        %v2746 = vrot.slane %v2745, 4
        %v2748 = vshll.u32 %v2582, 16
        %v2750 = vrot.slane %v2748, 5
        %v2751 = vsel %vm794, %v2746, %v2750
        %v2752 = vshrl.u32 %v2582, 16
        %v2754 = vrot.slane %v2752, 4
        %v2755 = vor.u32 %v2754, %v2750
        %v2756 = vrot.slane %v2755, 4
        %v2758 = vshll.u32 %v2583, 16
        %v2760 = vrot.slane %v2758, 5
        %v2761 = vsel %vm794, %v2756, %v2760
        %v2763 = vshrl.u32 %v2584, 16
        %v2765 = vrot.slane %v2763, 4
        %v2766 = vshll.u32 %v2584, 16
        %v2768 = vrot.slane %v2766, 5
        %v2769 = vor.u32 %v2765, %v2768
        %v2770 = vrot.slane %v2769, 4
        %v2772 = vshll.u32 %v2585, 16
        %v2774 = vrot.slane %v2772, 5
        %v2775 = vsel %vm794, %v2770, %v2774
        %v2776 = vshrl.u32 %v2585, 16
        %v2778 = vrot.slane %v2776, 4
        %v2779 = vor.u32 %v2778, %v2774
        %v2780 = vrot.slane %v2779, 4
        %v2782 = vshll.u32 %v2586, 16
        %v2784 = vrot.slane %v2782, 5
        %v2785 = vsel %vm794, %v2780, %v2784
        %s2786 = scalar_lea.vmem %s3, 2
        %v2787 = vld [vmem:[%s2786] sm:$0x3]
        %v2788 = vunpack.c.l.b16 %v2607
        %v2789 = vunpack.c.l.b16 %v2617
        %v2790 = vunpack.c.l.b16 %v2631
        %v2791 = vunpack.c.l.b16 %v2641
        %v2792 = vunpack.c.l.b16 %v2655
        %v2793 = vunpack.c.l.b16 %v2665
        %v2794 = vunpack.c.l.b16 %v2679
        %v2795 = vunpack.c.l.b16 %v2689
        %v2796 = vunpack.c.l.b16 %v2703
        %v2797 = vunpack.c.l.b16 %v2713
        %v2798 = vunpack.c.l.b16 %v2727
        %v2799 = vunpack.c.l.b16 %v2737
        %v2800 = vunpack.c.l.b16 %v2751
        %v2801 = vunpack.c.l.b16 %v2761
        %v2802 = vunpack.c.l.b16 %v2775
        %v2803 = vunpack.c.l.b16 %v2785
        %v2804 = vpack.c.b16 %v2789, %v2788
        %v2805 = vpack.c.b16 %v2791, %v2790
        %v2806 = vpack.c.b16 %v2793, %v2792
        %v2807 = vpack.c.b16 %v2795, %v2794
        %v2808 = vpack.c.b16 %v2797, %v2796
        %v2809 = vpack.c.b16 %v2799, %v2798
        %v2810 = vpack.c.b16 %v2801, %v2800
        %v2811 = vpack.c.b16 %v2803, %v2802
        %v2813 = vsel %vm1067, %v2804, 0
        %v2816 = vsel %vm1067, %v2805, 0
        %v2819 = vsel %vm1067, %v2806, 0
        %v2822 = vsel %vm1067, %v2807, 0
        %v2825 = vsel %vm1067, %v2808, 0
        %v2828 = vsel %vm1067, %v2809, 0
        %v2831 = vsel %vm1067, %v2810, 0
        %v2834 = vsel %vm1067, %v2811, 0
        %v2837 = vsel %vm1098, %v2787, 0
        %2839 = vmatpush.bf16.msra.mxu0 0
        %2840 = vmatpush.bf16.msra.mxu0 0
        %2841 = vmatpush.bf16.msra.mxu0 0
        %2842 = vmatpush.bf16.msra.mxu0 0
        %2843 = vmatpush.bf16.msra.mxu0 0
        %2844 = vmatpush.bf16.msra.mxu0 0
        %2845 = vmatpush.bf16.msra.mxu0 0
        %2846 = vmatpush.bf16.msra.mxu0 %v2837
        %2847 = vmatmul.bf16.gmra.mxu0 %v2813
        %v2848 = vpop.f32.mrf.mxu0
        %v2849 = vadd.f32 0.0, %v2848
        %v2850 = vpop.f32.mrf.mxu0
        %v2851 = vadd.f32 0.0, %v2850
        %2852 = vmatmul.bf16.gmra.mxu0 %v2816
        %v2853 = vpop.f32.mrf.mxu0
        %v2854 = vadd.f32 0.0, %v2853
        %v2855 = vpop.f32.mrf.mxu0
        %v2856 = vadd.f32 0.0, %v2855
        %2857 = vmatmul.bf16.gmra.mxu0 %v2819
        %v2858 = vpop.f32.mrf.mxu0
        %v2859 = vadd.f32 0.0, %v2858
        %v2860 = vpop.f32.mrf.mxu0
        %v2861 = vadd.f32 0.0, %v2860
        %2862 = vmatmul.bf16.gmra.mxu0 %v2822
        %v2863 = vpop.f32.mrf.mxu0
        %v2864 = vadd.f32 0.0, %v2863
        %v2865 = vpop.f32.mrf.mxu0
        %v2866 = vadd.f32 0.0, %v2865
        %2867 = vmatmul.bf16.gmra.mxu0 %v2825
        %v2868 = vpop.f32.mrf.mxu0
        %v2869 = vadd.f32 0.0, %v2868
        %v2870 = vpop.f32.mrf.mxu0
        %v2871 = vadd.f32 0.0, %v2870
        %2872 = vmatmul.bf16.gmra.mxu0 %v2828
        %v2873 = vpop.f32.mrf.mxu0
        %v2874 = vadd.f32 0.0, %v2873
        %v2875 = vpop.f32.mrf.mxu0
        %v2876 = vadd.f32 0.0, %v2875
        %2877 = vmatmul.bf16.gmra.mxu0 %v2831
        %v2878 = vpop.f32.mrf.mxu0
        %v2879 = vadd.f32 0.0, %v2878
        %v2880 = vpop.f32.mrf.mxu0
        %v2881 = vadd.f32 0.0, %v2880
        %2882 = vmatmul.bf16.gmra.mxu0 %v2834
        %v2883 = vpop.f32.mrf.mxu0
        %v2884 = vadd.f32 0.0, %v2883
        %v2885 = vpop.f32.mrf.mxu0
        %v2886 = vadd.f32 0.0, %v2885
        %2887 = vdwg.mxu0
        %v2904 = vunpack.c.l.b16 %v2563
        %v2905 = vunpack.c.l.b16 %v2564
        %v2906 = vunpack.c.l.b16 %v2566
        %v2907 = vunpack.c.l.b16 %v2567
        %v2908 = vunpack.c.l.b16 %v2569
        %v2909 = vunpack.c.l.b16 %v2570
        %v2910 = vunpack.c.l.b16 %v2572
        %v2911 = vunpack.c.l.b16 %v2573
        %v2912 = vunpack.c.l.b16 %v2575
        %v2913 = vunpack.c.l.b16 %v2576
        %v2914 = vunpack.c.l.b16 %v2578
        %v2915 = vunpack.c.l.b16 %v2579
        %v2916 = vunpack.c.l.b16 %v2581
        %v2917 = vunpack.c.l.b16 %v2582
        %v2918 = vunpack.c.l.b16 %v2584
        %v2919 = vunpack.c.l.b16 %v2585
        %v2920 = vpack.c.b16 %v2905, %v2904
        %v2921 = vpack.c.b16 %v2907, %v2906
        %v2922 = vpack.c.b16 %v2909, %v2908
        %v2923 = vpack.c.b16 %v2911, %v2910
        %v2924 = vpack.c.b16 %v2913, %v2912
        %v2925 = vpack.c.b16 %v2915, %v2914
        %v2926 = vpack.c.b16 %v2917, %v2916
        %v2927 = vpack.c.b16 %v2919, %v2918
        %v2929 = vsel %vm1067, %v2920, 0
        %v2932 = vsel %vm1067, %v2921, 0
        %v2935 = vsel %vm1067, %v2922, 0
        %v2938 = vsel %vm1067, %v2923, 0
        %v2941 = vsel %vm1067, %v2924, 0
        %v2944 = vsel %vm1067, %v2925, 0
        %v2947 = vsel %vm1067, %v2926, 0
        %v2950 = vsel %vm1067, %v2927, 0
        %v2953 = vsel %vm1098, %v2593, 0
        %2955 = vmatpush.bf16.msra.mxu0 0
        %2956 = vmatpush.bf16.msra.mxu0 0
        %2957 = vmatpush.bf16.msra.mxu0 0
        %2958 = vmatpush.bf16.msra.mxu0 0
        %2959 = vmatpush.bf16.msra.mxu0 0
        %2960 = vmatpush.bf16.msra.mxu0 0
        %2961 = vmatpush.bf16.msra.mxu0 0
        %2962 = vmatpush.bf16.msra.mxu0 %v2953
        %2963 = vmatmul.bf16.gmra.mxu0 %v2929
        %v2964 = vpop.f32.mrf.mxu0
        %v2965 = vadd.f32 %v2849, %v2964
        %v2966 = vpop.f32.mrf.mxu0
        %v2967 = vadd.f32 %v2851, %v2966
        %2968 = vmatmul.bf16.gmra.mxu0 %v2932
        %v2969 = vpop.f32.mrf.mxu0
        %v2970 = vadd.f32 %v2854, %v2969
        %v2971 = vpop.f32.mrf.mxu0
        %v2972 = vadd.f32 %v2856, %v2971
        %2973 = vmatmul.bf16.gmra.mxu0 %v2935
        %v2974 = vpop.f32.mrf.mxu0
        %v2975 = vadd.f32 %v2859, %v2974
        %v2976 = vpop.f32.mrf.mxu0
        %v2977 = vadd.f32 %v2861, %v2976
        %2978 = vmatmul.bf16.gmra.mxu0 %v2938
        %v2979 = vpop.f32.mrf.mxu0
        %v2980 = vadd.f32 %v2864, %v2979
        %v2981 = vpop.f32.mrf.mxu0
        %v2982 = vadd.f32 %v2866, %v2981
        %2983 = vmatmul.bf16.gmra.mxu0 %v2941
        %v2984 = vpop.f32.mrf.mxu0
        %v2985 = vadd.f32 %v2869, %v2984
        %v2986 = vpop.f32.mrf.mxu0
        %v2987 = vadd.f32 %v2871, %v2986
        %2988 = vmatmul.bf16.gmra.mxu0 %v2944
        %v2989 = vpop.f32.mrf.mxu0
        %v2990 = vadd.f32 %v2874, %v2989
        %v2991 = vpop.f32.mrf.mxu0
        %v2992 = vadd.f32 %v2876, %v2991
        %2993 = vmatmul.bf16.gmra.mxu0 %v2947
        %v2994 = vpop.f32.mrf.mxu0
        %v2995 = vadd.f32 %v2879, %v2994
        %v2996 = vpop.f32.mrf.mxu0
        %v2997 = vadd.f32 %v2881, %v2996
        %2998 = vmatmul.bf16.gmra.mxu0 %v2950
        %v2999 = vpop.f32.mrf.mxu0
        %v3000 = vadd.f32 %v2884, %v2999
        %v3001 = vpop.f32.mrf.mxu0
        %v3002 = vadd.f32 %v2886, %v3001
        %3003 = vdwg.mxu0
        %v3012 = vrot.slane %v2563, 5
        %v3013 = vrot.slane %v3012, 4
        %v3014 = vrot.slane %v2564, 5
        %v3015 = vsel %vm1315, %v3013, %v3014
        %v3016 = vrot.slane %v3014, 4
        %v3017 = vrot.slane %v2565, 5
        %v3018 = vsel %vm1315, %v3016, %v3017
        %v3019 = vrot.slane %v2566, 5
        %v3020 = vrot.slane %v3019, 4
        %v3021 = vrot.slane %v2567, 5
        %v3022 = vsel %vm1315, %v3020, %v3021
        %v3023 = vrot.slane %v3021, 4
        %v3024 = vrot.slane %v2568, 5
        %v3025 = vsel %vm1315, %v3023, %v3024
        %v3026 = vrot.slane %v2569, 5
        %v3027 = vrot.slane %v3026, 4
        %v3028 = vrot.slane %v2570, 5
        %v3029 = vsel %vm1315, %v3027, %v3028
        %v3030 = vrot.slane %v3028, 4
        %v3031 = vrot.slane %v2571, 5
        %v3032 = vsel %vm1315, %v3030, %v3031
        %v3033 = vrot.slane %v2572, 5
        %v3034 = vrot.slane %v3033, 4
        %v3035 = vrot.slane %v2573, 5
        %v3036 = vsel %vm1315, %v3034, %v3035
        %v3037 = vrot.slane %v3035, 4
        %v3038 = vrot.slane %v2574, 5
        %v3039 = vsel %vm1315, %v3037, %v3038
        %v3040 = vrot.slane %v2575, 5
        %v3041 = vrot.slane %v3040, 4
        %v3042 = vrot.slane %v2576, 5
        %v3043 = vsel %vm1315, %v3041, %v3042
        %v3044 = vrot.slane %v3042, 4
        %v3045 = vrot.slane %v2577, 5
        %v3046 = vsel %vm1315, %v3044, %v3045
        %v3047 = vrot.slane %v2578, 5
        %v3048 = vrot.slane %v3047, 4
        %v3049 = vrot.slane %v2579, 5
        %v3050 = vsel %vm1315, %v3048, %v3049
        %v3051 = vrot.slane %v3049, 4
        %v3052 = vrot.slane %v2580, 5
        %v3053 = vsel %vm1315, %v3051, %v3052
        %v3054 = vrot.slane %v2581, 5
        %v3055 = vrot.slane %v3054, 4
        %v3056 = vrot.slane %v2582, 5
        %v3057 = vsel %vm1315, %v3055, %v3056
        %v3058 = vrot.slane %v3056, 4
        %v3059 = vrot.slane %v2583, 5
        %v3060 = vsel %vm1315, %v3058, %v3059
        %v3061 = vrot.slane %v2584, 5
        %v3062 = vrot.slane %v3061, 4
        %v3063 = vrot.slane %v2585, 5
        %v3064 = vsel %vm1315, %v3062, %v3063
        %v3065 = vrot.slane %v3063, 4
        %v3066 = vrot.slane %v2586, 5
        %v3067 = vsel %vm1315, %v3065, %v3066
        %s3068 = scalar_lea.vmem %s3, 4
        %v3069 = vld [vmem:[%s3068] sm:$0x3]
        %v3070 = vunpack.c.l.b16 %v3015
        %v3071 = vunpack.c.l.b16 %v3018
        %v3072 = vunpack.c.l.b16 %v3022
        %v3073 = vunpack.c.l.b16 %v3025
        %v3074 = vunpack.c.l.b16 %v3029
        %v3075 = vunpack.c.l.b16 %v3032
        %v3076 = vunpack.c.l.b16 %v3036
        %v3077 = vunpack.c.l.b16 %v3039
        %v3078 = vunpack.c.l.b16 %v3043
        %v3079 = vunpack.c.l.b16 %v3046
        %v3080 = vunpack.c.l.b16 %v3050
        %v3081 = vunpack.c.l.b16 %v3053
        %v3082 = vunpack.c.l.b16 %v3057
        %v3083 = vunpack.c.l.b16 %v3060
        %v3084 = vunpack.c.l.b16 %v3064
        %v3085 = vunpack.c.l.b16 %v3067
        %v3086 = vpack.c.b16 %v3071, %v3070
        %v3087 = vpack.c.b16 %v3073, %v3072
        %v3088 = vpack.c.b16 %v3075, %v3074
        %v3089 = vpack.c.b16 %v3077, %v3076
        %v3090 = vpack.c.b16 %v3079, %v3078
        %v3091 = vpack.c.b16 %v3081, %v3080
        %v3092 = vpack.c.b16 %v3083, %v3082
        %v3093 = vpack.c.b16 %v3085, %v3084
        %v3095 = vsel %vm1067, %v3086, 0
        %v3098 = vsel %vm1067, %v3087, 0
        %v3101 = vsel %vm1067, %v3088, 0
        %v3104 = vsel %vm1067, %v3089, 0
        %v3107 = vsel %vm1067, %v3090, 0
        %v3110 = vsel %vm1067, %v3091, 0
        %v3113 = vsel %vm1067, %v3092, 0
        %v3116 = vsel %vm1067, %v3093, 0
        %v3119 = vsel %vm1098, %v3069, 0
        %3121 = vmatpush.bf16.msra.mxu0 0
        %3122 = vmatpush.bf16.msra.mxu0 0
        %3123 = vmatpush.bf16.msra.mxu0 0
        %3124 = vmatpush.bf16.msra.mxu0 0
        %3125 = vmatpush.bf16.msra.mxu0 0
        %3126 = vmatpush.bf16.msra.mxu0 0
        %3127 = vmatpush.bf16.msra.mxu0 0
        %3128 = vmatpush.bf16.msra.mxu0 %v3119
        %3129 = vmatmul.bf16.gmra.mxu0 %v3095
        %v3130 = vpop.f32.mrf.mxu0
        %v3131 = vadd.f32 0.0, %v3130
        %v3132 = vpop.f32.mrf.mxu0
        %v3133 = vadd.f32 0.0, %v3132
        %3134 = vmatmul.bf16.gmra.mxu0 %v3098
        %v3135 = vpop.f32.mrf.mxu0
        %v3136 = vadd.f32 0.0, %v3135
        %v3137 = vpop.f32.mrf.mxu0
        %v3138 = vadd.f32 0.0, %v3137
        %3139 = vmatmul.bf16.gmra.mxu0 %v3101
        %v3140 = vpop.f32.mrf.mxu0
        %v3141 = vadd.f32 0.0, %v3140
        %v3142 = vpop.f32.mrf.mxu0
        %v3143 = vadd.f32 0.0, %v3142
        %3144 = vmatmul.bf16.gmra.mxu0 %v3104
        %v3145 = vpop.f32.mrf.mxu0
        %v3146 = vadd.f32 0.0, %v3145
        %v3147 = vpop.f32.mrf.mxu0
        %v3148 = vadd.f32 0.0, %v3147
        %3149 = vmatmul.bf16.gmra.mxu0 %v3107
        %v3150 = vpop.f32.mrf.mxu0
        %v3151 = vadd.f32 0.0, %v3150
        %v3152 = vpop.f32.mrf.mxu0
        %v3153 = vadd.f32 0.0, %v3152
        %3154 = vmatmul.bf16.gmra.mxu0 %v3110
        %v3155 = vpop.f32.mrf.mxu0
        %v3156 = vadd.f32 0.0, %v3155
        %v3157 = vpop.f32.mrf.mxu0
        %v3158 = vadd.f32 0.0, %v3157
        %3159 = vmatmul.bf16.gmra.mxu0 %v3113
        %v3160 = vpop.f32.mrf.mxu0
        %v3161 = vadd.f32 0.0, %v3160
        %v3162 = vpop.f32.mrf.mxu0
        %v3163 = vadd.f32 0.0, %v3162
        %3164 = vmatmul.bf16.gmra.mxu0 %v3116
        %v3165 = vpop.f32.mrf.mxu0
        %v3166 = vadd.f32 0.0, %v3165
        %v3167 = vpop.f32.mrf.mxu0
        %v3168 = vadd.f32 0.0, %v3167
        %3169 = vdwg.mxu0
        %v3170 = vadd.f32 %v2965, %v3131
        %v3171 = vadd.f32 %v2967, %v3133
        %v3172 = vadd.f32 %v2970, %v3136
        %v3173 = vadd.f32 %v2972, %v3138
        %v3174 = vadd.f32 %v2975, %v3141
        %v3175 = vadd.f32 %v2977, %v3143
        %v3176 = vadd.f32 %v2980, %v3146
        %v3177 = vadd.f32 %v2982, %v3148
        %v3178 = vadd.f32 %v2985, %v3151
        %v3179 = vadd.f32 %v2987, %v3153
        %v3180 = vadd.f32 %v2990, %v3156
        %v3181 = vadd.f32 %v2992, %v3158
        %v3182 = vadd.f32 %v2995, %v3161
        %v3183 = vadd.f32 %v2997, %v3163
        %v3184 = vadd.f32 %v3000, %v3166
        %v3185 = vadd.f32 %v3002, %v3168
        %s3186 = scalar_lea.vmem %s3, 6
        %v3187 = vld [vmem:[%s3186] sm:$0x3]
        %v3190 = vunpack.c.l.b16 %v2587
        %v3191 = vunpack.c.l.b16 %v2588
        %v3192 = vpack.c.b16 %v3191, %v3190
        %v3194 = vsel %vm1067, %v3192, 0
        %v3197 = vsel %vm1098, %v3187, 0
        %3199 = vmatpush.bf16.msra.mxu0 0
        %3200 = vmatpush.bf16.msra.mxu0 0
        %3201 = vmatpush.bf16.msra.mxu0 0
        %3202 = vmatpush.bf16.msra.mxu0 0
        %3203 = vmatpush.bf16.msra.mxu0 0
        %3204 = vmatpush.bf16.msra.mxu0 0
        %3205 = vmatpush.bf16.msra.mxu0 0
        %3206 = vmatpush.bf16.msra.mxu0 %v3197
        %3207 = vmatmul.bf16.gmra.mxu0 %v2932
        %v3208 = vpop.f32.mrf.mxu0
        %v3209 = vadd.f32 0.0, %v3208
        %v3210 = vpop.f32.mrf.mxu0
        %v3211 = vadd.f32 0.0, %v3210
        %3212 = vmatmul.bf16.gmra.mxu0 %v2935
        %v3213 = vpop.f32.mrf.mxu0
        %v3214 = vadd.f32 0.0, %v3213
        %v3215 = vpop.f32.mrf.mxu0
        %v3216 = vadd.f32 0.0, %v3215
        %3217 = vmatmul.bf16.gmra.mxu0 %v2938
        %v3218 = vpop.f32.mrf.mxu0
        %v3219 = vadd.f32 0.0, %v3218
        %v3220 = vpop.f32.mrf.mxu0
        %v3221 = vadd.f32 0.0, %v3220
        %3222 = vmatmul.bf16.gmra.mxu0 %v2941
        %v3223 = vpop.f32.mrf.mxu0
        %v3224 = vadd.f32 0.0, %v3223
        %v3225 = vpop.f32.mrf.mxu0
        %v3226 = vadd.f32 0.0, %v3225
        %3227 = vmatmul.bf16.gmra.mxu0 %v2944
        %v3228 = vpop.f32.mrf.mxu0
        %v3229 = vadd.f32 0.0, %v3228
        %v3230 = vpop.f32.mrf.mxu0
        %v3231 = vadd.f32 0.0, %v3230
        %3232 = vmatmul.bf16.gmra.mxu0 %v2947
        %v3233 = vpop.f32.mrf.mxu0
        %v3234 = vadd.f32 0.0, %v3233
        %v3235 = vpop.f32.mrf.mxu0
        %v3236 = vadd.f32 0.0, %v3235
        %3237 = vmatmul.bf16.gmra.mxu0 %v2950
        %v3238 = vpop.f32.mrf.mxu0
        %v3239 = vadd.f32 0.0, %v3238
        %v3240 = vpop.f32.mrf.mxu0
        %v3241 = vadd.f32 0.0, %v3240
        %3242 = vmatmul.bf16.gmra.mxu0 %v3194
        %v3243 = vpop.f32.mrf.mxu0
        %v3244 = vadd.f32 0.0, %v3243
        %v3245 = vpop.f32.mrf.mxu0
        %v3246 = vadd.f32 0.0, %v3245
        %3247 = vdwg.mxu0
        %v3248 = vadd.f32 %v3170, %v3209
        %v3249 = vadd.f32 %v3171, %v3211
        %v3250 = vadd.f32 %v3172, %v3214
        %v3251 = vadd.f32 %v3173, %v3216
        %v3252 = vadd.f32 %v3174, %v3219
        %v3253 = vadd.f32 %v3175, %v3221
        %v3254 = vadd.f32 %v3176, %v3224
        %v3255 = vadd.f32 %v3177, %v3226
        %v3256 = vadd.f32 %v3178, %v3229
        %v3257 = vadd.f32 %v3179, %v3231
        %v3258 = vadd.f32 %v3180, %v3234
        %v3259 = vadd.f32 %v3181, %v3236
        %v3260 = vadd.f32 %v3182, %v3239
        %v3261 = vadd.f32 %v3183, %v3241
        %v3262 = vadd.f32 %v3184, %v3244
        %v3263 = vadd.f32 %v3185, %v3246
        %v3265 = vshrl.u32 %v2587, 16
        %v3267 = vrot.slane %v3265, 4
        %v3268 = vshll.u32 %v2587, 16
        %v3270 = vrot.slane %v3268, 5
        %v3271 = vor.u32 %v3267, %v3270
        %v3272 = vrot.slane %v3271, 4
        %v3274 = vshll.u32 %v2588, 16
        %v3276 = vrot.slane %v3274, 5
        %v3277 = vsel %vm794, %v3272, %v3276
        %v3278 = vshrl.u32 %v2588, 16
        %v3280 = vrot.slane %v3278, 4
        %v3281 = vor.u32 %v3280, %v3276
        %v3282 = vrot.slane %v3281, 4
        %v3284 = vshll.u32 %v2589, 16
        %v3286 = vrot.slane %v3284, 5
        %v3287 = vsel %vm794, %v3282, %v3286
        %s3288 = scalar_lea.vmem %s3, 8
        %v3289 = vld [vmem:[%s3288] sm:$0x3]
        %v3290 = vunpack.c.l.b16 %v3277
        %v3291 = vunpack.c.l.b16 %v3287
        %v3292 = vpack.c.b16 %v3291, %v3290
        %v3294 = vsel %vm1067, %v3292, 0
        %v3297 = vsel %vm1098, %v3289, 0
        %3299 = vmatpush.bf16.msra.mxu0 0
        %3300 = vmatpush.bf16.msra.mxu0 0
        %3301 = vmatpush.bf16.msra.mxu0 0
        %3302 = vmatpush.bf16.msra.mxu0 0
        %3303 = vmatpush.bf16.msra.mxu0 0
        %3304 = vmatpush.bf16.msra.mxu0 0
        %3305 = vmatpush.bf16.msra.mxu0 0
        %3306 = vmatpush.bf16.msra.mxu0 %v3297
        %3307 = vmatmul.bf16.gmra.mxu0 %v2816
        %v3308 = vpop.f32.mrf.mxu0
        %v3309 = vadd.f32 0.0, %v3308
        %v3310 = vpop.f32.mrf.mxu0
        %v3311 = vadd.f32 0.0, %v3310
        %3312 = vmatmul.bf16.gmra.mxu0 %v2819
        %v3313 = vpop.f32.mrf.mxu0
        %v3314 = vadd.f32 0.0, %v3313
        %v3315 = vpop.f32.mrf.mxu0
        %v3316 = vadd.f32 0.0, %v3315
        %3317 = vmatmul.bf16.gmra.mxu0 %v2822
        %v3318 = vpop.f32.mrf.mxu0
        %v3319 = vadd.f32 0.0, %v3318
        %v3320 = vpop.f32.mrf.mxu0
        %v3321 = vadd.f32 0.0, %v3320
        %3322 = vmatmul.bf16.gmra.mxu0 %v2825
        %v3323 = vpop.f32.mrf.mxu0
        %v3324 = vadd.f32 0.0, %v3323
        %v3325 = vpop.f32.mrf.mxu0
        %v3326 = vadd.f32 0.0, %v3325
        %3327 = vmatmul.bf16.gmra.mxu0 %v2828
        %v3328 = vpop.f32.mrf.mxu0
        %v3329 = vadd.f32 0.0, %v3328
        %v3330 = vpop.f32.mrf.mxu0
        %v3331 = vadd.f32 0.0, %v3330
        %3332 = vmatmul.bf16.gmra.mxu0 %v2831
        %v3333 = vpop.f32.mrf.mxu0
        %v3334 = vadd.f32 0.0, %v3333
        %v3335 = vpop.f32.mrf.mxu0
        %v3336 = vadd.f32 0.0, %v3335
        %3337 = vmatmul.bf16.gmra.mxu0 %v2834
        %v3338 = vpop.f32.mrf.mxu0
        %v3339 = vadd.f32 0.0, %v3338
        %v3340 = vpop.f32.mrf.mxu0
        %v3341 = vadd.f32 0.0, %v3340
        %3342 = vmatmul.bf16.gmra.mxu0 %v3294
        %v3343 = vpop.f32.mrf.mxu0
        %v3344 = vadd.f32 0.0, %v3343
        %v3345 = vpop.f32.mrf.mxu0
        %v3346 = vadd.f32 0.0, %v3345
        %3347 = vdwg.mxu0
        %v3348 = vadd.f32 %v3248, %v3309
        %v3349 = vadd.f32 %v3249, %v3311
        %v3350 = vadd.f32 %v3250, %v3314
        %v3351 = vadd.f32 %v3251, %v3316
        %v3352 = vadd.f32 %v3252, %v3319
        %v3353 = vadd.f32 %v3253, %v3321
        %v3354 = vadd.f32 %v3254, %v3324
        %v3355 = vadd.f32 %v3255, %v3326
        %v3356 = vadd.f32 %v3256, %v3329
        %v3357 = vadd.f32 %v3257, %v3331
        %v3358 = vadd.f32 %v3258, %v3334
        %v3359 = vadd.f32 %v3259, %v3336
        %v3360 = vadd.f32 %v3260, %v3339
        %v3361 = vadd.f32 %v3261, %v3341
        %v3362 = vadd.f32 %v3262, %v3344
        %v3363 = vadd.f32 %v3263, %v3346
        %v3365 = vrot.slane %v2587, 5
        %v3366 = vrot.slane %v3365, 4
        %v3367 = vrot.slane %v2588, 5
        %v3368 = vsel %vm1315, %v3366, %v3367
        %v3369 = vrot.slane %v3367, 4
        %v3370 = vrot.slane %v2589, 5
        %v3371 = vsel %vm1315, %v3369, %v3370
        %s3372 = scalar_lea.vmem %s3, 10
        %v3373 = vld [vmem:[%s3372] sm:$0x3]
        %v3374 = vunpack.c.l.b16 %v3368
        %v3375 = vunpack.c.l.b16 %v3371
        %v3376 = vpack.c.b16 %v3375, %v3374
        %v3378 = vsel %vm1067, %v3376, 0
        %v3381 = vsel %vm1098, %v3373, 0
        %3383 = vmatpush.bf16.msra.mxu0 0
        %3384 = vmatpush.bf16.msra.mxu0 0
        %3385 = vmatpush.bf16.msra.mxu0 0
        %3386 = vmatpush.bf16.msra.mxu0 0
        %3387 = vmatpush.bf16.msra.mxu0 0
        %3388 = vmatpush.bf16.msra.mxu0 0
        %3389 = vmatpush.bf16.msra.mxu0 0
        %3390 = vmatpush.bf16.msra.mxu0 %v3381
        %3391 = vmatmul.bf16.gmra.mxu0 %v3098
        %v3392 = vpop.f32.mrf.mxu0
        %v3393 = vadd.f32 0.0, %v3392
        %v3394 = vpop.f32.mrf.mxu0
        %v3395 = vadd.f32 0.0, %v3394
        %3396 = vmatmul.bf16.gmra.mxu0 %v3101
        %v3397 = vpop.f32.mrf.mxu0
        %v3398 = vadd.f32 0.0, %v3397
        %v3399 = vpop.f32.mrf.mxu0
        %v3400 = vadd.f32 0.0, %v3399
        %3401 = vmatmul.bf16.gmra.mxu0 %v3104
        %v3402 = vpop.f32.mrf.mxu0
        %v3403 = vadd.f32 0.0, %v3402
        %v3404 = vpop.f32.mrf.mxu0
        %v3405 = vadd.f32 0.0, %v3404
        %3406 = vmatmul.bf16.gmra.mxu0 %v3107
        %v3407 = vpop.f32.mrf.mxu0
        %v3408 = vadd.f32 0.0, %v3407
        %v3409 = vpop.f32.mrf.mxu0
        %v3410 = vadd.f32 0.0, %v3409
        %3411 = vmatmul.bf16.gmra.mxu0 %v3110
        %v3412 = vpop.f32.mrf.mxu0
        %v3413 = vadd.f32 0.0, %v3412
        %v3414 = vpop.f32.mrf.mxu0
        %v3415 = vadd.f32 0.0, %v3414
        %3416 = vmatmul.bf16.gmra.mxu0 %v3113
        %v3417 = vpop.f32.mrf.mxu0
        %v3418 = vadd.f32 0.0, %v3417
        %v3419 = vpop.f32.mrf.mxu0
        %v3420 = vadd.f32 0.0, %v3419
        %3421 = vmatmul.bf16.gmra.mxu0 %v3116
        %v3422 = vpop.f32.mrf.mxu0
        %v3423 = vadd.f32 0.0, %v3422
        %v3424 = vpop.f32.mrf.mxu0
        %v3425 = vadd.f32 0.0, %v3424
        %3426 = vmatmul.bf16.gmra.mxu0 %v3378
        %v3427 = vpop.f32.mrf.mxu0
        %v3428 = vadd.f32 0.0, %v3427
        %v3429 = vpop.f32.mrf.mxu0
        %v3430 = vadd.f32 0.0, %v3429
        %3431 = vdwg.mxu0
        %v3432 = vadd.f32 %v3348, %v3393
        %v3433 = vadd.f32 %v3349, %v3395
        %v3434 = vadd.f32 %v3350, %v3398
        %v3435 = vadd.f32 %v3351, %v3400
        %v3436 = vadd.f32 %v3352, %v3403
        %v3437 = vadd.f32 %v3353, %v3405
        %v3438 = vadd.f32 %v3354, %v3408
        %v3439 = vadd.f32 %v3355, %v3410
        %v3440 = vadd.f32 %v3356, %v3413
        %v3441 = vadd.f32 %v3357, %v3415
        %v3442 = vadd.f32 %v3358, %v3418
        %v3443 = vadd.f32 %v3359, %v3420
        %v3444 = vadd.f32 %v3360, %v3423
        %v3445 = vadd.f32 %v3361, %v3425
        %v3446 = vadd.f32 %v3362, %v3428
        %v3447 = vadd.f32 %v3363, %v3430
        %s3448 = scalar_lea.vmem %s3, 12
        %v3449 = vld [vmem:[%s3448] sm:$0x3]
        %v3452 = vunpack.c.l.b16 %v2590
        %v3453 = vunpack.c.l.b16 %v2591
        %v3454 = vpack.c.b16 %v3453, %v3452
        %v3456 = vsel %vm1067, %v3454, 0
        %v3459 = vsel %vm1098, %v3449, 0
        %3461 = vmatpush.bf16.msra.mxu0 0
        %3462 = vmatpush.bf16.msra.mxu0 0
        %3463 = vmatpush.bf16.msra.mxu0 0
        %3464 = vmatpush.bf16.msra.mxu0 0
        %3465 = vmatpush.bf16.msra.mxu0 0
        %3466 = vmatpush.bf16.msra.mxu0 0
        %3467 = vmatpush.bf16.msra.mxu0 0
        %3468 = vmatpush.bf16.msra.mxu0 %v3459
        %3469 = vmatmul.bf16.gmra.mxu0 %v2935
        %v3470 = vpop.f32.mrf.mxu0
        %v3471 = vadd.f32 0.0, %v3470
        %v3472 = vpop.f32.mrf.mxu0
        %v3473 = vadd.f32 0.0, %v3472
        %3474 = vmatmul.bf16.gmra.mxu0 %v2938
        %v3475 = vpop.f32.mrf.mxu0
        %v3476 = vadd.f32 0.0, %v3475
        %v3477 = vpop.f32.mrf.mxu0
        %v3478 = vadd.f32 0.0, %v3477
        %3479 = vmatmul.bf16.gmra.mxu0 %v2941
        %v3480 = vpop.f32.mrf.mxu0
        %v3481 = vadd.f32 0.0, %v3480
        %v3482 = vpop.f32.mrf.mxu0
        %v3483 = vadd.f32 0.0, %v3482
        %3484 = vmatmul.bf16.gmra.mxu0 %v2944
        %v3485 = vpop.f32.mrf.mxu0
        %v3486 = vadd.f32 0.0, %v3485
        %v3487 = vpop.f32.mrf.mxu0
        %v3488 = vadd.f32 0.0, %v3487
        %3489 = vmatmul.bf16.gmra.mxu0 %v2947
        %v3490 = vpop.f32.mrf.mxu0
        %v3491 = vadd.f32 0.0, %v3490
        %v3492 = vpop.f32.mrf.mxu0
        %v3493 = vadd.f32 0.0, %v3492
        %3494 = vmatmul.bf16.gmra.mxu0 %v2950
        %v3495 = vpop.f32.mrf.mxu0
        %v3496 = vadd.f32 0.0, %v3495
        %v3497 = vpop.f32.mrf.mxu0
        %v3498 = vadd.f32 0.0, %v3497
        %3499 = vmatmul.bf16.gmra.mxu0 %v3194
        %v3500 = vpop.f32.mrf.mxu0
        %v3501 = vadd.f32 0.0, %v3500
        %v3502 = vpop.f32.mrf.mxu0
        %v3503 = vadd.f32 0.0, %v3502
        %3504 = vmatmul.bf16.gmra.mxu0 %v3456
        %v3505 = vpop.f32.mrf.mxu0
        %v3506 = vadd.f32 0.0, %v3505
        %v3507 = vpop.f32.mrf.mxu0
        %v3508 = vadd.f32 0.0, %v3507
        %3509 = vdwg.mxu0
        %v3510 = vadd.f32 %v3432, %v3471
        %v3511 = vadd.f32 %v3433, %v3473
        %v3512 = vadd.f32 %v3434, %v3476
        %v3513 = vadd.f32 %v3435, %v3478
        %v3514 = vadd.f32 %v3436, %v3481
        %v3515 = vadd.f32 %v3437, %v3483
        %v3516 = vadd.f32 %v3438, %v3486
        %v3517 = vadd.f32 %v3439, %v3488
        %v3518 = vadd.f32 %v3440, %v3491
        %v3519 = vadd.f32 %v3441, %v3493
        %v3520 = vadd.f32 %v3442, %v3496
        %v3521 = vadd.f32 %v3443, %v3498
        %v3522 = vadd.f32 %v3444, %v3501
        %v3523 = vadd.f32 %v3445, %v3503
        %v3524 = vadd.f32 %v3446, %v3506
        %v3525 = vadd.f32 %v3447, %v3508
        %v3527 = vshrl.u32 %v2590, 16
        %v3529 = vrot.slane %v3527, 4
        %v3530 = vshll.u32 %v2590, 16
        %v3532 = vrot.slane %v3530, 5
        %v3533 = vor.u32 %v3529, %v3532
        %v3534 = vrot.slane %v3533, 4
        %v3536 = vshll.u32 %v2591, 16
        %v3538 = vrot.slane %v3536, 5
        %v3539 = vsel %vm794, %v3534, %v3538
        %v3540 = vshrl.u32 %v2591, 16
        %v3542 = vrot.slane %v3540, 4
        %v3543 = vor.u32 %v3542, %v3538
        %v3544 = vrot.slane %v3543, 4
        %v3546 = vshll.u32 %v2592, 16
        %v3548 = vrot.slane %v3546, 5
        %v3549 = vsel %vm794, %v3544, %v3548
        %s3550 = scalar_lea.vmem %s3, 14
        %v3551 = vld [vmem:[%s3550] sm:$0x3]
        %v3552 = vunpack.c.l.b16 %v3539
        %v3553 = vunpack.c.l.b16 %v3549
        %v3554 = vpack.c.b16 %v3553, %v3552
        %v3556 = vsel %vm1067, %v3554, 0
        %v3559 = vsel %vm1098, %v3551, 0
        %3561 = vmatpush.bf16.msra.mxu0 0
        %3562 = vmatpush.bf16.msra.mxu0 0
        %3563 = vmatpush.bf16.msra.mxu0 0
        %3564 = vmatpush.bf16.msra.mxu0 0
        %3565 = vmatpush.bf16.msra.mxu0 0
        %3566 = vmatpush.bf16.msra.mxu0 0
        %3567 = vmatpush.bf16.msra.mxu0 0
        %3568 = vmatpush.bf16.msra.mxu0 %v3559
        %3569 = vmatmul.bf16.gmra.mxu0 %v2819
        %v3570 = vpop.f32.mrf.mxu0
        %v3571 = vadd.f32 0.0, %v3570
        %v3572 = vpop.f32.mrf.mxu0
        %v3573 = vadd.f32 0.0, %v3572
        %3574 = vmatmul.bf16.gmra.mxu0 %v2822
        %v3575 = vpop.f32.mrf.mxu0
        %v3576 = vadd.f32 0.0, %v3575
        %v3577 = vpop.f32.mrf.mxu0
        %v3578 = vadd.f32 0.0, %v3577
        %3579 = vmatmul.bf16.gmra.mxu0 %v2825
        %v3580 = vpop.f32.mrf.mxu0
        %v3581 = vadd.f32 0.0, %v3580
        %v3582 = vpop.f32.mrf.mxu0
        %v3583 = vadd.f32 0.0, %v3582
        %3584 = vmatmul.bf16.gmra.mxu0 %v2828
        %v3585 = vpop.f32.mrf.mxu0
        %v3586 = vadd.f32 0.0, %v3585
        %v3587 = vpop.f32.mrf.mxu0
        %v3588 = vadd.f32 0.0, %v3587
        %3589 = vmatmul.bf16.gmra.mxu0 %v2831
        %v3590 = vpop.f32.mrf.mxu0
        %v3591 = vadd.f32 0.0, %v3590
        %v3592 = vpop.f32.mrf.mxu0
        %v3593 = vadd.f32 0.0, %v3592
        %3594 = vmatmul.bf16.gmra.mxu0 %v2834
        %v3595 = vpop.f32.mrf.mxu0
        %v3596 = vadd.f32 0.0, %v3595
        %v3597 = vpop.f32.mrf.mxu0
        %v3598 = vadd.f32 0.0, %v3597
        %3599 = vmatmul.bf16.gmra.mxu0 %v3294
        %v3600 = vpop.f32.mrf.mxu0
        %v3601 = vadd.f32 0.0, %v3600
        %v3602 = vpop.f32.mrf.mxu0
        %v3603 = vadd.f32 0.0, %v3602
        %3604 = vmatmul.bf16.gmra.mxu0 %v3556
        %v3605 = vpop.f32.mrf.mxu0
        %v3606 = vadd.f32 0.0, %v3605
        %v3607 = vpop.f32.mrf.mxu0
        %v3608 = vadd.f32 0.0, %v3607
        %3609 = vdwg.mxu0
        %v3610 = vadd.f32 %v3510, %v3571
        %v3611 = vadd.f32 %v3511, %v3573
        %v3612 = vadd.f32 %v3512, %v3576
        %v3613 = vadd.f32 %v3513, %v3578
        %v3614 = vadd.f32 %v3514, %v3581
        %v3615 = vadd.f32 %v3515, %v3583
        %v3616 = vadd.f32 %v3516, %v3586
        %v3617 = vadd.f32 %v3517, %v3588
        %v3618 = vadd.f32 %v3518, %v3591
        %v3619 = vadd.f32 %v3519, %v3593
        %v3620 = vadd.f32 %v3520, %v3596
        %v3621 = vadd.f32 %v3521, %v3598
        %v3622 = vadd.f32 %v3522, %v3601
        %v3623 = vadd.f32 %v3523, %v3603
        %v3624 = vadd.f32 %v3524, %v3606
        %v3625 = vadd.f32 %v3525, %v3608
        %v3627 = vrot.slane %v2590, 5
        %v3628 = vrot.slane %v3627, 4
        %v3629 = vrot.slane %v2591, 5
        %v3630 = vsel %vm1315, %v3628, %v3629
        %v3631 = vrot.slane %v3629, 4
        %v3632 = vrot.slane %v2592, 5
        %v3633 = vsel %vm1315, %v3631, %v3632
        %s3634 = scalar_lea.vmem %s3, 16
        %v3635 = vld [vmem:[%s3634] sm:$0x3]
        %v3636 = vunpack.c.l.b16 %v3630
        %v3637 = vunpack.c.l.b16 %v3633
        %v3638 = vpack.c.b16 %v3637, %v3636
        %v3640 = vsel %vm1067, %v3638, 0
        %v3643 = vsel %vm1098, %v3635, 0
        %3645 = vmatpush.bf16.msra.mxu0 0
        %3646 = vmatpush.bf16.msra.mxu0 0
        %3647 = vmatpush.bf16.msra.mxu0 0
        %3648 = vmatpush.bf16.msra.mxu0 0
        %3649 = vmatpush.bf16.msra.mxu0 0
        %3650 = vmatpush.bf16.msra.mxu0 0
        %3651 = vmatpush.bf16.msra.mxu0 0
        %3652 = vmatpush.bf16.msra.mxu0 %v3643
        %3653 = vmatmul.bf16.gmra.mxu0 %v3101
        %v3654 = vpop.f32.mrf.mxu0
        %v3655 = vadd.f32 0.0, %v3654
        %v3656 = vpop.f32.mrf.mxu0
        %v3657 = vadd.f32 0.0, %v3656
        %3658 = vmatmul.bf16.gmra.mxu0 %v3104
        %v3659 = vpop.f32.mrf.mxu0
        %v3660 = vadd.f32 0.0, %v3659
        %v3661 = vpop.f32.mrf.mxu0
        %v3662 = vadd.f32 0.0, %v3661
        %3663 = vmatmul.bf16.gmra.mxu0 %v3107
        %v3664 = vpop.f32.mrf.mxu0
        %v3665 = vadd.f32 0.0, %v3664
        %v3666 = vpop.f32.mrf.mxu0
        %v3667 = vadd.f32 0.0, %v3666
        %3668 = vmatmul.bf16.gmra.mxu0 %v3110
        %v3669 = vpop.f32.mrf.mxu0
        %v3670 = vadd.f32 0.0, %v3669
        %v3671 = vpop.f32.mrf.mxu0
        %v3672 = vadd.f32 0.0, %v3671
        %3673 = vmatmul.bf16.gmra.mxu0 %v3113
        %v3674 = vpop.f32.mrf.mxu0
        %v3675 = vadd.f32 0.0, %v3674
        %v3676 = vpop.f32.mrf.mxu0
        %v3677 = vadd.f32 0.0, %v3676
        %3678 = vmatmul.bf16.gmra.mxu0 %v3116
        %v3679 = vpop.f32.mrf.mxu0
        %v3680 = vadd.f32 0.0, %v3679
        %v3681 = vpop.f32.mrf.mxu0
        %v3682 = vadd.f32 0.0, %v3681
        %3683 = vmatmul.bf16.gmra.mxu0 %v3378
        %v3684 = vpop.f32.mrf.mxu0
        %v3685 = vadd.f32 0.0, %v3684
        %v3686 = vpop.f32.mrf.mxu0
        %v3687 = vadd.f32 0.0, %v3686
        %3688 = vmatmul.bf16.gmra.mxu0 %v3640
        %v3689 = vpop.f32.mrf.mxu0
        %v3690 = vadd.f32 0.0, %v3689
        %v3691 = vpop.f32.mrf.mxu0
        %v3692 = vadd.f32 0.0, %v3691
        %3693 = vdwg.mxu0
        %v3694 = vadd.f32 %v3610, %v3655
        %v3695 = vadd.f32 %v3611, %v3657
        %v3696 = vadd.f32 %v3612, %v3660
        %v3697 = vadd.f32 %v3613, %v3662
        %v3698 = vadd.f32 %v3614, %v3665
        %v3699 = vadd.f32 %v3615, %v3667
        %v3700 = vadd.f32 %v3616, %v3670
        %v3701 = vadd.f32 %v3617, %v3672
        %v3702 = vadd.f32 %v3618, %v3675
        %v3703 = vadd.f32 %v3619, %v3677
        %v3704 = vadd.f32 %v3620, %v3680
        %v3705 = vadd.f32 %v3621, %v3682
        %v3706 = vadd.f32 %v3622, %v3685
        %v3707 = vadd.f32 %v3623, %v3687
        %v3708 = vadd.f32 %v3624, %v3690
        %v3709 = vadd.f32 %v3625, %v3692
        %v3710 = vld [vmem:[%s4] sm:$0x1]
        %v3712 = vperm.slane %v3710, 0
        %v3714 = vadd.f32 %v3694, %v3712
        %v3715 = vadd.f32 %v3695, %v3712
        %v3716 = vadd.f32 %v3696, %v3712
        %v3717 = vadd.f32 %v3697, %v3712
        %v3718 = vadd.f32 %v3698, %v3712
        %v3719 = vadd.f32 %v3699, %v3712
        %v3720 = vadd.f32 %v3700, %v3712
        %v3721 = vadd.f32 %v3701, %v3712
        %v3722 = vadd.f32 %v3702, %v3712
        %v3723 = vadd.f32 %v3703, %v3712
        %v3724 = vadd.f32 %v3704, %v3712
        %v3725 = vadd.f32 %v3705, %v3712
        %v3726 = vadd.f32 %v3706, %v3712
        %v3727 = vadd.f32 %v3707, %v3712
        %v3728 = vadd.f32 %v3708, %v3712
        %v3729 = vadd.f32 %v3709, %v3712
        %v3730 = vld [vmem:[%s381] sm:$0xff]
        %v3731 = vld [vmem:[%s381 + $0x8] sm:$0xff]
        %v3732 = vld [vmem:[%s381 + $0x10] sm:$0xff]
        %v3733 = vld [vmem:[%s381 + $0x18] sm:$0xff]
        %v3734 = vld [vmem:[%s381 + $0x20] sm:$0xff]
        %v3735 = vld [vmem:[%s381 + $0x28] sm:$0xff]
        %v3736 = vld [vmem:[%s381 + $0x30] sm:$0xff]
        %v3737 = vld [vmem:[%s381 + $0x38] sm:$0xff]
        %v3738 = vld [vmem:[%s381 + $0x40] sm:$0xff]
        %v3739 = vld [vmem:[%s381 + $0x48] sm:$0xff]
        %v3740 = vld [vmem:[%s381 + $0x50] sm:$0xff]
        %v3741 = vld [vmem:[%s381 + $0x58] sm:$0xff]
        %v3742 = vld [vmem:[%s381 + $0x60] sm:$0xff]
        %v3743 = vld [vmem:[%s381 + $0x68] sm:$0xff]
        %v3744 = vld [vmem:[%s381 + $0x70] sm:$0xff]
        %v3745 = vld [vmem:[%s381 + $0x78] sm:$0xff]
        %v3746 = vadd.f32 %v3714, %v3730
        %v3747 = vadd.f32 %v3715, %v3731
        %v3748 = vadd.f32 %v3716, %v3732
        %v3749 = vadd.f32 %v3717, %v3733
        %v3750 = vadd.f32 %v3718, %v3734
        %v3751 = vadd.f32 %v3719, %v3735
        %v3752 = vadd.f32 %v3720, %v3736
        %v3753 = vadd.f32 %v3721, %v3737
        %v3754 = vadd.f32 %v3722, %v3738
        %v3755 = vadd.f32 %v3723, %v3739
        %v3756 = vadd.f32 %v3724, %v3740
        %v3757 = vadd.f32 %v3725, %v3741
        %v3758 = vadd.f32 %v3726, %v3742
        %v3759 = vadd.f32 %v3727, %v3743
        %v3760 = vadd.f32 %v3728, %v3744
        %v3761 = vadd.f32 %v3729, %v3745
        %v3762 = vrot.slane %v3750, 4
        %vm3763 = vcmask 1047556
        %v3764 = vsel %vm3763, %v3762, %v3746
        %v3765 = vrot.slane %v3746, 4
        %v3766 = vsel %vm3763, %v3750, %v3765
        %v3768 = vunpack.c.l.s4 1983009808
        %v3769 = vunpack.c.0.s8 %v3768
        %v3770 = vperm.slane %v3764, %v3769
        %v3772 = vunpack.c.l.s4 1983009808
        %v3773 = vunpack.c.0.s8 %v3772
        %v3774 = vperm.slane %v3766, %v3773
        %v3775 = vrot.slane %v3752, 4
        %v3776 = vsel %vm3763, %v3775, %v3748
        %v3777 = vrot.slane %v3748, 4
        %v3778 = vsel %vm3763, %v3752, %v3777
        %v3780 = vunpack.c.l.s4 1983009808
        %v3781 = vunpack.c.0.s8 %v3780
        %v3782 = vperm.slane %v3776, %v3781
        %v3784 = vunpack.c.l.s4 1983009808
        %v3785 = vunpack.c.0.s8 %v3784
        %v3786 = vperm.slane %v3778, %v3785
        %v3787 = vrot.slane %v3758, 4
        %v3788 = vsel %vm3763, %v3787, %v3754
        %v3789 = vrot.slane %v3754, 4
        %v3790 = vsel %vm3763, %v3758, %v3789
        %v3792 = vunpack.c.l.s4 1983009808
        %v3793 = vunpack.c.0.s8 %v3792
        %v3794 = vperm.slane %v3788, %v3793
        %v3796 = vunpack.c.l.s4 1983009808
        %v3797 = vunpack.c.0.s8 %v3796
        %v3798 = vperm.slane %v3790, %v3797
        %v3799 = vrot.slane %v3760, 4
        %v3800 = vsel %vm3763, %v3799, %v3756
        %v3801 = vrot.slane %v3756, 4
        %v3802 = vsel %vm3763, %v3760, %v3801
        %v3804 = vunpack.c.l.s4 1983009808
        %v3805 = vunpack.c.0.s8 %v3804
        %v3806 = vperm.slane %v3800, %v3805
        %v3808 = vunpack.c.l.s4 1983009808
        %v3809 = vunpack.c.0.s8 %v3808
        %v3810 = vperm.slane %v3802, %v3809
        %v3811 = vrot.slane %v3782, 4
        %v3812 = vsel %vm3763, %v3811, %v3770
        %v3813 = vrot.slane %v3770, 4
        %v3814 = vsel %vm3763, %v3782, %v3813
        %v3816 = vunpack.c.l.s4 1934713408
        %v3817 = vunpack.c.0.s8 %v3816
        %v3818 = vperm.slane %v3812, %v3817
        %v3820 = vunpack.c.l.s4 1934713408
        %v3821 = vunpack.c.0.s8 %v3820
        %v3822 = vperm.slane %v3814, %v3821
        %v3823 = vrot.slane %v3786, 4
        %v3824 = vsel %vm3763, %v3823, %v3774
        %v3825 = vrot.slane %v3774, 4
        %v3826 = vsel %vm3763, %v3786, %v3825
        %v3828 = vunpack.c.l.s4 1934713408
        %v3829 = vunpack.c.0.s8 %v3828
        %v3830 = vperm.slane %v3824, %v3829
        %v3832 = vunpack.c.l.s4 1934713408
        %v3833 = vunpack.c.0.s8 %v3832
        %v3834 = vperm.slane %v3826, %v3833
        %v3835 = vrot.slane %v3806, 4
        %v3836 = vsel %vm3763, %v3835, %v3794
        %v3837 = vrot.slane %v3794, 4
        %v3838 = vsel %vm3763, %v3806, %v3837
        %v3840 = vunpack.c.l.s4 1934713408
        %v3841 = vunpack.c.0.s8 %v3840
        %v3842 = vperm.slane %v3836, %v3841
        %v3844 = vunpack.c.l.s4 1934713408
        %v3845 = vunpack.c.0.s8 %v3844
        %v3846 = vperm.slane %v3838, %v3845
        %v3847 = vrot.slane %v3810, 4
        %v3848 = vsel %vm3763, %v3847, %v3798
        %v3849 = vrot.slane %v3798, 4
        %v3850 = vsel %vm3763, %v3810, %v3849
        %v3852 = vunpack.c.l.s4 1934713408
        %v3853 = vunpack.c.0.s8 %v3852
        %v3854 = vperm.slane %v3848, %v3853
        %v3856 = vunpack.c.l.s4 1934713408
        %v3857 = vunpack.c.0.s8 %v3856
        %v3858 = vperm.slane %v3850, %v3857
        %v3859 = vrot.slane %v3842, 4
        %v3860 = vsel %vm3763, %v3859, %v3818
        %v3861 = vrot.slane %v3818, 4
        %v3862 = vsel %vm3763, %v3842, %v3861
        %v3863 = vrot.slane %v3846, 4
        %v3864 = vsel %vm3763, %v3863, %v3822
        %v3865 = vrot.slane %v3822, 4
        %v3866 = vsel %vm3763, %v3846, %v3865
        %v3867 = vrot.slane %v3854, 4
        %v3868 = vsel %vm3763, %v3867, %v3830
        %v3869 = vrot.slane %v3830, 4
        %v3870 = vsel %vm3763, %v3854, %v3869
        %v3871 = vrot.slane %v3858, 4
        %v3872 = vsel %vm3763, %v3871, %v3834
        %v3873 = vrot.slane %v3834, 4
        %v3874 = vsel %vm3763, %v3858, %v3873
        %v3875 = vrot.slane %v3751, 4
        %v3876 = vsel %vm3763, %v3875, %v3747
        %v3877 = vrot.slane %v3747, 4
        %v3878 = vsel %vm3763, %v3751, %v3877
        %v3880 = vunpack.c.l.s4 1983009808
        %v3881 = vunpack.c.0.s8 %v3880
        %v3882 = vperm.slane %v3876, %v3881
        %v3884 = vunpack.c.l.s4 1983009808
        %v3885 = vunpack.c.0.s8 %v3884
        %v3886 = vperm.slane %v3878, %v3885
        %v3887 = vrot.slane %v3753, 4
        %v3888 = vsel %vm3763, %v3887, %v3749
        %v3889 = vrot.slane %v3749, 4
        %v3890 = vsel %vm3763, %v3753, %v3889
        %v3892 = vunpack.c.l.s4 1983009808
        %v3893 = vunpack.c.0.s8 %v3892
        %v3894 = vperm.slane %v3888, %v3893
        %v3896 = vunpack.c.l.s4 1983009808
        %v3897 = vunpack.c.0.s8 %v3896
        %v3898 = vperm.slane %v3890, %v3897
        %v3899 = vrot.slane %v3759, 4
        %v3900 = vsel %vm3763, %v3899, %v3755
        %v3901 = vrot.slane %v3755, 4
        %v3902 = vsel %vm3763, %v3759, %v3901
        %v3904 = vunpack.c.l.s4 1983009808
        %v3905 = vunpack.c.0.s8 %v3904
        %v3906 = vperm.slane %v3900, %v3905
        %v3908 = vunpack.c.l.s4 1983009808
        %v3909 = vunpack.c.0.s8 %v3908
        %v3910 = vperm.slane %v3902, %v3909
        %v3911 = vrot.slane %v3761, 4
        %v3912 = vsel %vm3763, %v3911, %v3757
        %v3913 = vrot.slane %v3757, 4
        %v3914 = vsel %vm3763, %v3761, %v3913
        %v3916 = vunpack.c.l.s4 1983009808
        %v3917 = vunpack.c.0.s8 %v3916
        %v3918 = vperm.slane %v3912, %v3917
        %v3920 = vunpack.c.l.s4 1983009808
        %v3921 = vunpack.c.0.s8 %v3920
        %v3922 = vperm.slane %v3914, %v3921
        %v3923 = vrot.slane %v3894, 4
        %v3924 = vsel %vm3763, %v3923, %v3882
        %v3925 = vrot.slane %v3882, 4
        %v3926 = vsel %vm3763, %v3894, %v3925
        %v3928 = vunpack.c.l.s4 1934713408
        %v3929 = vunpack.c.0.s8 %v3928
        %v3930 = vperm.slane %v3924, %v3929
        %v3932 = vunpack.c.l.s4 1934713408
        %v3933 = vunpack.c.0.s8 %v3932
        %v3934 = vperm.slane %v3926, %v3933
        %v3935 = vrot.slane %v3898, 4
        %v3936 = vsel %vm3763, %v3935, %v3886
        %v3937 = vrot.slane %v3886, 4
        %v3938 = vsel %vm3763, %v3898, %v3937
        %v3940 = vunpack.c.l.s4 1934713408
        %v3941 = vunpack.c.0.s8 %v3940
        %v3942 = vperm.slane %v3936, %v3941
        %v3944 = vunpack.c.l.s4 1934713408
        %v3945 = vunpack.c.0.s8 %v3944
        %v3946 = vperm.slane %v3938, %v3945
        %v3947 = vrot.slane %v3918, 4
        %v3948 = vsel %vm3763, %v3947, %v3906
        %v3949 = vrot.slane %v3906, 4
        %v3950 = vsel %vm3763, %v3918, %v3949
        %v3952 = vunpack.c.l.s4 1934713408
        %v3953 = vunpack.c.0.s8 %v3952
        %v3954 = vperm.slane %v3948, %v3953
        %v3956 = vunpack.c.l.s4 1934713408
        %v3957 = vunpack.c.0.s8 %v3956
        %v3958 = vperm.slane %v3950, %v3957
        %v3959 = vrot.slane %v3922, 4
        %v3960 = vsel %vm3763, %v3959, %v3910
        %v3961 = vrot.slane %v3910, 4
        %v3962 = vsel %vm3763, %v3922, %v3961
        %v3964 = vunpack.c.l.s4 1934713408
        %v3965 = vunpack.c.0.s8 %v3964
        %v3966 = vperm.slane %v3960, %v3965
        %v3968 = vunpack.c.l.s4 1934713408
        %v3969 = vunpack.c.0.s8 %v3968
        %v3970 = vperm.slane %v3962, %v3969
        %v3971 = vrot.slane %v3954, 4
        %v3972 = vsel %vm3763, %v3971, %v3930
        %v3973 = vrot.slane %v3930, 4
        %v3974 = vsel %vm3763, %v3954, %v3973
        %v3975 = vrot.slane %v3958, 4
        %v3976 = vsel %vm3763, %v3975, %v3934
        %v3977 = vrot.slane %v3934, 4
        %v3978 = vsel %vm3763, %v3958, %v3977
        %v3979 = vrot.slane %v3966, 4
        %v3980 = vsel %vm3763, %v3979, %v3942
        %v3981 = vrot.slane %v3942, 4
        %v3982 = vsel %vm3763, %v3966, %v3981
        %v3983 = vrot.slane %v3970, 4
        %v3984 = vsel %vm3763, %v3983, %v3946
        %v3985 = vrot.slane %v3946, 4
        %v3986 = vsel %vm3763, %v3970, %v3985
        %3988 = vrot.lane.b32.xlu0 %v3862, 4
        %v3989 = vpop.permute.xlu0 %3988
        %3992 = vrot.lane.b32.xlu0 %v3864, 8
        %v3993 = vpop.permute.xlu0 %3992
        %3996 = vrot.lane.b32.xlu0 %v3866, 12
        %v3997 = vpop.permute.xlu0 %3996
        %4000 = vrot.lane.b32.xlu0 %v3868, 16
        %v4001 = vpop.permute.xlu0 %4000
        %4004 = vrot.lane.b32.xlu0 %v3870, 20
        %v4005 = vpop.permute.xlu0 %4004
        %4008 = vrot.lane.b32.xlu0 %v3872, 24
        %v4009 = vpop.permute.xlu0 %4008
        %4012 = vrot.lane.b32.xlu0 %v3874, 28
        %v4013 = vpop.permute.xlu0 %4012
        %4016 = vrot.lane.b32.xlu0 %v3972, 32
        %v4017 = vpop.permute.xlu0 %4016
        %4020 = vrot.lane.b32.xlu0 %v3974, 36
        %v4021 = vpop.permute.xlu0 %4020
        %4024 = vrot.lane.b32.xlu0 %v3976, 40
        %v4025 = vpop.permute.xlu0 %4024
        %4028 = vrot.lane.b32.xlu0 %v3978, 44
        %v4029 = vpop.permute.xlu0 %4028
        %4032 = vrot.lane.b32.xlu0 %v3980, 48
        %v4033 = vpop.permute.xlu0 %4032
        %4036 = vrot.lane.b32.xlu0 %v3982, 52
        %v4037 = vpop.permute.xlu0 %4036
        %4040 = vrot.lane.b32.xlu0 %v3984, 56
        %v4041 = vpop.permute.xlu0 %4040
        %4044 = vrot.lane.b32.xlu0 %v3986, 60
        %v4045 = vpop.permute.xlu0 %4044
        %v4047 = vsel %vm1067, %v3860, %v3989
        %vm4048 = vcmask 64512
        %v4049 = vsel %vm4048, %v4047, %v3993
        %vm4050 = vcmask 97280
        %v4051 = vsel %vm4050, %v4049, %v3997
        %vm4052 = vcmask 130048
        %v4053 = vsel %vm4052, %v4051, %v4001
        %vm4054 = vcmask 162816
        %v4055 = vsel %vm4054, %v4053, %v4005
        %vm4056 = vcmask 195584
        %v4057 = vsel %vm4056, %v4055, %v4009
        %vm4058 = vcmask 228352
        %v4059 = vsel %vm4058, %v4057, %v4013
        %vm4060 = vcmask 261120
        %v4061 = vsel %vm4060, %v4059, %v4017
        %vm4062 = vcmask 293888
        %v4063 = vsel %vm4062, %v4061, %v4021
        %vm4064 = vcmask 326656
        %v4065 = vsel %vm4064, %v4063, %v4025
        %vm4066 = vcmask 359424
        %v4067 = vsel %vm4066, %v4065, %v4029
        %vm4068 = vcmask 392192
        %v4069 = vsel %vm4068, %v4067, %v4033
        %vm4070 = vcmask 424960
        %v4071 = vsel %vm4070, %v4069, %v4037
        %vm4072 = vcmask 457728
        %v4073 = vsel %vm4072, %v4071, %v4041
        %vm4074 = vcmask 490496
        %v4075 = vsel %vm4074, %v4073, %v4045
        %vm4076 = vcmask 523264
        %4077 = vst.msk [vmem:[%s231] sm:$0xff] %vm4076, %v4075
        %s4078 = sand.u32 %s151, 1
        %s4079 = scalar_lea.sflag [#allocation5], %s4078
        %s4080 = sand.u32 %s151, 1
        %s4081 = smul.addr %s4080, 8
        %s4082 = scalar_lea.vmem [#allocation4], %s4081
        // Predicated region
        $region41: #{tpu_custom_call.1} parent=39 // pred_check
          %p4083 = pneg %p161
        $region42: #{tpu_custom_call.1} parent=39 // pred_check_branch
          %4085 = sbr.rel (%p4083) target = $region44
        $region43: #{tpu_custom_call.1} parent=39 // pred_region
          %4087 = vsyncadd %s4079, 0
          %s4088 = smul.addr %s23, 2
          %s4089 = sadd.s32 %s24, %s4088
          %s4090 = smul.addr %s4089, 8
          %s4091 = scalar_lea.hbm %s5, %s4090
          %s4093 = sshll.u32 %s4082, 4
          %s4094 = int_to_ptr.vmem [resolvable:$true] %s4093
          %s4095 = sshll.u32 %s4091, 4
          %s4096 = int_to_ptr.hbm [resolvable:$true] %s4095
          %4098 = dma.vmem_to_hbm [thread:$0]  %s4094, 128, %s4096, %s4079
        $region44: #{tpu_custom_call.1} parent=39 // pred_fallthru
          _
      $region40: #{tpu_custom_call.1} parent=5 // pred_fallthru
        _
      %p4099 = scmp.le.s32.totalorder 2, %s14
      // Predicated region
      $region45: #{tpu_custom_call.1} parent=5 // pred_check
        %p4100 = pneg %p4099
      $region46: #{tpu_custom_call.1} parent=5 // pred_check_branch
        %4102 = sbr.rel (%p4100) target = $region48
      $region47: #{tpu_custom_call.1} parent=5 // pred_region
        %s4103 = ssub.s32 %s14, 2
        // Predicated region
        $region49: #{tpu_custom_call.1} parent=47 // pred_check
          %p4104 = pneg %p167
        $region50: #{tpu_custom_call.1} parent=47 // pred_check_branch
          %4106 = sbr.rel (%p4104) target = $region52
        $region51: #{tpu_custom_call.1} parent=47 // pred_region
          %s4107 = sand.u32 %s152, 1
          %s4108 = scalar_lea.sflag [#allocation5], %s4107
          %s4109 = sand.u32 %s152, 1
          %s4110 = smul.addr %s4109, 8
          %s4111 = scalar_lea.vmem [#allocation4], %s4110
          %4113 = dma.done %s4108, 128
        $region52: #{tpu_custom_call.1} parent=47 // pred_fallthru
          _
      $region48: #{tpu_custom_call.1} parent=5 // pred_fallthru
        _
    $region6: #{tpu_custom_call.1} parent=1 // loop_footer
      %s18 = sadd.s32 1, %s14
    $region7: #{tpu_custom_call.1} parent=1 // loop_footer_branch
      %13 = sbr.rel target = $region3
    $region8: #{tpu_custom_call.1} parent=1 // loop_exit
      _
    %4114 = vsyncpa [#allocation5], 1
    %s4115 = scalar_lea.sflag [#allocation5], 1
    %4116 = vsyncpa %s4115, 1

</llo_original>
